<compile_context>
chip_gen: v6e
topology: v6e:2x2x1
jax: 0.10.0
libtpu: 0.0.40
codegen_flags: <defaults>
</compile_context>

<pallas_src>
import math

import numpy as np
import jax
import jax.numpy as jnp
from jax.experimental import pallas as pl
from jax.experimental.pallas import tpu as pltpu

# ------------- constants matching DocREModel.__init__ -------------
EMB_SIZE = 512      # emb_size
DOWN_DIM = 3        # self.ppm = PPM(down_dim=3)
NUM_LABELS = 8      # config.num_labels (synthetic)
PRELU_A = 0.25      # nn.PReLU() default init
BN_EPS = 1e-5


# =====================  PPM: down_conv kernel (heavy, DMA-bound)  ===========

def _ppm_down_kernel(xp_ref, wd_ref, sh0_ref, w14_ref, o_ref):
    """One block of Nb batch elements per grid step.

    xp_ref : (Nb, S+2, S+2, Cin) bf16  zero-padded NHWC input slab
    wd_ref : (9, Cin, D)         bf16  3x3 conv weights (BN scale folded)
    sh0_ref: (1, D)              f32   folded conv-bias + BN shift
    w14_ref: (D, 4*D)            bf16  4 branch 1x1 convs (commuted, scaled)
    o_ref  : (Nb*HW, 4*D)        bf16  y4 = prelu(conv(x)) @ w14
    """
    Nb = xp_ref.shape[0]
    S = xp_ref.shape[1] - 2
    CIN = xp_ref.shape[3]
    D = wd_ref.shape[2]
    M = Nb * S * S

    # 9 block-level tap matmuls accumulated in f32 (no tap concat, no per-n
    # loop): each tap is a (Nb*HW, Cin) slice of the padded slab.
    acc = jnp.zeros((M, D), jnp.float32)
    t = 0
    for ky in range(3):
        for kx in range(3):
            tap = xp_ref[:, ky:ky + S, kx:kx + S, :].reshape(M, CIN)
            acc = acc + jnp.dot(tap, wd_ref[t],
                                preferred_element_type=jnp.float32)
            t += 1

    y = acc + sh0_ref[...]
    y = jnp.where(y >= 0, y, PRELU_A * y)                      # (M, D) f32

    # commuted per-branch 1x1 convs: (pool o conv1x1) == (conv1x1 o pool)
    y4 = jnp.dot(y.astype(jnp.bfloat16), w14_ref[...],
                 preferred_element_type=jnp.float32)           # (M, 4D)
    o_ref[...] = y4.astype(o_ref.dtype)


# =====================  PPM: batched branch/fuse kernel (tiny)  =============

def _ppm_branch_kernel(y4_ref, pp_ref, uu_ref, wfbd_ref,
                       sh4_ref, msk_ref, sh5_ref, o_ref):
    """Pool -> PReLU -> (mask) -> fuse -> upsample -> PReLU, batched over N.

    y4_ref : (HW, N*4*D) bf16  column-batched branch inputs (n, branch, d)
    pp_ref : (144, HW)   bf16  stacked adaptive-avg-pool maps (kron, padded)
    uu_ref : (HW, 144)   bf16  stacked bilinear-upsample maps (kron, padded)
    wfbd_ref: (N*4*D, N*D) bf16 block-diag fuse weights (BN scale folded)
    sh4_ref: (144, N*4*D) f32  per-branch shifts (broadcast pattern)
    msk_ref: (144, N*4*D) f32  0/1 mask killing wrong-branch / padded rows
    sh5_ref: (1, N*D)     f32  fuse shift
    o_ref  : (HW, N*D)    f32
    """
    bf = jnp.bfloat16
    pool = jnp.dot(pp_ref[...], y4_ref[...],
                   preferred_element_type=jnp.float32)         # (144, N*4D)
    z = pool + sh4_ref[...]
    z = jnp.where(z >= 0, z, PRELU_A * z)
    z = z * msk_ref[...]                                       # kill garbage
    g = jnp.dot(z.astype(bf), wfbd_ref[...],
                preferred_element_type=jnp.float32)            # (144, N*D)
    f = jnp.dot(uu_ref[...], g.astype(bf),
                preferred_element_type=jnp.float32)            # (HW, N*D)
    f = f + sh5_ref[...]
    o_ref[...] = jnp.where(f >= 0, f, PRELU_A * f)


# ---------------------  static pool / upsample maps  ------------------------

def _pool_matrix(in_size, out_size):
    """AdaptiveAvgPool1d as a linear map [out_size, in_size] (PyTorch bins)."""
    P = np.zeros((out_size, in_size), np.float32)
    for i in range(out_size):
        s = (i * in_size) // out_size
        e = int(math.ceil((i + 1) * in_size / out_size))
        P[i, s:e] = 1.0 / (e - s)
    return P


def _upsample_matrix(out_size, in_size):
    """1-D bilinear interpolation, align_corners=True, as [out_size, in_size]."""
    U = np.zeros((out_size, in_size), np.float32)
    if in_size == 1:
        U[:, 0] = 1.0
        return U
    for i in range(out_size):
        src = 0.0 if out_size == 1 else i * (in_size - 1) / (out_size - 1)
        lo = int(math.floor(src))
        hi = min(lo + 1, in_size - 1)
        w = src - lo
        U[i, lo] += 1.0 - w
        U[i, hi] += w
    return U


# ---------------------  PPM params (BN scales folded into weights)  ---------

def make_ppm_params(key, cin=EMB_SIZE, d=DOWN_DIM):
    keys = iter(jax.random.split(key, 40))

    def nrm(shape, s=0.05):
        return s * jax.random.normal(next(keys), shape, jnp.float32)

    def bn_fold(bias, c):
        gamma = 1.0 + 0.1 * jax.random.normal(next(keys), (c,), jnp.float32)
        beta = 0.1 * jax.random.normal(next(keys), (c,), jnp.float32)
        mean = 0.1 * jax.random.normal(next(keys), (c,), jnp.float32)
        var = 0.5 + jnp.abs(jax.random.normal(next(keys), (c,), jnp.float32))
        scale = gamma / jnp.sqrt(var + BN_EPS)
        shift = (bias - mean) * scale + beta
        return scale, shift

    # down_conv: Conv2d(512, d, 3, padding=1) + BN + PReLU  (scale folded)
    w_down = nrm((d, cin, 3, 3))                  # torch layout [out,in,kh,kw]
    b_down = nrm((d,))
    sc0, sh0 = bn_fold(b_down, d)
    wd = (jnp.transpose(w_down, (2, 3, 1, 0)).reshape(9, cin, d) * sc0)
    wd = wd.astype(jnp.bfloat16)

    # 4 pyramid branches: Conv2d(d, d, 1) + BN + PReLU (scale folded; the 1x1
    # conv is commuted before the pool -- both are linear).
    w1_cols, sh4 = [], []
    for _ in range(4):
        w = nrm((d, d, 1, 1))
        b = nrm((d,))
        s, t = bn_fold(b, d)
        w1_cols.append(w[:, :, 0, 0].T * s)
        sh4.append(t)
    w14 = jnp.concatenate(w1_cols, axis=1).astype(jnp.bfloat16)   # (d, 4d)
    shift4 = jnp.stack(sh4, 0)                                     # (4, d)

    # fuse: Conv2d(4d, d, 1) + BN + PReLU, as a stacked right-multiply (4d, d)
    w_fuse = nrm((d, 4 * d, 1, 1))
    b_fuse = nrm((d,))
    s5, sh5 = bn_fold(b_fuse, d)
    wfbig = w_fuse[:, :, 0, 0].T * s5                              # (4d, d)

    return dict(wd=wd, shift0=sh0.reshape(1, d), w14=w14, shift4=shift4,
                wfbig=wfbig, shift5=sh5)


def _pick_nb(n, s, cin):
    """Batch elements per grid step: big enough to amortize the ~0.35us/step
    overhead, small enough that the double-buffered bf16 input block stays
    well inside VMEM on every generation, and never a single grid step when
    n >= 2 (so v7x can shard the 'parallel' axis across both TensorCores)."""
    per = (s + 2) * (s + 2) * cin * 2              # bf16 bytes per element
    budget = 6 * 1024 * 1024                       # per input buffer
    nb = max(1, min(n, 32, budget // per))
    if n >= 2:
        nb = min(nb, max(1, n // 2))               # >= 2 grid steps
    while n % nb:
        nb -= 1
    return nb


def ppm_forward(x_nchw, p):
    """PPM.forward.  x_nchw: [N, 512, S, S] -> [N, down_dim, S, S]."""
    N, cin, S, S2 = x_nchw.shape
    assert S == S2, "PPM input (entity_cg / mention_cg) is square"
    D = DOWN_DIM
    HW = S * S

    # bf16 BEFORE the NCHW->NHWC transpose + spatial pad (halves the XLA-side
    # prep traffic feeding a DMA-bound kernel).
    x = jnp.transpose(x_nchw.astype(jnp.bfloat16), (0, 2, 3, 1))
    x_pad = jnp.pad(x, ((0, 0), (1, 1), (1, 1), (0, 0)))

    Nb = _pick_nb(N, S, cin)
    vmem_limit = int(min(56 << 20,
                         2 * Nb * (S + 2) * (S + 2) * cin * 2 + (32 << 20)))

    y4 = pl.pallas_call(
        _ppm_down_kernel,
        out_shape=jax.ShapeDtypeStruct((N * HW, 4 * D), jnp.bfloat16),
        grid=(N // Nb,),
        in_specs=[
            pl.BlockSpec((Nb, S + 2, S + 2, cin), lambda i: (i, 0, 0, 0)),
            pl.BlockSpec((9, cin, D), lambda i: (0, 0, 0)),
            pl.BlockSpec((1, D), lambda i: (0, 0)),
            pl.BlockSpec((D, 4 * D), lambda i: (0, 0)),
        ],
        out_specs=pl.BlockSpec((Nb * HW, 4 * D), lambda i: (i, 0)),
        compiler_params=pltpu.CompilerParams(
            dimension_semantics=("parallel",),
            vmem_limit_bytes=vmem_limit),
    )(x_pad, p['wd'], p['shift0'], p['w14'])

    # Column-batched layout (HW, N*4D) for the tiny branch stage; the data is
    # a few KB, so this transpose is done in XLA (lowering a minor-dim merge
    # inside the kernel is not worth the risk).
    y4col = jnp.transpose(y4.reshape(N, HW, 4 * D), (1, 0, 2)) \
               .reshape(HW, N * 4 * D)

    # static pool / upsample maps and masks (depend only on S and N)
    pool_sizes = (1, 2, 3, 6)
    PP = np.zeros((144, HW), np.float32)
    UU = np.zeros((HW, 144), np.float32)
    mask_pat = np.zeros((144, 4 * D), np.float32)
    for b, k in enumerate(pool_sizes):
        Pk = _pool_matrix(S, k)
        Uk = _upsample_matrix(S, k)
        PP[36 * b:36 * b + k * k, :] = np.kron(Pk, Pk)
        UU[:, 36 * b:36 * b + k * k] = np.kron(Uk, Uk)
        mask_pat[36 * b:36 * b + k * k, b * D:(b + 1) * D] = 1.0
    PP = jnp.asarray(PP, jnp.bfloat16)
    UU = jnp.asarray(UU, jnp.bfloat16)
    maskcol = jnp.asarray(np.tile(mask_pat, (1, N)), jnp.float32)
    sh4_pat = jnp.tile(p['shift4'][:, None, :], (1, 36, 4)).reshape(144, 4 * D)
    sh4col = jnp.tile(sh4_pat, (1, N))
    wfbd = jnp.kron(jnp.eye(N, dtype=jnp.float32),
                    p['wfbig']).astype(jnp.bfloat16)          # (N*4D, N*D)
    sh5col = jnp.tile(p['shift5'], (N,)).reshape(1, N * D)

    out = pl.pallas_call(
        _ppm_branch_kernel,
        out_shape=jax.ShapeDtypeStruct((HW, N * D), jnp.float32),
    )(y4col, PP, UU, wfbd, sh4col, maskcol, sh5col)

    # (HW, N, D) -> (N, D, S, S)
    return jnp.transpose(out.reshape(S, S, N, D), (2, 3, 0, 1))


# =====================  Fused relation-head Pallas kernel  ==================

def _head_kernel(rel_ref, sc_ref, eh_ref, et_ref,
                 qhh_ref, qht_ref, shh_ref, sht_ref, bht_ref,
                 q1r_ref, q1s_ref, q1h_ref, s1r_ref, s1s_ref, s1h_ref, b1_ref,
                 q2_ref, s2_ref, b2_ref, wb_ref, bb_ref, o_ref):
    """ht_extractor -> MIP_Linear -> tanh(MIP_Linear2) -> bilinear, fused.

    Big weights are int8 (per-output-column scales) and de-quantized to bf16
    in-kernel; matmuls stay on the bf16 MXU path with f32 accumulation.  The
    weight matrices are split row-wise so no activation concat is needed.
    """
    bf = jnp.bfloat16

    def qmm(x, q_ref, s_ref):
        return jnp.dot(x.astype(bf), q_ref[...].astype(bf),
                       preferred_element_type=jnp.float32) * s_ref[...]

    ht = (qmm(eh_ref[...], qhh_ref, shh_ref)
          + qmm(et_ref[...], qht_ref, sht_ref)
          + bht_ref[...])                                         # (BP, 2E)

    r1 = (qmm(rel_ref[...], q1r_ref, s1r_ref)
          + qmm(sc_ref[...], q1s_ref, s1s_ref)
          + qmm(ht, q1h_ref, s1h_ref)
          + b1_ref[...])                                          # (BP, 4E)

    r2 = jnp.tanh(qmm(r1, q2_ref, s2_ref) + b2_ref[...])          # (BP, 2E)

    # bilinear: output padded to 128 lanes for a lane-dense store.
    o_ref[...] = (jnp.dot(r2.astype(bf), wb_ref[...],
                          preferred_element_type=jnp.float32)
                  + bb_ref[...])


def _quant_cols_i8(w):
    """Symmetric int8 quantization with per-output-column scales."""
    s = jnp.maximum(jnp.max(jnp.abs(w), axis=0, keepdims=True), 1e-8) / 127.0
    q = jnp.clip(jnp.round(w / s), -127, 127).astype(jnp.int8)
    return q, s.astype(jnp.float32)


def make_head_params(key, E, L):
    ks = jax.random.split(key, 4)

    def lin(k, kin, kout):
        k1, k2 = jax.random.split(k)
        bound = 1.0 / math.sqrt(kin)
        w = jax.random.uniform(k1, (kin, kout), jnp.float32, -bound, bound)
        b = jax.random.uniform(k2, (kout,), jnp.float32, -bound, bound)
        return w, b

    w_ht, b_ht = lin(ks[0], 4 * E, 2 * E)        # ht_extractor
    w1, b1 = lin(ks[1], 5 * E, 4 * E)            # MIP_Linear
    w2, b2 = lin(ks[2], 4 * E, 2 * E)            # MIP_Linear2
    wb, bb = lin(ks[3], 2 * E, L)                # bilinear

    # row-wise splits (remove in-kernel concats) + int8 weight storage
    qh_h, sh_h = _quant_cols_i8(w_ht[:2 * E])
    qh_t, sh_t = _quant_cols_i8(w_ht[2 * E:])
    q1_r, s1_r = _quant_cols_i8(w1[:2 * E])
    q1_s, s1_s = _quant_cols_i8(w1[2 * E:3 * E])
    q1_h, s1_h = _quant_cols_i8(w1[3 * E:])
    q2, s2 = _quant_cols_i8(w2)

    # bilinear stays bf16 (tiny) and is padded to 128 output lanes.
    L_pad = 128
    wb_p = jnp.zeros((2 * E, L_pad), jnp.float32).at[:, :L].set(wb)
    bb_p = jnp.zeros((1, L_pad), jnp.float32).at[0, :L].set(bb)

    return dict(
        qh_h=qh_h, qh_t=qh_t, sh_h=sh_h, sh_t=sh_t, b_ht=b_ht.reshape(1, -1),
        q1_r=q1_r, q1_s=q1_s, q1_h=q1_h, s1_r=s1_r, s1_s=s1_s, s1_h=s1_h,
        b_mip1=b1.reshape(1, -1),
        q2=q2, s2=s2, b_mip2=b2.reshape(1, -1),
        w_bil=wb_p.astype(jnp.bfloat16), b_bil=bb_p,
        num_labels=L)


def docre_head(relation, sc_feature_e, entity_h, entity_t, hp):
    """entity_ht -> MIP_Linear -> tanh(MIP_Linear2) -> bilinear (logits)."""
    P = relation.shape[0]
    E = sc_feature_e.shape[1]
    L_pad = hp['w_bil'].shape[1]

    # grid over P row-blocks; weights use constant index maps (fetched once).
    if P >= 128:
        BP = 128
    else:
        BP = max(8, ((P + 7) // 8) * 8)
    P_pad = ((P + BP - 1) // BP) * BP

    def padP(x):
        return x if P_pad == P else jnp.pad(x, ((0, P_pad - P), (0, 0)))

    rel, sc, eh, et = (padP(relation), padP(sc_feature_e),
                       padP(entity_h), padP(entity_t))

    row = lambda i: (i, 0)
    fix = lambda i: (0, 0)

    logits_pad = pl.pallas_call(
        _head_kernel,
        out_shape=jax.ShapeDtypeStruct((P_pad, L_pad), jnp.float32),
        grid=(P_pad // BP,),
        in_specs=[
            pl.BlockSpec((BP, 2 * E), row),          # relation
            pl.BlockSpec((BP, E), row),              # sc_feature_e
            pl.BlockSpec((BP, 2 * E), row),          # entity_h
            pl.BlockSpec((BP, 2 * E), row),          # entity_t
            pl.BlockSpec((2 * E, 2 * E), fix),       # qh_h
            pl.BlockSpec((2 * E, 2 * E), fix),       # qh_t
            pl.BlockSpec((1, 2 * E), fix),           # sh_h
            pl.BlockSpec((1, 2 * E), fix),           # sh_t
            pl.BlockSpec((1, 2 * E), fix),           # b_ht
            pl.BlockSpec((2 * E, 4 * E), fix),       # q1_r
            pl.BlockSpec((E, 4 * E), fix),           # q1_s
            pl.BlockSpec((2 * E, 4 * E), fix),       # q1_h
            pl.BlockSpec((1, 4 * E), fix),           # s1_r
            pl.BlockSpec((1, 4 * E), fix),           # s1_s
            pl.BlockSpec((1, 4 * E), fix),           # s1_h
            pl.BlockSpec((1, 4 * E), fix),           # b_mip1
            pl.BlockSpec((4 * E, 2 * E), fix),       # q2
            pl.BlockSpec((1, 2 * E), fix),           # s2
            pl.BlockSpec((1, 2 * E), fix),           # b_mip2
            pl.BlockSpec((2 * E, L_pad), fix),       # w_bil
            pl.BlockSpec((1, L_pad), fix),           # b_bil
        ],
        out_specs=pl.BlockSpec((BP, L_pad), row),
        compiler_params=pltpu.CompilerParams(
            dimension_semantics=("parallel",),
            vmem_limit_bytes=44 * 1024 * 1024),
    )(rel, sc, eh, et,
      hp['qh_h'], hp['qh_t'], hp['sh_h'], hp['sh_t'], hp['b_ht'],
      hp['q1_r'], hp['q1_s'], hp['q1_h'],
      hp['s1_r'], hp['s1_s'], hp['s1_h'], hp['b_mip1'],
      hp['q2'], hp['s2'], hp['b_mip2'], hp['w_bil'], hp['b_bil'])

    return logits_pad[:P, :hp['num_labels']]
    # TODO(synk): ATLoss / get_label not provided in source; stop at logits.


# =====================  demo  =====================

if __name__ == "__main__":
    key = jax.random.PRNGKey(0)
    k_x, k_ppm, k_head, k_feat = jax.random.split(key, 4)

    N, S = 2, 8          # batch, e_num_max (entity relation map side)
    P = 16               # total number of (h, t) pairs
    E = EMB_SIZE

    # entity_cg analogue from relation_map: [N, emb_size=512, e_num_max, e_num_max]
    entity_cg = jax.random.normal(k_x, (N, E, S, S), jnp.float32)

    ppm_p = make_ppm_params(k_ppm)
    entity_cg_down = ppm_forward(entity_cg, ppm_p)       # [N, 3, S, S]
    mention_cg_down = ppm_forward(entity_cg, ppm_p)      # (same PPM, as in forward)

    # Synthetic downstream features (encoder / graph / segmentation / reason
    # stages are external modules not provided -- see TODO(synk) above).
    kf = jax.random.split(k_feat, 4)
    relation = jax.random.normal(kf[0], (P, 2 * E), jnp.float32)      # cat([r_v1, r_v2])
    sc_feature_e = jax.random.normal(kf[1], (P, E), jnp.float32)      # f_e
    entity_h = jax.random.normal(kf[2], (P, 2 * E), jnp.float32)      # nodes_re[ht[:,0]]
    entity_t = jax.random.normal(kf[3], (P, 2 * E), jnp.float32)      # nodes_re[ht[:,1]]

    hp = make_head_params(k_head, E, NUM_LABELS)
    logits = docre_head(relation, sc_feature_e, entity_h, entity_t, hp)

    jax.block_until_ready((entity_cg_down, mention_cg_down, logits))
    assert entity_cg_down.shape == (N, DOWN_DIM, S, S)
    assert mention_cg_down.shape == (N, DOWN_DIM, S, S)
    assert logits.shape == (P, NUM_LABELS)
    print("KERNEL_OK")
</pallas_src>

<mosaic_0001>
module attributes {stable_mosaic.version = 11 : i64} {
  func.func @_ppm_down_kernel(%arg0: i32, %arg1: memref<1x10x10x512xbf16, #tpu.memory_space<vmem>>, %arg2: memref<9x512x3xbf16, #tpu.memory_space<vmem>>, %arg3: memref<1x3xf32, #tpu.memory_space<vmem>>, %arg4: memref<3x12xbf16, #tpu.memory_space<vmem>>, %arg5: memref<64x12xbf16, #tpu.memory_space<vmem>>) attributes {dimension_semantics = [#tpu.dimension_semantics<parallel>], iteration_bounds = array<i64: 2>, scalar_prefetch = 0 : i64, scratch_operands = 0 : i64, tpu.core_type = #tpu.core_type<tc>, window_params = [{transform_indices = @transform_0, window_bounds = array<i64: 1, 10, 10, 512>}, {pipeline_mode = #tpu.pipeline_mode<synchronous>, transform_indices = @transform_1, window_bounds = array<i64: 9, 512, 3>}, {pipeline_mode = #tpu.pipeline_mode<synchronous>, transform_indices = @transform_2, window_bounds = array<i64: 1, 3>}, {pipeline_mode = #tpu.pipeline_mode<synchronous>, transform_indices = @transform_3, window_bounds = array<i64: 3, 12>}, {transform_indices = @transform_4, window_bounds = array<i64: 64, 12>}]} {
    %cst = arith.constant 0.000000e+00 : f32
    %0 = vector.broadcast %cst : f32 to vector<64x3xf32>
    %c0 = arith.constant 0 : index
    %c0_0 = arith.constant 0 : index
    %c0_1 = arith.constant 0 : index
    %c0_2 = arith.constant 0 : index
    %1 = vector.load %arg1[%c0, %c0_0, %c0_1, %c0_2] : memref<1x10x10x512xbf16, #tpu.memory_space<vmem>>, vector<1x8x8x512xbf16>
    %2 = vector.shape_cast %1 : vector<1x8x8x512xbf16> to vector<64x512xbf16>
    %c0_3 = arith.constant 0 : index
    %c0_4 = arith.constant 0 : index
    %c0_5 = arith.constant 0 : index
    %3 = vector.load %arg2[%c0_3, %c0_4, %c0_5] : memref<9x512x3xbf16, #tpu.memory_space<vmem>>, vector<1x512x3xbf16>
    %4 = vector.shape_cast %3 : vector<1x512x3xbf16> to vector<512x3xbf16>
    %cst_6 = arith.constant dense<0.000000e+00> : vector<64x3xf32>
    %5 = tpu.matmul %2, %4, %cst_6 {dimension_numbers = #tpu.dot_dimension_numbers<[1], [0], [0], [1], [0, 0, 1, 1], [], []>} : vector<64x512xbf16>, vector<512x3xbf16>, vector<64x3xf32> -> vector<64x3xf32>
    %6 = arith.addf %0, %5 : vector<64x3xf32>
    %c0_7 = arith.constant 0 : index
    %c0_8 = arith.constant 0 : index
    %c1 = arith.constant 1 : index
    %c0_9 = arith.constant 0 : index
    %7 = vector.load %arg1[%c0_7, %c0_8, %c1, %c0_9] : memref<1x10x10x512xbf16, #tpu.memory_space<vmem>>, vector<1x8x8x512xbf16>
    %8 = vector.shape_cast %7 : vector<1x8x8x512xbf16> to vector<64x512xbf16>
    %c1_10 = arith.constant 1 : index
    %c0_11 = arith.constant 0 : index
    %c0_12 = arith.constant 0 : index
    %9 = vector.load %arg2[%c1_10, %c0_11, %c0_12] : memref<9x512x3xbf16, #tpu.memory_space<vmem>>, vector<1x512x3xbf16>
    %10 = vector.shape_cast %9 : vector<1x512x3xbf16> to vector<512x3xbf16>
    %cst_13 = arith.constant dense<0.000000e+00> : vector<64x3xf32>
    %11 = tpu.matmul %8, %10, %cst_13 {dimension_numbers = #tpu.dot_dimension_numbers<[1], [0], [0], [1], [0, 0, 1, 1], [], []>} : vector<64x512xbf16>, vector<512x3xbf16>, vector<64x3xf32> -> vector<64x3xf32>
    %12 = arith.addf %6, %11 : vector<64x3xf32>
    %c0_14 = arith.constant 0 : index
    %c0_15 = arith.constant 0 : index
    %c2 = arith.constant 2 : index
    %c0_16 = arith.constant 0 : index
    %13 = vector.load %arg1[%c0_14, %c0_15, %c2, %c0_16] : memref<1x10x10x512xbf16, #tpu.memory_space<vmem>>, vector<1x8x8x512xbf16>
    %14 = vector.shape_cast %13 : vector<1x8x8x512xbf16> to vector<64x512xbf16>
    %c2_17 = arith.constant 2 : index
    %c0_18 = arith.constant 0 : index
    %c0_19 = arith.constant 0 : index
    %15 = vector.load %arg2[%c2_17, %c0_18, %c0_19] : memref<9x512x3xbf16, #tpu.memory_space<vmem>>, vector<1x512x3xbf16>
    %16 = vector.shape_cast %15 : vector<1x512x3xbf16> to vector<512x3xbf16>
    %cst_20 = arith.constant dense<0.000000e+00> : vector<64x3xf32>
    %17 = tpu.matmul %14, %16, %cst_20 {dimension_numbers = #tpu.dot_dimension_numbers<[1], [0], [0], [1], [0, 0, 1, 1], [], []>} : vector<64x512xbf16>, vector<512x3xbf16>, vector<64x3xf32> -> vector<64x3xf32>
    %18 = arith.addf %12, %17 : vector<64x3xf32>
    %c0_21 = arith.constant 0 : index
    %c1_22 = arith.constant 1 : index
    %c0_23 = arith.constant 0 : index
    %c0_24 = arith.constant 0 : index
    %19 = vector.load %arg1[%c0_21, %c1_22, %c0_23, %c0_24] : memref<1x10x10x512xbf16, #tpu.memory_space<vmem>>, vector<1x8x8x512xbf16>
    %20 = vector.shape_cast %19 : vector<1x8x8x512xbf16> to vector<64x512xbf16>
    %c3 = arith.constant 3 : index
    %c0_25 = arith.constant 0 : index
    %c0_26 = arith.constant 0 : index
    %21 = vector.load %arg2[%c3, %c0_25, %c0_26] : memref<9x512x3xbf16, #tpu.memory_space<vmem>>, vector<1x512x3xbf16>
    %22 = vector.shape_cast %21 : vector<1x512x3xbf16> to vector<512x3xbf16>
    %cst_27 = arith.constant dense<0.000000e+00> : vector<64x3xf32>
    %23 = tpu.matmul %20, %22, %cst_27 {dimension_numbers = #tpu.dot_dimension_numbers<[1], [0], [0], [1], [0, 0, 1, 1], [], []>} : vector<64x512xbf16>, vector<512x3xbf16>, vector<64x3xf32> -> vector<64x3xf32>
    %24 = arith.addf %18, %23 : vector<64x3xf32>
    %c0_28 = arith.constant 0 : index
    %c1_29 = arith.constant 1 : index
    %c1_30 = arith.constant 1 : index
    %c0_31 = arith.constant 0 : index
    %25 = vector.load %arg1[%c0_28, %c1_29, %c1_30, %c0_31] : memref<1x10x10x512xbf16, #tpu.memory_space<vmem>>, vector<1x8x8x512xbf16>
    %26 = vector.shape_cast %25 : vector<1x8x8x512xbf16> to vector<64x512xbf16>
    %c4 = arith.constant 4 : index
    %c0_32 = arith.constant 0 : index
    %c0_33 = arith.constant 0 : index
    %27 = vector.load %arg2[%c4, %c0_32, %c0_33] : memref<9x512x3xbf16, #tpu.memory_space<vmem>>, vector<1x512x3xbf16>
    %28 = vector.shape_cast %27 : vector<1x512x3xbf16> to vector<512x3xbf16>
    %cst_34 = arith.constant dense<0.000000e+00> : vector<64x3xf32>
    %29 = tpu.matmul %26, %28, %cst_34 {dimension_numbers = #tpu.dot_dimension_numbers<[1], [0], [0], [1], [0, 0, 1, 1], [], []>} : vector<64x512xbf16>, vector<512x3xbf16>, vector<64x3xf32> -> vector<64x3xf32>
    %30 = arith.addf %24, %29 : vector<64x3xf32>
    %c0_35 = arith.constant 0 : index
    %c1_36 = arith.constant 1 : index
    %c2_37 = arith.constant 2 : index
    %c0_38 = arith.constant 0 : index
    %31 = vector.load %arg1[%c0_35, %c1_36, %c2_37, %c0_38] : memref<1x10x10x512xbf16, #tpu.memory_space<vmem>>, vector<1x8x8x512xbf16>
    %32 = vector.shape_cast %31 : vector<1x8x8x512xbf16> to vector<64x512xbf16>
    %c5 = arith.constant 5 : index
    %c0_39 = arith.constant 0 : index
    %c0_40 = arith.constant 0 : index
    %33 = vector.load %arg2[%c5, %c0_39, %c0_40] : memref<9x512x3xbf16, #tpu.memory_space<vmem>>, vector<1x512x3xbf16>
    %34 = vector.shape_cast %33 : vector<1x512x3xbf16> to vector<512x3xbf16>
    %cst_41 = arith.constant dense<0.000000e+00> : vector<64x3xf32>
    %35 = tpu.matmul %32, %34, %cst_41 {dimension_numbers = #tpu.dot_dimension_numbers<[1], [0], [0], [1], [0, 0, 1, 1], [], []>} : vector<64x512xbf16>, vector<512x3xbf16>, vector<64x3xf32> -> vector<64x3xf32>
    %36 = arith.addf %30, %35 : vector<64x3xf32>
    %c0_42 = arith.constant 0 : index
    %c2_43 = arith.constant 2 : index
    %c0_44 = arith.constant 0 : index
    %c0_45 = arith.constant 0 : index
    %37 = vector.load %arg1[%c0_42, %c2_43, %c0_44, %c0_45] : memref<1x10x10x512xbf16, #tpu.memory_space<vmem>>, vector<1x8x8x512xbf16>
    %38 = vector.shape_cast %37 : vector<1x8x8x512xbf16> to vector<64x512xbf16>
    %c6 = arith.constant 6 : index
    %c0_46 = arith.constant 0 : index
    %c0_47 = arith.constant 0 : index
    %39 = vector.load %arg2[%c6, %c0_46, %c0_47] : memref<9x512x3xbf16, #tpu.memory_space<vmem>>, vector<1x512x3xbf16>
    %40 = vector.shape_cast %39 : vector<1x512x3xbf16> to vector<512x3xbf16>
    %cst_48 = arith.constant dense<0.000000e+00> : vector<64x3xf32>
    %41 = tpu.matmul %38, %40, %cst_48 {dimension_numbers = #tpu.dot_dimension_numbers<[1], [0], [0], [1], [0, 0, 1, 1], [], []>} : vector<64x512xbf16>, vector<512x3xbf16>, vector<64x3xf32> -> vector<64x3xf32>
    %42 = arith.addf %36, %41 : vector<64x3xf32>
    %c0_49 = arith.constant 0 : index
    %c2_50 = arith.constant 2 : index
    %c1_51 = arith.constant 1 : index
    %c0_52 = arith.constant 0 : index
    %43 = vector.load %arg1[%c0_49, %c2_50, %c1_51, %c0_52] : memref<1x10x10x512xbf16, #tpu.memory_space<vmem>>, vector<1x8x8x512xbf16>
    %44 = vector.shape_cast %43 : vector<1x8x8x512xbf16> to vector<64x512xbf16>
    %c7 = arith.constant 7 : index
    %c0_53 = arith.constant 0 : index
    %c0_54 = arith.constant 0 : index
    %45 = vector.load %arg2[%c7, %c0_53, %c0_54] : memref<9x512x3xbf16, #tpu.memory_space<vmem>>, vector<1x512x3xbf16>
    %46 = vector.shape_cast %45 : vector<1x512x3xbf16> to vector<512x3xbf16>
    %cst_55 = arith.constant dense<0.000000e+00> : vector<64x3xf32>
    %47 = tpu.matmul %44, %46, %cst_55 {dimension_numbers = #tpu.dot_dimension_numbers<[1], [0], [0], [1], [0, 0, 1, 1], [], []>} : vector<64x512xbf16>, vector<512x3xbf16>, vector<64x3xf32> -> vector<64x3xf32>
    %48 = arith.addf %42, %47 : vector<64x3xf32>
    %c0_56 = arith.constant 0 : index
    %c2_57 = arith.constant 2 : index
    %c2_58 = arith.constant 2 : index
    %c0_59 = arith.constant 0 : index
    %49 = vector.load %arg1[%c0_56, %c2_57, %c2_58, %c0_59] : memref<1x10x10x512xbf16, #tpu.memory_space<vmem>>, vector<1x8x8x512xbf16>
    %50 = vector.shape_cast %49 : vector<1x8x8x512xbf16> to vector<64x512xbf16>
    %c8 = arith.constant 8 : index
    %c0_60 = arith.constant 0 : index
    %c0_61 = arith.constant 0 : index
    %51 = vector.load %arg2[%c8, %c0_60, %c0_61] : memref<9x512x3xbf16, #tpu.memory_space<vmem>>, vector<1x512x3xbf16>
    %52 = vector.shape_cast %51 : vector<1x512x3xbf16> to vector<512x3xbf16>
    %cst_62 = arith.constant dense<0.000000e+00> : vector<64x3xf32>
    %53 = tpu.matmul %50, %52, %cst_62 {dimension_numbers = #tpu.dot_dimension_numbers<[1], [0], [0], [1], [0, 0, 1, 1], [], []>} : vector<64x512xbf16>, vector<512x3xbf16>, vector<64x3xf32> -> vector<64x3xf32>
    %54 = arith.addf %48, %53 : vector<64x3xf32>
    %c0_63 = arith.constant 0 : index
    %c0_64 = arith.constant 0 : index
    %55 = vector.load %arg3[%c0_63, %c0_64] : memref<1x3xf32, #tpu.memory_space<vmem>>, vector<1x3xf32>
    %56 = vector.broadcast %55 : vector<1x3xf32> to vector<64x3xf32>
    %57 = arith.addf %54, %56 : vector<64x3xf32>
    %cst_65 = arith.constant 0.000000e+00 : f32
    %58 = vector.broadcast %cst_65 : f32 to vector<64x3xf32>
    %59 = arith.cmpf oge, %57, %58 : vector<64x3xf32>
    %cst_66 = arith.constant 2.500000e-01 : f32
    %60 = vector.broadcast %cst_66 : f32 to vector<64x3xf32>
    %61 = arith.mulf %60, %57 : vector<64x3xf32>
    %62 = arith.select %59, %57, %61 : vector<64x3xi1>, vector<64x3xf32>
    %63 = arith.truncf %62 : vector<64x3xf32> to vector<64x3xbf16>
    %c0_67 = arith.constant 0 : index
    %c0_68 = arith.constant 0 : index
    %64 = vector.load %arg4[%c0_67, %c0_68] : memref<3x12xbf16, #tpu.memory_space<vmem>>, vector<3x12xbf16>
    %cst_69 = arith.constant dense<0.000000e+00> : vector<64x12xf32>
    %65 = tpu.matmul %63, %64, %cst_69 {dimension_numbers = #tpu.dot_dimension_numbers<[1], [0], [0], [1], [0, 0, 1, 1], [], []>} : vector<64x3xbf16>, vector<3x12xbf16>, vector<64x12xf32> -> vector<64x12xf32>
    %66 = arith.truncf %65 : vector<64x12xf32> to vector<64x12xbf16>
    %c0_70 = arith.constant 0 : index
    %c0_71 = arith.constant 0 : index
    %67 = vector.load %arg5[%c0_70, %c0_71] : memref<64x12xbf16, #tpu.memory_space<vmem>>, vector<64x12xbf16>
    tpu.vector_store %arg5[%c0_70, %c0_71], %66 {strides = array<i32>} : memref<64x12xbf16, #tpu.memory_space<vmem>>, vector<64x12xbf16>,
    return
  }
  func.func @transform_0(%arg0: i32) -> (i32, i32, i32, i32) {
    %c0_i32 = arith.constant 0 : i32
    %c0_i32_0 = arith.constant 0 : i32
    %c0_i32_1 = arith.constant 0 : i32
    %c0_i32_2 = arith.constant 0 : i32
    return %arg0, %c0_i32, %c0_i32_0, %c0_i32_1 : i32, i32, i32, i32
  }
  func.func @transform_1(%arg0: i32) -> (i32, i32, i32) {
    %c0_i32 = arith.constant 0 : i32
    %c0_i32_0 = arith.constant 0 : i32
    %c0_i32_1 = arith.constant 0 : i32
    %c0_i32_2 = arith.constant 0 : i32
    return %c0_i32, %c0_i32_0, %c0_i32_1 : i32, i32, i32
  }
  func.func @transform_2(%arg0: i32) -> (i32, i32) {
    %c0_i32 = arith.constant 0 : i32
    %c0_i32_0 = arith.constant 0 : i32
    %c0_i32_1 = arith.constant 0 : i32
    return %c0_i32, %c0_i32_0 : i32, i32
  }
  func.func @transform_3(%arg0: i32) -> (i32, i32) {
    %c0_i32 = arith.constant 0 : i32
    %c0_i32_0 = arith.constant 0 : i32
    %c0_i32_1 = arith.constant 0 : i32
    return %c0_i32, %c0_i32_0 : i32, i32
  }
  func.func @transform_4(%arg0: i32) -> (i32, i32) {
    %c0_i32 = arith.constant 0 : i32
    %c0_i32_0 = arith.constant 0 : i32
    return %arg0, %c0_i32 : i32, i32
  }
}

</mosaic_0001>

<llo_original>
// kernel: tpu_custom_call.1
$region0: #{tpu_custom_call.1}
  #allocation0 [shape = 'u32[]', space=smem, size = 0x4, offset = 0x4, fixed_abs, tag = 'smem constant byte address 0x4 - core index']
  #allocation1 [shape = 'u32[144,128]{1,0:T(1,128)}', space=vmem, size = 0x12000, scoped, tag = 'internal scratch']
  %s0 = inlined_call_operand.vmem [shape: bf16[2,10,10,512], index: 0, kind: input, shape index: {}]
  %s1 = inlined_call_operand.vmem [shape: bf16[9,512,3], index: 1, kind: input, shape index: {}]
  %s2 = inlined_call_operand.vmem [shape: f32[1,3], index: 2, kind: input, shape index: {}]
  %s3 = inlined_call_operand.vmem [shape: bf16[3,12], index: 3, kind: input, shape index: {}]
  %s4 = inlined_call_operand.vmem [shape: bf16[128,12], index: 4, kind: output, shape index: {}]
  %s5 = sld [smem:[#allocation0]]
  $region49: #{tpu_custom_call.1} parent=0
    _
  %s7 = ssub.s32 1, %s5
  %s8 = scalar_select 0, %s7, %s5
  loop: start=0, step=1, limit=4
  $region2: #{tpu_custom_call.1} parent=0 // loop_pre_header
    _
  $region3: #{tpu_custom_call.1} parent=0 // loop_header
    %s10 = sphi 0, %s14
    %p11 = scmp.ge.s32.totalorder %s10, 4
    %s20 = sphi 0, %s22
    %s23 = sphi 0, %s20
    %s24 = sphi 0, %s23
    %s40 = sphi 0, %s24
    %s44 = sphi 0, %s44
    %s46 = sphi 0, %s44
    %s47 = sphi 0, %s46
    %s61 = sphi 0, %s47
    %s65 = sphi 0, %s65
    %s67 = sphi 0, %s65
    %s68 = sphi 0, %s67
    %s82 = sphi 0, %s68
    %s86 = sphi 0, %s86
    %s88 = sphi 0, %s86
    %s89 = sphi 0, %s88
    %s103 = sphi 0, %s89
    %s109 = sphi 0, %s111
    %s112 = sphi 0, %s109
    %s113 = sphi 0, %s112
    %s129 = sphi 0, %s113
  $region4: #{tpu_custom_call.1} parent=0 // loop_header_branch
    %13 = sbr.rel (%p11) target = $region8
  $region5: #{tpu_custom_call.1} parent=0 // loop_body
    %s15 = ssub.s32 %s10, 1
    %s16 = ssub.s32 %s10, 2
    %s17 = sadd.s32 %s10, 1
    %s18 = ssub.s32 %s10, %s17
    %p19 = scmp.eq.s32.totalorder %s18, 0
    %s21 = sadd.s32 %s20, 1
    %s22 = scalar_select %p19, %s20, %s21
    %p25 = pneg %p19
    %p26 = scmp.eq.s32.totalorder %s10, 1
    %p27 = por %p25, %p26
    %p28 = scmp.ne.s32.totalorder %s20, %s23
    %p29 = scmp.eq.s32.totalorder %s10, 0
    %p30 = por %p28, %p29
    %p31 = scmp.ne.s32.totalorder %s20, %s23
    %p32 = scmp.eq.s32.totalorder %s15, 1
    %p33 = por %p31, %p32
    %p34 = scmp.ne.s32.totalorder %s23, %s24
    %p35 = scmp.eq.s32.totalorder %s15, 0
    %p36 = por %p34, %p35
    %p37 = scmp.ne.s32.totalorder %s23, %s24
    %p38 = scmp.eq.s32.totalorder %s16, 1
    %p39 = por %p37, %p38
    %p41 = scmp.ne.s32.totalorder %s24, %s40
    %p42 = scmp.eq.s32.totalorder %s16, 0
    %p43 = por %p41, %p42
    %s45 = sadd.s32 %s44, 1
    %p48 = scmp.eq.s32.totalorder %s10, 1
    %p49 = scmp.ne.s32.totalorder %s44, %s46
    %p50 = scmp.eq.s32.totalorder %s10, 0
    %p51 = por %p49, %p50
    %p52 = scmp.ne.s32.totalorder %s44, %s46
    %p53 = scmp.eq.s32.totalorder %s15, 1
    %p54 = por %p52, %p53
    %p55 = scmp.ne.s32.totalorder %s46, %s47
    %p56 = scmp.eq.s32.totalorder %s15, 0
    %p57 = por %p55, %p56
    %p58 = scmp.ne.s32.totalorder %s46, %s47
    %p59 = scmp.eq.s32.totalorder %s16, 1
    %p60 = por %p58, %p59
    %p62 = scmp.ne.s32.totalorder %s47, %s61
    %p63 = scmp.eq.s32.totalorder %s16, 0
    %p64 = por %p62, %p63
    %s66 = sadd.s32 %s65, 1
    %p69 = scmp.eq.s32.totalorder %s10, 1
    %p70 = scmp.ne.s32.totalorder %s65, %s67
    %p71 = scmp.eq.s32.totalorder %s10, 0
    %p72 = por %p70, %p71
    %p73 = scmp.ne.s32.totalorder %s65, %s67
    %p74 = scmp.eq.s32.totalorder %s15, 1
    %p75 = por %p73, %p74
    %p76 = scmp.ne.s32.totalorder %s67, %s68
    %p77 = scmp.eq.s32.totalorder %s15, 0
    %p78 = por %p76, %p77
    %p79 = scmp.ne.s32.totalorder %s67, %s68
    %p80 = scmp.eq.s32.totalorder %s16, 1
    %p81 = por %p79, %p80
    %p83 = scmp.ne.s32.totalorder %s68, %s82
    %p84 = scmp.eq.s32.totalorder %s16, 0
    %p85 = por %p83, %p84
    %s87 = sadd.s32 %s86, 1
    %p90 = scmp.eq.s32.totalorder %s10, 1
    %p91 = scmp.ne.s32.totalorder %s86, %s88
    %p92 = scmp.eq.s32.totalorder %s10, 0
    %p93 = por %p91, %p92
    %p94 = scmp.ne.s32.totalorder %s86, %s88
    %p95 = scmp.eq.s32.totalorder %s15, 1
    %p96 = por %p94, %p95
    %p97 = scmp.ne.s32.totalorder %s88, %s89
    %p98 = scmp.eq.s32.totalorder %s15, 0
    %p99 = por %p97, %p98
    %p100 = scmp.ne.s32.totalorder %s88, %s89
    %p101 = scmp.eq.s32.totalorder %s16, 1
    %p102 = por %p100, %p101
    %p104 = scmp.ne.s32.totalorder %s89, %s103
    %p105 = scmp.eq.s32.totalorder %s16, 0
    %p106 = por %p104, %p105
    %s107 = ssub.s32 %s10, %s17
    %p108 = scmp.eq.s32.totalorder %s107, 0
    %s110 = sadd.s32 %s109, 1
    %s111 = scalar_select %p108, %s109, %s110
    %p114 = pneg %p108
    %p115 = scmp.eq.s32.totalorder %s10, 1
    %p116 = por %p114, %p115
    %p117 = scmp.ne.s32.totalorder %s109, %s112
    %p118 = scmp.eq.s32.totalorder %s10, 0
    %p119 = por %p117, %p118
    %p120 = scmp.ne.s32.totalorder %s109, %s112
    %p121 = scmp.eq.s32.totalorder %s15, 1
    %p122 = por %p120, %p121
    %p123 = scmp.ne.s32.totalorder %s112, %s113
    %p124 = scmp.eq.s32.totalorder %s15, 0
    %p125 = por %p123, %p124
    %p126 = scmp.ne.s32.totalorder %s112, %s113
    %p127 = scmp.eq.s32.totalorder %s16, 1
    %p128 = por %p126, %p127
    %p130 = scmp.ne.s32.totalorder %s113, %s129
    %p131 = scmp.eq.s32.totalorder %s16, 0
    %p132 = por %p130, %p131
    %p133 = scmp.le.s32.totalorder 1, %s10
    %p134 = scmp.lt.s32.totalorder %s10, 3
    %p135 = pnand %p133, %p134
    %p136 = pneg %p135
    // Predicated region
    $region9: #{tpu_custom_call.1} parent=5 // pred_check
      _
    $region10: #{tpu_custom_call.1} parent=5 // pred_check_branch
      %138 = sbr.rel (%p135) target = $region12
    $region11: #{tpu_custom_call.1} parent=5 // pred_region
      %s139 = ssub.s32 %s10, 1
      // Predicated region
      $region13: #{tpu_custom_call.1} parent=11 // pred_check
        %p140 = pneg %p57
      $region14: #{tpu_custom_call.1} parent=11 // pred_check_branch
        %142 = sbr.rel (%p140) target = $region16
      $region15: #{tpu_custom_call.1} parent=11 // pred_region
        _
      $region16: #{tpu_custom_call.1} parent=11 // pred_fallthru
        _
      // Predicated region
      $region17: #{tpu_custom_call.1} parent=11 // pred_check
        %p143 = pneg %p78
      $region18: #{tpu_custom_call.1} parent=11 // pred_check_branch
        %145 = sbr.rel (%p143) target = $region20
      $region19: #{tpu_custom_call.1} parent=11 // pred_region
        _
      $region20: #{tpu_custom_call.1} parent=11 // pred_fallthru
        _
      // Predicated region
      $region21: #{tpu_custom_call.1} parent=11 // pred_check
        %p146 = pneg %p99
      $region22: #{tpu_custom_call.1} parent=11 // pred_check_branch
        %148 = sbr.rel (%p146) target = $region24
      $region23: #{tpu_custom_call.1} parent=11 // pred_region
        _
      $region24: #{tpu_custom_call.1} parent=11 // pred_fallthru
        _
    $region12: #{tpu_custom_call.1} parent=5 // pred_fallthru
      _
    %p149 = scmp.lt.s32.totalorder %s10, 2
    // Predicated region
    $region25: #{tpu_custom_call.1} parent=5 // pred_check
      %p150 = pneg %p149
    $region26: #{tpu_custom_call.1} parent=5 // pred_check_branch
      %152 = sbr.rel (%p150) target = $region28
    $region27: #{tpu_custom_call.1} parent=5 // pred_region
      // Predicated region
      $region29: #{tpu_custom_call.1} parent=27 // pred_check
        %p153 = pneg %p30
      $region30: #{tpu_custom_call.1} parent=27 // pred_check_branch
        %155 = sbr.rel (%p153) target = $region32
      $region31: #{tpu_custom_call.1} parent=27 // pred_region
        %p156 = scmp.lt.s32.totalorder %s10, 1
        %s157 = scalar_select %p156, %s10, 1
        %s158 = smul.addr %s157, 80
        %s159 = smul.addr %s158, 4
        %s160 = scalar_lea.vmem %s0, %s159
      $region32: #{tpu_custom_call.1} parent=27 // pred_fallthru
        _
    $region28: #{tpu_custom_call.1} parent=5 // pred_fallthru
      _
    %p161 = scmp.le.s32.totalorder 1, %s10
    %p162 = scmp.lt.s32.totalorder %s10, 3
    %p163 = pnand %p161, %p162
    %p164 = pneg %p163
    // Predicated region
    $region33: #{tpu_custom_call.1} parent=5 // pred_check
      _
    $region34: #{tpu_custom_call.1} parent=5 // pred_check_branch
      %166 = sbr.rel (%p163) target = $region36
    $region35: #{tpu_custom_call.1} parent=5 // pred_region
      %s167 = ssub.s32 %s10, 1
      %p168 = scmp.lt.s32.totalorder %s15, 1
      %s169 = scalar_select %p168, %s15, 1
      %s170 = smul.addr %s169, 80
      %s171 = smul.addr %s170, 4
      %s172 = scalar_lea.vmem %s0, %s171
      %p173 = pneg %p36
      %p174 = pneg %p33
      %p175 = pneg %p57
      %p176 = pneg %p54
      %p177 = pneg %p78
      %p178 = pneg %p75
      %p179 = pneg %p99
      %p180 = pneg %p96
      %p181 = pneg %p125
      %p182 = pneg %p122
      %s183 = smul.u32 8, %s15
      %p184 = scmp.lt.s32.totalorder %s183, 15
      %s185 = scalar_select %p184, %s183, 15
      %s186 = smul.addr %s185, 4
      %s187 = scalar_lea.vmem %s4, %s186
      %p188 = scmp.lt.s32.totalorder %s15, 1
      %s189 = scalar_select %p188, %s15, 1
      %s190 = smul.addr %s189, 80
      %s191 = smul.addr %s190, 4
      %s192 = scalar_lea.vmem %s0, %s191
      %s193 = smul.u32 8, %s15
      %p194 = scmp.lt.s32.totalorder %s193, 15
      %s195 = scalar_select %p194, %s193, 15
      %s196 = smul.addr %s195, 4
      %s197 = scalar_lea.vmem %s4, %s196
      %s198 = smul.u32 8, %s15
      %v200 = vld [vmem:[%s192] sm:$0xff]
      %v201 = vld [vmem:[%s192 + $0x8] sm:$0xff]
      %v202 = vld [vmem:[%s192 + $0x20] sm:$0xff]
      %v203 = vld [vmem:[%s192 + $0x28] sm:$0xff]
      %v204 = vld [vmem:[%s192 + $0x40] sm:$0xff]
      %v205 = vld [vmem:[%s192 + $0x48] sm:$0xff]
      %v206 = vld [vmem:[%s192 + $0x60] sm:$0xff]
      %v207 = vld [vmem:[%s192 + $0x68] sm:$0xff]
      %v208 = vld [vmem:[%s192 + $0x80] sm:$0xff]
      %v209 = vld [vmem:[%s192 + $0x88] sm:$0xff]
      %v210 = vld [vmem:[%s192 + $0xa0] sm:$0xff]
      %v211 = vld [vmem:[%s192 + $0xa8] sm:$0xff]
      %v212 = vld [vmem:[%s192 + $0xc0] sm:$0xff]
      %v213 = vld [vmem:[%s192 + $0xc8] sm:$0xff]
      %v214 = vld [vmem:[%s192 + $0xe0] sm:$0xff]
      %v215 = vld [vmem:[%s192 + $0xe8] sm:$0xff]
      %v216 = vld [vmem:[%s1] sm:$0xf]
      %v217 = vld [vmem:[%s1 + $0x4] sm:$0xf]
      %v218 = vld [vmem:[%s1 + $0x8] sm:$0xf]
      %v219 = vld [vmem:[%s1 + $0xc] sm:$0xf]
      %v220 = vld [vmem:[%s1 + $0x10] sm:$0xf]
      %v221 = vld [vmem:[%s1 + $0x14] sm:$0xf]
      %v222 = vld [vmem:[%s1 + $0x18] sm:$0xf]
      %v223 = vld [vmem:[%s1 + $0x1c] sm:$0xf]
      %v224 = vld [vmem:[%s1 + $0x20] sm:$0xf]
      %v225 = vld [vmem:[%s1 + $0x24] sm:$0xf]
      %v226 = vld [vmem:[%s1 + $0x28] sm:$0xf]
      %v227 = vld [vmem:[%s1 + $0x2c] sm:$0xf]
      %v228 = vld [vmem:[%s1 + $0x30] sm:$0xf]
      %v229 = vld [vmem:[%s1 + $0x34] sm:$0xf]
      %v230 = vld [vmem:[%s1 + $0x38] sm:$0xf]
      %v231 = vld [vmem:[%s1 + $0x3c] sm:$0xf]
      %v232 = vld [vmem:[%s1 + $0x40] sm:$0xf]
      %v233 = vld [vmem:[%s1 + $0x44] sm:$0xf]
      %v234 = vld [vmem:[%s1 + $0x48] sm:$0xf]
      %v235 = vld [vmem:[%s1 + $0x4c] sm:$0xf]
      %v236 = vld [vmem:[%s1 + $0x50] sm:$0xf]
      %v237 = vld [vmem:[%s1 + $0x54] sm:$0xf]
      %v238 = vld [vmem:[%s1 + $0x58] sm:$0xf]
      %v239 = vld [vmem:[%s1 + $0x5c] sm:$0xf]
      %v240 = vld [vmem:[%s1 + $0x60] sm:$0xf]
      %v241 = vld [vmem:[%s1 + $0x64] sm:$0xf]
      %v242 = vld [vmem:[%s1 + $0x68] sm:$0xf]
      %v243 = vld [vmem:[%s1 + $0x6c] sm:$0xf]
      %v244 = vld [vmem:[%s1 + $0x70] sm:$0xf]
      %v245 = vld [vmem:[%s1 + $0x74] sm:$0xf]
      %v246 = vld [vmem:[%s1 + $0x78] sm:$0xf]
      %v247 = vld [vmem:[%s1 + $0x7c] sm:$0xf]
      %v248 = vld [vmem:[%s1 + $0x80] sm:$0xf]
      %v249 = vld [vmem:[%s1 + $0x84] sm:$0xf]
      %v250 = vld [vmem:[%s1 + $0x88] sm:$0xf]
      %v251 = vld [vmem:[%s1 + $0x8c] sm:$0xf]
      %v252 = vld [vmem:[%s1 + $0x90] sm:$0xf]
      %v253 = vld [vmem:[%s1 + $0x94] sm:$0xf]
      %v254 = vld [vmem:[%s1 + $0x98] sm:$0xf]
      %v255 = vld [vmem:[%s1 + $0x9c] sm:$0xf]
      %v256 = vld [vmem:[%s1 + $0xa0] sm:$0xf]
      %v257 = vld [vmem:[%s1 + $0xa4] sm:$0xf]
      %v258 = vld [vmem:[%s1 + $0xa8] sm:$0xf]
      %v259 = vld [vmem:[%s1 + $0xac] sm:$0xf]
      %v260 = vld [vmem:[%s1 + $0xb0] sm:$0xf]
      %v261 = vld [vmem:[%s1 + $0xb4] sm:$0xf]
      %v262 = vld [vmem:[%s1 + $0xb8] sm:$0xf]
      %v263 = vld [vmem:[%s1 + $0xbc] sm:$0xf]
      %v264 = vld [vmem:[%s1 + $0xc0] sm:$0xf]
      %v265 = vld [vmem:[%s1 + $0xc4] sm:$0xf]
      %v266 = vld [vmem:[%s1 + $0xc8] sm:$0xf]
      %v267 = vld [vmem:[%s1 + $0xcc] sm:$0xf]
      %v268 = vld [vmem:[%s1 + $0xd0] sm:$0xf]
      %v269 = vld [vmem:[%s1 + $0xd4] sm:$0xf]
      %v270 = vld [vmem:[%s1 + $0xd8] sm:$0xf]
      %v271 = vld [vmem:[%s1 + $0xdc] sm:$0xf]
      %v272 = vld [vmem:[%s1 + $0xe0] sm:$0xf]
      %v273 = vld [vmem:[%s1 + $0xe4] sm:$0xf]
      %v274 = vld [vmem:[%s1 + $0xe8] sm:$0xf]
      %v275 = vld [vmem:[%s1 + $0xec] sm:$0xf]
      %v276 = vld [vmem:[%s1 + $0xf0] sm:$0xf]
      %v277 = vld [vmem:[%s1 + $0xf4] sm:$0xf]
      %v278 = vld [vmem:[%s1 + $0xf8] sm:$0xf]
      %v279 = vld [vmem:[%s1 + $0xfc] sm:$0xf]
      %v280 = vld [vmem:[%s192 + $0x10] sm:$0x11]
      %v281 = vld [vmem:[%s192 + $0x18] sm:$0x11]
      %v282 = vld [vmem:[%s192 + $0x30] sm:$0x11]
      %v283 = vld [vmem:[%s192 + $0x38] sm:$0x11]
      %v284 = vld [vmem:[%s192 + $0x50] sm:$0x11]
      %v285 = vld [vmem:[%s192 + $0x58] sm:$0x11]
      %v286 = vld [vmem:[%s192 + $0x70] sm:$0x11]
      %v287 = vld [vmem:[%s192 + $0x78] sm:$0x11]
      %v288 = vld [vmem:[%s192 + $0x90] sm:$0x11]
      %v289 = vld [vmem:[%s192 + $0x98] sm:$0x11]
      %v290 = vld [vmem:[%s192 + $0xb0] sm:$0x11]
      %v291 = vld [vmem:[%s192 + $0xb8] sm:$0x11]
      %v292 = vld [vmem:[%s192 + $0xd0] sm:$0x11]
      %v293 = vld [vmem:[%s192 + $0xd8] sm:$0x11]
      %v294 = vld [vmem:[%s192 + $0xf0] sm:$0x11]
      %v295 = vld [vmem:[%s192 + $0xf8] sm:$0x11]
      %vm296 = vsmask.f32 3328
      %vm297 = vsmask.f32 7440
      %vm298 = vmor %vm296, %vm297
      %v300 = vshrl.u32 %v200, 16
      %v302 = vrot.slane %v300, 4
      %v303 = vshll.u32 %v200, 16
      %v305 = vrot.slane %v303, 5
      %v306 = vor.u32 %v302, %v305
      %v307 = vrot.slane %v306, 4
      %v309 = vshll.u32 %v280, 16
      %v311 = vrot.slane %v309, 5
      %v312 = vsel %vm298, %v307, %v311
      %v314 = vshrl.u32 %v201, 16
      %v316 = vrot.slane %v314, 4
      %v317 = vshll.u32 %v201, 16
      %v319 = vrot.slane %v317, 5
      %v320 = vor.u32 %v316, %v319
      %v321 = vrot.slane %v320, 4
      %v323 = vshll.u32 %v281, 16
      %v325 = vrot.slane %v323, 5
      %v326 = vsel %vm298, %v321, %v325
      %v328 = vshrl.u32 %v202, 16
      %v330 = vrot.slane %v328, 4
      %v331 = vshll.u32 %v202, 16
      %v333 = vrot.slane %v331, 5
      %v334 = vor.u32 %v330, %v333
      %v335 = vrot.slane %v334, 4
      %v337 = vshll.u32 %v282, 16
      %v339 = vrot.slane %v337, 5
      %v340 = vsel %vm298, %v335, %v339
      %v342 = vshrl.u32 %v203, 16
      %v344 = vrot.slane %v342, 4
      %v345 = vshll.u32 %v203, 16
      %v347 = vrot.slane %v345, 5
      %v348 = vor.u32 %v344, %v347
      %v349 = vrot.slane %v348, 4
      %v351 = vshll.u32 %v283, 16
      %v353 = vrot.slane %v351, 5
      %v354 = vsel %vm298, %v349, %v353
      %v356 = vshrl.u32 %v204, 16
      %v358 = vrot.slane %v356, 4
      %v359 = vshll.u32 %v204, 16
      %v361 = vrot.slane %v359, 5
      %v362 = vor.u32 %v358, %v361
      %v363 = vrot.slane %v362, 4
      %v365 = vshll.u32 %v284, 16
      %v367 = vrot.slane %v365, 5
      %v368 = vsel %vm298, %v363, %v367
      %v370 = vshrl.u32 %v205, 16
      %v372 = vrot.slane %v370, 4
      %v373 = vshll.u32 %v205, 16
      %v375 = vrot.slane %v373, 5
      %v376 = vor.u32 %v372, %v375
      %v377 = vrot.slane %v376, 4
      %v379 = vshll.u32 %v285, 16
      %v381 = vrot.slane %v379, 5
      %v382 = vsel %vm298, %v377, %v381
      %v384 = vshrl.u32 %v206, 16
      %v386 = vrot.slane %v384, 4
      %v387 = vshll.u32 %v206, 16
      %v389 = vrot.slane %v387, 5
      %v390 = vor.u32 %v386, %v389
      %v391 = vrot.slane %v390, 4
      %v393 = vshll.u32 %v286, 16
      %v395 = vrot.slane %v393, 5
      %v396 = vsel %vm298, %v391, %v395
      %v398 = vshrl.u32 %v207, 16
      %v400 = vrot.slane %v398, 4
      %v401 = vshll.u32 %v207, 16
      %v403 = vrot.slane %v401, 5
      %v404 = vor.u32 %v400, %v403
      %v405 = vrot.slane %v404, 4
      %v407 = vshll.u32 %v287, 16
      %v409 = vrot.slane %v407, 5
      %v410 = vsel %vm298, %v405, %v409
      %v412 = vshrl.u32 %v208, 16
      %v414 = vrot.slane %v412, 4
      %v415 = vshll.u32 %v208, 16
      %v417 = vrot.slane %v415, 5
      %v418 = vor.u32 %v414, %v417
      %v419 = vrot.slane %v418, 4
      %v421 = vshll.u32 %v288, 16
      %v423 = vrot.slane %v421, 5
      %v424 = vsel %vm298, %v419, %v423
      %v426 = vshrl.u32 %v209, 16
      %v428 = vrot.slane %v426, 4
      %v429 = vshll.u32 %v209, 16
      %v431 = vrot.slane %v429, 5
      %v432 = vor.u32 %v428, %v431
      %v433 = vrot.slane %v432, 4
      %v435 = vshll.u32 %v289, 16
      %v437 = vrot.slane %v435, 5
      %v438 = vsel %vm298, %v433, %v437
      %v440 = vshrl.u32 %v210, 16
      %v442 = vrot.slane %v440, 4
      %v443 = vshll.u32 %v210, 16
      %v445 = vrot.slane %v443, 5
      %v446 = vor.u32 %v442, %v445
      %v447 = vrot.slane %v446, 4
      %v449 = vshll.u32 %v290, 16
      %v451 = vrot.slane %v449, 5
      %v452 = vsel %vm298, %v447, %v451
      %v454 = vshrl.u32 %v211, 16
      %v456 = vrot.slane %v454, 4
      %v457 = vshll.u32 %v211, 16
      %v459 = vrot.slane %v457, 5
      %v460 = vor.u32 %v456, %v459
      %v461 = vrot.slane %v460, 4
      %v463 = vshll.u32 %v291, 16
      %v465 = vrot.slane %v463, 5
      %v466 = vsel %vm298, %v461, %v465
      %v468 = vshrl.u32 %v212, 16
      %v470 = vrot.slane %v468, 4
      %v471 = vshll.u32 %v212, 16
      %v473 = vrot.slane %v471, 5
      %v474 = vor.u32 %v470, %v473
      %v475 = vrot.slane %v474, 4
      %v477 = vshll.u32 %v292, 16
      %v479 = vrot.slane %v477, 5
      %v480 = vsel %vm298, %v475, %v479
      %v482 = vshrl.u32 %v213, 16
      %v484 = vrot.slane %v482, 4
      %v485 = vshll.u32 %v213, 16
      %v487 = vrot.slane %v485, 5
      %v488 = vor.u32 %v484, %v487
      %v489 = vrot.slane %v488, 4
      %v491 = vshll.u32 %v293, 16
      %v493 = vrot.slane %v491, 5
      %v494 = vsel %vm298, %v489, %v493
      %v496 = vshrl.u32 %v214, 16
      %v498 = vrot.slane %v496, 4
      %v499 = vshll.u32 %v214, 16
      %v501 = vrot.slane %v499, 5
      %v502 = vor.u32 %v498, %v501
      %v503 = vrot.slane %v502, 4
      %v505 = vshll.u32 %v294, 16
      %v507 = vrot.slane %v505, 5
      %v508 = vsel %vm298, %v503, %v507
      %v510 = vshrl.u32 %v215, 16
      %v512 = vrot.slane %v510, 4
      %v513 = vshll.u32 %v215, 16
      %v515 = vrot.slane %v513, 5
      %v516 = vor.u32 %v512, %v515
      %v517 = vrot.slane %v516, 4
      %v519 = vshll.u32 %v295, 16
      %v521 = vrot.slane %v519, 5
      %v522 = vsel %vm298, %v517, %v521
      %s523 = scalar_lea.vmem %s1, 256
      %v524 = vld [vmem:[%s523] sm:$0xf]
      %v525 = vld [vmem:[%s523 + $0x4] sm:$0xf]
      %v526 = vld [vmem:[%s523 + $0x8] sm:$0xf]
      %v527 = vld [vmem:[%s523 + $0xc] sm:$0xf]
      %v528 = vld [vmem:[%s523 + $0x10] sm:$0xf]
      %v529 = vld [vmem:[%s523 + $0x14] sm:$0xf]
      %v530 = vld [vmem:[%s523 + $0x18] sm:$0xf]
      %v531 = vld [vmem:[%s523 + $0x1c] sm:$0xf]
      %v532 = vld [vmem:[%s523 + $0x20] sm:$0xf]
      %v533 = vld [vmem:[%s523 + $0x24] sm:$0xf]
      %v534 = vld [vmem:[%s523 + $0x28] sm:$0xf]
      %v535 = vld [vmem:[%s523 + $0x2c] sm:$0xf]
      %v536 = vld [vmem:[%s523 + $0x30] sm:$0xf]
      %v537 = vld [vmem:[%s523 + $0x34] sm:$0xf]
      %v538 = vld [vmem:[%s523 + $0x38] sm:$0xf]
      %v539 = vld [vmem:[%s523 + $0x3c] sm:$0xf]
      %v540 = vld [vmem:[%s523 + $0x40] sm:$0xf]
      %v541 = vld [vmem:[%s523 + $0x44] sm:$0xf]
      %v542 = vld [vmem:[%s523 + $0x48] sm:$0xf]
      %v543 = vld [vmem:[%s523 + $0x4c] sm:$0xf]
      %v544 = vld [vmem:[%s523 + $0x50] sm:$0xf]
      %v545 = vld [vmem:[%s523 + $0x54] sm:$0xf]
      %v546 = vld [vmem:[%s523 + $0x58] sm:$0xf]
      %v547 = vld [vmem:[%s523 + $0x5c] sm:$0xf]
      %v548 = vld [vmem:[%s523 + $0x60] sm:$0xf]
      %v549 = vld [vmem:[%s523 + $0x64] sm:$0xf]
      %v550 = vld [vmem:[%s523 + $0x68] sm:$0xf]
      %v551 = vld [vmem:[%s523 + $0x6c] sm:$0xf]
      %v552 = vld [vmem:[%s523 + $0x70] sm:$0xf]
      %v553 = vld [vmem:[%s523 + $0x74] sm:$0xf]
      %v554 = vld [vmem:[%s523 + $0x78] sm:$0xf]
      %v555 = vld [vmem:[%s523 + $0x7c] sm:$0xf]
      %v556 = vld [vmem:[%s523 + $0x80] sm:$0xf]
      %v557 = vld [vmem:[%s523 + $0x84] sm:$0xf]
      %v558 = vld [vmem:[%s523 + $0x88] sm:$0xf]
      %v559 = vld [vmem:[%s523 + $0x8c] sm:$0xf]
      %v560 = vld [vmem:[%s523 + $0x90] sm:$0xf]
      %v561 = vld [vmem:[%s523 + $0x94] sm:$0xf]
      %v562 = vld [vmem:[%s523 + $0x98] sm:$0xf]
      %v563 = vld [vmem:[%s523 + $0x9c] sm:$0xf]
      %v564 = vld [vmem:[%s523 + $0xa0] sm:$0xf]
      %v565 = vld [vmem:[%s523 + $0xa4] sm:$0xf]
      %v566 = vld [vmem:[%s523 + $0xa8] sm:$0xf]
      %v567 = vld [vmem:[%s523 + $0xac] sm:$0xf]
      %v568 = vld [vmem:[%s523 + $0xb0] sm:$0xf]
      %v569 = vld [vmem:[%s523 + $0xb4] sm:$0xf]
      %v570 = vld [vmem:[%s523 + $0xb8] sm:$0xf]
      %v571 = vld [vmem:[%s523 + $0xbc] sm:$0xf]
      %v572 = vld [vmem:[%s523 + $0xc0] sm:$0xf]
      %v573 = vld [vmem:[%s523 + $0xc4] sm:$0xf]
      %v574 = vld [vmem:[%s523 + $0xc8] sm:$0xf]
      %v575 = vld [vmem:[%s523 + $0xcc] sm:$0xf]
      %v576 = vld [vmem:[%s523 + $0xd0] sm:$0xf]
      %v577 = vld [vmem:[%s523 + $0xd4] sm:$0xf]
      %v578 = vld [vmem:[%s523 + $0xd8] sm:$0xf]
      %v579 = vld [vmem:[%s523 + $0xdc] sm:$0xf]
      %v580 = vld [vmem:[%s523 + $0xe0] sm:$0xf]
      %v581 = vld [vmem:[%s523 + $0xe4] sm:$0xf]
      %v582 = vld [vmem:[%s523 + $0xe8] sm:$0xf]
      %v583 = vld [vmem:[%s523 + $0xec] sm:$0xf]
      %v584 = vld [vmem:[%s523 + $0xf0] sm:$0xf]
      %v585 = vld [vmem:[%s523 + $0xf4] sm:$0xf]
      %v586 = vld [vmem:[%s523 + $0xf8] sm:$0xf]
      %v587 = vld [vmem:[%s523 + $0xfc] sm:$0xf]
      %v588 = vunpack.c.l.b16 %v312
      %v589 = vunpack.c.h.b16 %v312
      %v590 = vunpack.c.l.b16 %v326
      %v591 = vunpack.c.h.b16 %v326
      %v592 = vunpack.c.l.b16 %v340
      %v593 = vunpack.c.h.b16 %v340
      %v594 = vunpack.c.l.b16 %v354
      %v595 = vunpack.c.h.b16 %v354
      %v596 = vunpack.c.l.b16 %v368
      %v597 = vunpack.c.h.b16 %v368
      %v598 = vunpack.c.l.b16 %v382
      %v599 = vunpack.c.h.b16 %v382
      %v600 = vunpack.c.l.b16 %v396
      %v601 = vunpack.c.h.b16 %v396
      %v602 = vunpack.c.l.b16 %v410
      %v603 = vunpack.c.h.b16 %v410
      %v604 = vunpack.c.l.b16 %v424
      %v605 = vunpack.c.h.b16 %v424
      %v606 = vunpack.c.l.b16 %v438
      %v607 = vunpack.c.h.b16 %v438
      %v608 = vunpack.c.l.b16 %v452
      %v609 = vunpack.c.h.b16 %v452
      %v610 = vunpack.c.l.b16 %v466
      %v611 = vunpack.c.h.b16 %v466
      %v612 = vunpack.c.l.b16 %v480
      %v613 = vunpack.c.h.b16 %v480
      %v614 = vunpack.c.l.b16 %v494
      %v615 = vunpack.c.h.b16 %v494
      %v616 = vunpack.c.l.b16 %v508
      %v617 = vunpack.c.h.b16 %v508
      %v618 = vunpack.c.l.b16 %v522
      %v619 = vunpack.c.h.b16 %v522
      %v620 = vpack.c.b16 %v592, %v588
      %v621 = vpack.c.b16 %v593, %v589
      %v622 = vpack.c.b16 %v594, %v590
      %v623 = vpack.c.b16 %v595, %v591
      %v624 = vpack.c.b16 %v600, %v596
      %v625 = vpack.c.b16 %v601, %v597
      %v626 = vpack.c.b16 %v602, %v598
      %v627 = vpack.c.b16 %v603, %v599
      %v628 = vpack.c.b16 %v608, %v604
      %v629 = vpack.c.b16 %v609, %v605
      %v630 = vpack.c.b16 %v610, %v606
      %v631 = vpack.c.b16 %v611, %v607
      %v632 = vpack.c.b16 %v616, %v612
      %v633 = vpack.c.b16 %v617, %v613
      %v634 = vpack.c.b16 %v618, %v614
      %v635 = vpack.c.b16 %v619, %v615
      %v716 = vunpack.c.l.b16 %v524
      %v717 = vunpack.c.l.b16 %v525
      %v718 = vunpack.c.l.b16 %v526
      %v719 = vunpack.c.l.b16 %v527
      %v720 = vunpack.c.l.b16 %v528
      %v721 = vunpack.c.l.b16 %v529
      %v722 = vunpack.c.l.b16 %v530
      %v723 = vunpack.c.l.b16 %v531
      %v724 = vunpack.c.l.b16 %v532
      %v725 = vunpack.c.l.b16 %v533
      %v726 = vunpack.c.l.b16 %v534
      %v727 = vunpack.c.l.b16 %v535
      %v728 = vunpack.c.l.b16 %v536
      %v729 = vunpack.c.l.b16 %v537
      %v730 = vunpack.c.l.b16 %v538
      %v731 = vunpack.c.l.b16 %v539
      %v732 = vunpack.c.l.b16 %v540
      %v733 = vunpack.c.l.b16 %v541
      %v734 = vunpack.c.l.b16 %v542
      %v735 = vunpack.c.l.b16 %v543
      %v736 = vunpack.c.l.b16 %v544
      %v737 = vunpack.c.l.b16 %v545
      %v738 = vunpack.c.l.b16 %v546
      %v739 = vunpack.c.l.b16 %v547
      %v740 = vunpack.c.l.b16 %v548
      %v741 = vunpack.c.l.b16 %v549
      %v742 = vunpack.c.l.b16 %v550
      %v743 = vunpack.c.l.b16 %v551
      %v744 = vunpack.c.l.b16 %v552
      %v745 = vunpack.c.l.b16 %v553
      %v746 = vunpack.c.l.b16 %v554
      %v747 = vunpack.c.l.b16 %v555
      %v748 = vunpack.c.l.b16 %v556
      %v749 = vunpack.c.l.b16 %v557
      %v750 = vunpack.c.l.b16 %v558
      %v751 = vunpack.c.l.b16 %v559
      %v752 = vunpack.c.l.b16 %v560
      %v753 = vunpack.c.l.b16 %v561
      %v754 = vunpack.c.l.b16 %v562
      %v755 = vunpack.c.l.b16 %v563
      %v756 = vunpack.c.l.b16 %v564
      %v757 = vunpack.c.l.b16 %v565
      %v758 = vunpack.c.l.b16 %v566
      %v759 = vunpack.c.l.b16 %v567
      %v760 = vunpack.c.l.b16 %v568
      %v761 = vunpack.c.l.b16 %v569
      %v762 = vunpack.c.l.b16 %v570
      %v763 = vunpack.c.l.b16 %v571
      %v764 = vunpack.c.l.b16 %v572
      %v765 = vunpack.c.l.b16 %v573
      %v766 = vunpack.c.l.b16 %v574
      %v767 = vunpack.c.l.b16 %v575
      %v768 = vunpack.c.l.b16 %v576
      %v769 = vunpack.c.l.b16 %v577
      %v770 = vunpack.c.l.b16 %v578
      %v771 = vunpack.c.l.b16 %v579
      %v772 = vunpack.c.l.b16 %v580
      %v773 = vunpack.c.l.b16 %v581
      %v774 = vunpack.c.l.b16 %v582
      %v775 = vunpack.c.l.b16 %v583
      %v776 = vunpack.c.l.b16 %v584
      %v777 = vunpack.c.l.b16 %v585
      %v778 = vunpack.c.l.b16 %v586
      %v779 = vunpack.c.l.b16 %v587
      %v780 = vpack.c.b16 %v717, %v716
      %v781 = vpack.c.b16 %v719, %v718
      %v782 = vpack.c.b16 %v721, %v720
      %v783 = vpack.c.b16 %v723, %v722
      %v784 = vpack.c.b16 %v725, %v724
      %v785 = vpack.c.b16 %v727, %v726
      %v786 = vpack.c.b16 %v729, %v728
      %v787 = vpack.c.b16 %v731, %v730
      %v788 = vpack.c.b16 %v733, %v732
      %v789 = vpack.c.b16 %v735, %v734
      %v790 = vpack.c.b16 %v737, %v736
      %v791 = vpack.c.b16 %v739, %v738
      %v792 = vpack.c.b16 %v741, %v740
      %v793 = vpack.c.b16 %v743, %v742
      %v794 = vpack.c.b16 %v745, %v744
      %v795 = vpack.c.b16 %v747, %v746
      %v796 = vpack.c.b16 %v749, %v748
      %v797 = vpack.c.b16 %v751, %v750
      %v798 = vpack.c.b16 %v753, %v752
      %v799 = vpack.c.b16 %v755, %v754
      %v800 = vpack.c.b16 %v757, %v756
      %v801 = vpack.c.b16 %v759, %v758
      %v802 = vpack.c.b16 %v761, %v760
      %v803 = vpack.c.b16 %v763, %v762
      %v804 = vpack.c.b16 %v765, %v764
      %v805 = vpack.c.b16 %v767, %v766
      %v806 = vpack.c.b16 %v769, %v768
      %v807 = vpack.c.b16 %v771, %v770
      %v808 = vpack.c.b16 %v773, %v772
      %v809 = vpack.c.b16 %v775, %v774
      %v810 = vpack.c.b16 %v777, %v776
      %v811 = vpack.c.b16 %v779, %v778
      %844 = vmatprep.subr.bf16.mxu0 0
      %845 = vmatpush1.bf16.msra.mxu0 %v787
      %846 = vmatprep.subr.bf16.mxu0 0
      %847 = vmatpush1.bf16.msra.mxu0 %v786
      %848 = vmatprep.subr.bf16.mxu0 0
      %849 = vmatpush1.bf16.msra.mxu0 %v785
      %850 = vmatprep.subr.bf16.mxu0 0
      %851 = vmatpush1.bf16.msra.mxu0 %v784
      %852 = vmatprep.subr.bf16.mxu0 0
      %853 = vmatpush1.bf16.msra.mxu0 %v783
      %854 = vmatprep.subr.bf16.mxu0 0
      %855 = vmatpush1.bf16.msra.mxu0 %v782
      %856 = vmatprep.subr.bf16.mxu0 0
      %857 = vmatpush1.bf16.msra.mxu0 %v781
      %858 = vmatprep.subr.bf16.mxu0 0
      %859 = vmatpush1.bf16.msra.mxu0 %v780
      %860 = vmatprep.subr.bf16.mxu0 0
      %861 = vmatpush2.bf16.msra.mxu0 %v795
      %862 = vmatprep.subr.bf16.mxu0 0
      %863 = vmatpush2.bf16.msra.mxu0 %v794
      %864 = vmatprep.subr.bf16.mxu0 0
      %865 = vmatpush2.bf16.msra.mxu0 %v793
      %866 = vmatprep.subr.bf16.mxu0 0
      %867 = vmatpush2.bf16.msra.mxu0 %v792
      %868 = vmatprep.subr.bf16.mxu0 0
      %869 = vmatpush2.bf16.msra.mxu0 %v791
      %870 = vmatprep.subr.bf16.mxu0 0
      %871 = vmatpush2.bf16.msra.mxu0 %v790
      %872 = vmatprep.subr.bf16.mxu0 0
      %873 = vmatpush2.bf16.msra.mxu0 %v789
      %874 = vmatprep.subr.bf16.mxu0 0
      %875 = vmatpush2.bf16.msra.mxu0 %v788
      %876 = vmatprep.mubr.bf16.mxu0 %v621
      %877 = vmatmul.mubr.bf16.gmra.mxu0 %v620
      %v878 = vpop.f32.mrf.mxu0
      %v879 = vadd.f32 0.0, %v878
      %v880 = vpop.f32.mrf.mxu0
      %v881 = vpop.f32.mrf.mxu0
      %v882 = vadd.f32 0.0, %v881
      %v883 = vpop.f32.mrf.mxu0
      %884 = vmatprep.mubr.bf16.mxu0 %v625
      %885 = vmatmul.mubr.bf16.gmra.mxu0 %v624
      %v886 = vpop.f32.mrf.mxu0
      %v887 = vadd.f32 0.0, %v886
      %v888 = vpop.f32.mrf.mxu0
      %v889 = vpop.f32.mrf.mxu0
      %v890 = vadd.f32 0.0, %v889
      %v891 = vpop.f32.mrf.mxu0
      %892 = vmatprep.mubr.bf16.mxu0 %v629
      %893 = vmatmul.mubr.bf16.gmra.mxu0 %v628
      %v894 = vpop.f32.mrf.mxu0
      %v895 = vadd.f32 0.0, %v894
      %v896 = vpop.f32.mrf.mxu0
      %v897 = vpop.f32.mrf.mxu0
      %v898 = vadd.f32 0.0, %v897
      %v899 = vpop.f32.mrf.mxu0
      %900 = vmatprep.mubr.bf16.mxu0 %v633
      %901 = vmatmul.mubr.bf16.gmra.mxu0 %v632
      %v902 = vpop.f32.mrf.mxu0
      %v903 = vadd.f32 0.0, %v902
      %v904 = vpop.f32.mrf.mxu0
      %v905 = vpop.f32.mrf.mxu0
      %v906 = vadd.f32 0.0, %v905
      %v907 = vpop.f32.mrf.mxu0
      %908 = vdwg.mxu0
      %909 = vmatprep.subr.bf16.mxu0 0
      %910 = vmatpush1.bf16.msra.mxu0 %v803
      %911 = vmatprep.subr.bf16.mxu0 0
      %912 = vmatpush1.bf16.msra.mxu0 %v802
      %913 = vmatprep.subr.bf16.mxu0 0
      %914 = vmatpush1.bf16.msra.mxu0 %v801
      %915 = vmatprep.subr.bf16.mxu0 0
      %916 = vmatpush1.bf16.msra.mxu0 %v800
      %917 = vmatprep.subr.bf16.mxu0 0
      %918 = vmatpush1.bf16.msra.mxu0 %v799
      %919 = vmatprep.subr.bf16.mxu0 0
      %920 = vmatpush1.bf16.msra.mxu0 %v798
      %921 = vmatprep.subr.bf16.mxu0 0
      %922 = vmatpush1.bf16.msra.mxu0 %v797
      %923 = vmatprep.subr.bf16.mxu0 0
      %924 = vmatpush1.bf16.msra.mxu0 %v796
      %925 = vmatprep.subr.bf16.mxu0 0
      %926 = vmatpush2.bf16.msra.mxu0 %v811
      %927 = vmatprep.subr.bf16.mxu0 0
      %928 = vmatpush2.bf16.msra.mxu0 %v810
      %929 = vmatprep.subr.bf16.mxu0 0
      %930 = vmatpush2.bf16.msra.mxu0 %v809
      %931 = vmatprep.subr.bf16.mxu0 0
      %932 = vmatpush2.bf16.msra.mxu0 %v808
      %933 = vmatprep.subr.bf16.mxu0 0
      %934 = vmatpush2.bf16.msra.mxu0 %v807
      %935 = vmatprep.subr.bf16.mxu0 0
      %936 = vmatpush2.bf16.msra.mxu0 %v806
      %937 = vmatprep.subr.bf16.mxu0 0
      %938 = vmatpush2.bf16.msra.mxu0 %v805
      %939 = vmatprep.subr.bf16.mxu0 0
      %940 = vmatpush2.bf16.msra.mxu0 %v804
      %941 = vmatprep.mubr.bf16.mxu0 %v623
      %942 = vmatmul.mubr.bf16.gmra.mxu0 %v622
      %v943 = vpop.f32.mrf.mxu0
      %v944 = vadd.f32 %v879, %v943
      %v945 = vpop.f32.mrf.mxu0
      %v946 = vpop.f32.mrf.mxu0
      %v947 = vadd.f32 %v882, %v946
      %v948 = vpop.f32.mrf.mxu0
      %949 = vmatprep.mubr.bf16.mxu0 %v627
      %950 = vmatmul.mubr.bf16.gmra.mxu0 %v626
      %v951 = vpop.f32.mrf.mxu0
      %v952 = vadd.f32 %v887, %v951
      %v953 = vpop.f32.mrf.mxu0
      %v954 = vpop.f32.mrf.mxu0
      %v955 = vadd.f32 %v890, %v954
      %v956 = vpop.f32.mrf.mxu0
      %957 = vmatprep.mubr.bf16.mxu0 %v631
      %958 = vmatmul.mubr.bf16.gmra.mxu0 %v630
      %v959 = vpop.f32.mrf.mxu0
      %v960 = vadd.f32 %v895, %v959
      %v961 = vpop.f32.mrf.mxu0
      %v962 = vpop.f32.mrf.mxu0
      %v963 = vadd.f32 %v898, %v962
      %v964 = vpop.f32.mrf.mxu0
      %965 = vmatprep.mubr.bf16.mxu0 %v635
      %966 = vmatmul.mubr.bf16.gmra.mxu0 %v634
      %v967 = vpop.f32.mrf.mxu0
      %v968 = vadd.f32 %v903, %v967
      %v969 = vpop.f32.mrf.mxu0
      %v970 = vpop.f32.mrf.mxu0
      %v971 = vadd.f32 %v906, %v970
      %v972 = vpop.f32.mrf.mxu0
      %973 = vdwg.mxu0
      %v990 = vunpack.c.l.b16 %v200
      %v991 = vunpack.c.h.b16 %v200
      %v992 = vunpack.c.l.b16 %v201
      %v993 = vunpack.c.h.b16 %v201
      %v994 = vunpack.c.l.b16 %v202
      %v995 = vunpack.c.h.b16 %v202
      %v996 = vunpack.c.l.b16 %v203
      %v997 = vunpack.c.h.b16 %v203
      %v998 = vunpack.c.l.b16 %v204
      %v999 = vunpack.c.h.b16 %v204
      %v1000 = vunpack.c.l.b16 %v205
      %v1001 = vunpack.c.h.b16 %v205
      %v1002 = vunpack.c.l.b16 %v206
      %v1003 = vunpack.c.h.b16 %v206
      %v1004 = vunpack.c.l.b16 %v207
      %v1005 = vunpack.c.h.b16 %v207
      %v1006 = vunpack.c.l.b16 %v208
      %v1007 = vunpack.c.h.b16 %v208
      %v1008 = vunpack.c.l.b16 %v209
      %v1009 = vunpack.c.h.b16 %v209
      %v1010 = vunpack.c.l.b16 %v210
      %v1011 = vunpack.c.h.b16 %v210
      %v1012 = vunpack.c.l.b16 %v211
      %v1013 = vunpack.c.h.b16 %v211
      %v1014 = vunpack.c.l.b16 %v212
      %v1015 = vunpack.c.h.b16 %v212
      %v1016 = vunpack.c.l.b16 %v213
      %v1017 = vunpack.c.h.b16 %v213
      %v1018 = vunpack.c.l.b16 %v214
      %v1019 = vunpack.c.h.b16 %v214
      %v1020 = vunpack.c.l.b16 %v215
      %v1021 = vunpack.c.h.b16 %v215
      %v1022 = vpack.c.b16 %v994, %v990
      %v1023 = vpack.c.b16 %v995, %v991
      %v1024 = vpack.c.b16 %v996, %v992
      %v1025 = vpack.c.b16 %v997, %v993
      %v1026 = vpack.c.b16 %v1002, %v998
      %v1027 = vpack.c.b16 %v1003, %v999
      %v1028 = vpack.c.b16 %v1004, %v1000
      %v1029 = vpack.c.b16 %v1005, %v1001
      %v1030 = vpack.c.b16 %v1010, %v1006
      %v1031 = vpack.c.b16 %v1011, %v1007
      %v1032 = vpack.c.b16 %v1012, %v1008
      %v1033 = vpack.c.b16 %v1013, %v1009
      %v1034 = vpack.c.b16 %v1018, %v1014
      %v1035 = vpack.c.b16 %v1019, %v1015
      %v1036 = vpack.c.b16 %v1020, %v1016
      %v1037 = vpack.c.b16 %v1021, %v1017
      %v1118 = vunpack.c.l.b16 %v216
      %v1119 = vunpack.c.l.b16 %v217
      %v1120 = vunpack.c.l.b16 %v218
      %v1121 = vunpack.c.l.b16 %v219
      %v1122 = vunpack.c.l.b16 %v220
      %v1123 = vunpack.c.l.b16 %v221
      %v1124 = vunpack.c.l.b16 %v222
      %v1125 = vunpack.c.l.b16 %v223
      %v1126 = vunpack.c.l.b16 %v224
      %v1127 = vunpack.c.l.b16 %v225
      %v1128 = vunpack.c.l.b16 %v226
      %v1129 = vunpack.c.l.b16 %v227
      %v1130 = vunpack.c.l.b16 %v228
      %v1131 = vunpack.c.l.b16 %v229
      %v1132 = vunpack.c.l.b16 %v230
      %v1133 = vunpack.c.l.b16 %v231
      %v1134 = vunpack.c.l.b16 %v232
      %v1135 = vunpack.c.l.b16 %v233
      %v1136 = vunpack.c.l.b16 %v234
      %v1137 = vunpack.c.l.b16 %v235
      %v1138 = vunpack.c.l.b16 %v236
      %v1139 = vunpack.c.l.b16 %v237
      %v1140 = vunpack.c.l.b16 %v238
      %v1141 = vunpack.c.l.b16 %v239
      %v1142 = vunpack.c.l.b16 %v240
      %v1143 = vunpack.c.l.b16 %v241
      %v1144 = vunpack.c.l.b16 %v242
      %v1145 = vunpack.c.l.b16 %v243
      %v1146 = vunpack.c.l.b16 %v244
      %v1147 = vunpack.c.l.b16 %v245
      %v1148 = vunpack.c.l.b16 %v246
      %v1149 = vunpack.c.l.b16 %v247
      %v1150 = vunpack.c.l.b16 %v248
      %v1151 = vunpack.c.l.b16 %v249
      %v1152 = vunpack.c.l.b16 %v250
      %v1153 = vunpack.c.l.b16 %v251
      %v1154 = vunpack.c.l.b16 %v252
      %v1155 = vunpack.c.l.b16 %v253
      %v1156 = vunpack.c.l.b16 %v254
      %v1157 = vunpack.c.l.b16 %v255
      %v1158 = vunpack.c.l.b16 %v256
      %v1159 = vunpack.c.l.b16 %v257
      %v1160 = vunpack.c.l.b16 %v258
      %v1161 = vunpack.c.l.b16 %v259
      %v1162 = vunpack.c.l.b16 %v260
      %v1163 = vunpack.c.l.b16 %v261
      %v1164 = vunpack.c.l.b16 %v262
      %v1165 = vunpack.c.l.b16 %v263
      %v1166 = vunpack.c.l.b16 %v264
      %v1167 = vunpack.c.l.b16 %v265
      %v1168 = vunpack.c.l.b16 %v266
      %v1169 = vunpack.c.l.b16 %v267
      %v1170 = vunpack.c.l.b16 %v268
      %v1171 = vunpack.c.l.b16 %v269
      %v1172 = vunpack.c.l.b16 %v270
      %v1173 = vunpack.c.l.b16 %v271
      %v1174 = vunpack.c.l.b16 %v272
      %v1175 = vunpack.c.l.b16 %v273
      %v1176 = vunpack.c.l.b16 %v274
      %v1177 = vunpack.c.l.b16 %v275
      %v1178 = vunpack.c.l.b16 %v276
      %v1179 = vunpack.c.l.b16 %v277
      %v1180 = vunpack.c.l.b16 %v278
      %v1181 = vunpack.c.l.b16 %v279
      %v1182 = vpack.c.b16 %v1119, %v1118
      %v1183 = vpack.c.b16 %v1121, %v1120
      %v1184 = vpack.c.b16 %v1123, %v1122
      %v1185 = vpack.c.b16 %v1125, %v1124
      %v1186 = vpack.c.b16 %v1127, %v1126
      %v1187 = vpack.c.b16 %v1129, %v1128
      %v1188 = vpack.c.b16 %v1131, %v1130
      %v1189 = vpack.c.b16 %v1133, %v1132
      %v1190 = vpack.c.b16 %v1135, %v1134
      %v1191 = vpack.c.b16 %v1137, %v1136
      %v1192 = vpack.c.b16 %v1139, %v1138
      %v1193 = vpack.c.b16 %v1141, %v1140
      %v1194 = vpack.c.b16 %v1143, %v1142
      %v1195 = vpack.c.b16 %v1145, %v1144
      %v1196 = vpack.c.b16 %v1147, %v1146
      %v1197 = vpack.c.b16 %v1149, %v1148
      %v1198 = vpack.c.b16 %v1151, %v1150
      %v1199 = vpack.c.b16 %v1153, %v1152
      %v1200 = vpack.c.b16 %v1155, %v1154
      %v1201 = vpack.c.b16 %v1157, %v1156
      %v1202 = vpack.c.b16 %v1159, %v1158
      %v1203 = vpack.c.b16 %v1161, %v1160
      %v1204 = vpack.c.b16 %v1163, %v1162
      %v1205 = vpack.c.b16 %v1165, %v1164
      %v1206 = vpack.c.b16 %v1167, %v1166
      %v1207 = vpack.c.b16 %v1169, %v1168
      %v1208 = vpack.c.b16 %v1171, %v1170
      %v1209 = vpack.c.b16 %v1173, %v1172
      %v1210 = vpack.c.b16 %v1175, %v1174
      %v1211 = vpack.c.b16 %v1177, %v1176
      %v1212 = vpack.c.b16 %v1179, %v1178
      %v1213 = vpack.c.b16 %v1181, %v1180
      %1246 = vmatprep.subr.bf16.mxu0 0
      %1247 = vmatpush1.bf16.msra.mxu0 %v1189
      %1248 = vmatprep.subr.bf16.mxu0 0
      %1249 = vmatpush1.bf16.msra.mxu0 %v1188
      %1250 = vmatprep.subr.bf16.mxu0 0
      %1251 = vmatpush1.bf16.msra.mxu0 %v1187
      %1252 = vmatprep.subr.bf16.mxu0 0
      %1253 = vmatpush1.bf16.msra.mxu0 %v1186
      %1254 = vmatprep.subr.bf16.mxu0 0
      %1255 = vmatpush1.bf16.msra.mxu0 %v1185
      %1256 = vmatprep.subr.bf16.mxu0 0
      %1257 = vmatpush1.bf16.msra.mxu0 %v1184
      %1258 = vmatprep.subr.bf16.mxu0 0
      %1259 = vmatpush1.bf16.msra.mxu0 %v1183
      %1260 = vmatprep.subr.bf16.mxu0 0
      %1261 = vmatpush1.bf16.msra.mxu0 %v1182
      %1262 = vmatprep.subr.bf16.mxu0 0
      %1263 = vmatpush2.bf16.msra.mxu0 %v1197
      %1264 = vmatprep.subr.bf16.mxu0 0
      %1265 = vmatpush2.bf16.msra.mxu0 %v1196
      %1266 = vmatprep.subr.bf16.mxu0 0
      %1267 = vmatpush2.bf16.msra.mxu0 %v1195
      %1268 = vmatprep.subr.bf16.mxu0 0
      %1269 = vmatpush2.bf16.msra.mxu0 %v1194
      %1270 = vmatprep.subr.bf16.mxu0 0
      %1271 = vmatpush2.bf16.msra.mxu0 %v1193
      %1272 = vmatprep.subr.bf16.mxu0 0
      %1273 = vmatpush2.bf16.msra.mxu0 %v1192
      %1274 = vmatprep.subr.bf16.mxu0 0
      %1275 = vmatpush2.bf16.msra.mxu0 %v1191
      %1276 = vmatprep.subr.bf16.mxu0 0
      %1277 = vmatpush2.bf16.msra.mxu0 %v1190
      %1278 = vmatprep.mubr.bf16.mxu0 %v1023
      %1279 = vmatmul.mubr.bf16.gmra.mxu0 %v1022
      %v1280 = vpop.f32.mrf.mxu0
      %v1281 = vadd.f32 %v944, %v1280
      %v1282 = vpop.f32.mrf.mxu0
      %v1283 = vpop.f32.mrf.mxu0
      %v1284 = vadd.f32 %v947, %v1283
      %v1285 = vpop.f32.mrf.mxu0
      %1286 = vmatprep.mubr.bf16.mxu0 %v1027
      %1287 = vmatmul.mubr.bf16.gmra.mxu0 %v1026
      %v1288 = vpop.f32.mrf.mxu0
      %v1289 = vadd.f32 %v952, %v1288
      %v1290 = vpop.f32.mrf.mxu0
      %v1291 = vpop.f32.mrf.mxu0
      %v1292 = vadd.f32 %v955, %v1291
      %v1293 = vpop.f32.mrf.mxu0
      %1294 = vmatprep.mubr.bf16.mxu0 %v1031
      %1295 = vmatmul.mubr.bf16.gmra.mxu0 %v1030
      %v1296 = vpop.f32.mrf.mxu0
      %v1297 = vadd.f32 %v960, %v1296
      %v1298 = vpop.f32.mrf.mxu0
      %v1299 = vpop.f32.mrf.mxu0
      %v1300 = vadd.f32 %v963, %v1299
      %v1301 = vpop.f32.mrf.mxu0
      %1302 = vmatprep.mubr.bf16.mxu0 %v1035
      %1303 = vmatmul.mubr.bf16.gmra.mxu0 %v1034
      %v1304 = vpop.f32.mrf.mxu0
      %v1305 = vadd.f32 %v968, %v1304
      %v1306 = vpop.f32.mrf.mxu0
      %v1307 = vpop.f32.mrf.mxu0
      %v1308 = vadd.f32 %v971, %v1307
      %v1309 = vpop.f32.mrf.mxu0
      %1310 = vdwg.mxu0
      %1311 = vmatprep.subr.bf16.mxu0 0
      %1312 = vmatpush1.bf16.msra.mxu0 %v1205
      %1313 = vmatprep.subr.bf16.mxu0 0
      %1314 = vmatpush1.bf16.msra.mxu0 %v1204
      %1315 = vmatprep.subr.bf16.mxu0 0
      %1316 = vmatpush1.bf16.msra.mxu0 %v1203
      %1317 = vmatprep.subr.bf16.mxu0 0
      %1318 = vmatpush1.bf16.msra.mxu0 %v1202
      %1319 = vmatprep.subr.bf16.mxu0 0
      %1320 = vmatpush1.bf16.msra.mxu0 %v1201
      %1321 = vmatprep.subr.bf16.mxu0 0
      %1322 = vmatpush1.bf16.msra.mxu0 %v1200
      %1323 = vmatprep.subr.bf16.mxu0 0
      %1324 = vmatpush1.bf16.msra.mxu0 %v1199
      %1325 = vmatprep.subr.bf16.mxu0 0
      %1326 = vmatpush1.bf16.msra.mxu0 %v1198
      %1327 = vmatprep.subr.bf16.mxu0 0
      %1328 = vmatpush2.bf16.msra.mxu0 %v1213
      %1329 = vmatprep.subr.bf16.mxu0 0
      %1330 = vmatpush2.bf16.msra.mxu0 %v1212
      %1331 = vmatprep.subr.bf16.mxu0 0
      %1332 = vmatpush2.bf16.msra.mxu0 %v1211
      %1333 = vmatprep.subr.bf16.mxu0 0
      %1334 = vmatpush2.bf16.msra.mxu0 %v1210
      %1335 = vmatprep.subr.bf16.mxu0 0
      %1336 = vmatpush2.bf16.msra.mxu0 %v1209
      %1337 = vmatprep.subr.bf16.mxu0 0
      %1338 = vmatpush2.bf16.msra.mxu0 %v1208
      %1339 = vmatprep.subr.bf16.mxu0 0
      %1340 = vmatpush2.bf16.msra.mxu0 %v1207
      %1341 = vmatprep.subr.bf16.mxu0 0
      %1342 = vmatpush2.bf16.msra.mxu0 %v1206
      %1343 = vmatprep.mubr.bf16.mxu0 %v1025
      %1344 = vmatmul.mubr.bf16.gmra.mxu0 %v1024
      %v1345 = vpop.f32.mrf.mxu0
      %v1346 = vadd.f32 %v1281, %v1345
      %v1347 = vpop.f32.mrf.mxu0
      %v1348 = vpop.f32.mrf.mxu0
      %v1349 = vadd.f32 %v1284, %v1348
      %v1350 = vpop.f32.mrf.mxu0
      %1351 = vmatprep.mubr.bf16.mxu0 %v1029
      %1352 = vmatmul.mubr.bf16.gmra.mxu0 %v1028
      %v1353 = vpop.f32.mrf.mxu0
      %v1354 = vadd.f32 %v1289, %v1353
      %v1355 = vpop.f32.mrf.mxu0
      %v1356 = vpop.f32.mrf.mxu0
      %v1357 = vadd.f32 %v1292, %v1356
      %v1358 = vpop.f32.mrf.mxu0
      %1359 = vmatprep.mubr.bf16.mxu0 %v1033
      %1360 = vmatmul.mubr.bf16.gmra.mxu0 %v1032
      %v1361 = vpop.f32.mrf.mxu0
      %v1362 = vadd.f32 %v1297, %v1361
      %v1363 = vpop.f32.mrf.mxu0
      %v1364 = vpop.f32.mrf.mxu0
      %v1365 = vadd.f32 %v1300, %v1364
      %v1366 = vpop.f32.mrf.mxu0
      %1367 = vmatprep.mubr.bf16.mxu0 %v1037
      %1368 = vmatmul.mubr.bf16.gmra.mxu0 %v1036
      %v1369 = vpop.f32.mrf.mxu0
      %v1370 = vadd.f32 %v1305, %v1369
      %v1371 = vpop.f32.mrf.mxu0
      %v1372 = vpop.f32.mrf.mxu0
      %v1373 = vadd.f32 %v1308, %v1372
      %v1374 = vpop.f32.mrf.mxu0
      %1375 = vdwg.mxu0
      %v1376 = vld [vmem:[%s192] sm:$0xee]
      %v1377 = vld [vmem:[%s192 + $0x8] sm:$0xee]
      %v1378 = vld [vmem:[%s192 + $0x20] sm:$0xee]
      %v1379 = vld [vmem:[%s192 + $0x28] sm:$0xee]
      %v1380 = vld [vmem:[%s192 + $0x40] sm:$0xee]
      %v1381 = vld [vmem:[%s192 + $0x48] sm:$0xee]
      %v1382 = vld [vmem:[%s192 + $0x60] sm:$0xee]
      %v1383 = vld [vmem:[%s192 + $0x68] sm:$0xee]
      %v1384 = vld [vmem:[%s192 + $0x80] sm:$0xee]
      %v1385 = vld [vmem:[%s192 + $0x88] sm:$0xee]
      %v1386 = vld [vmem:[%s192 + $0xa0] sm:$0xee]
      %v1387 = vld [vmem:[%s192 + $0xa8] sm:$0xee]
      %v1388 = vld [vmem:[%s192 + $0xc0] sm:$0xee]
      %v1389 = vld [vmem:[%s192 + $0xc8] sm:$0xee]
      %v1390 = vld [vmem:[%s192 + $0xe0] sm:$0xee]
      %v1391 = vld [vmem:[%s192 + $0xe8] sm:$0xee]
      %vm1424 = vcmask 1042432
      %vm1425 = vcmask 1046532
      %vm1426 = vmor %vm1424, %vm1425
      %v1427 = vrot.slane %v1376, 5
      %v1428 = vrot.slane %v1427, 4
      %v1429 = vrot.slane %v280, 5
      %v1430 = vsel %vm1426, %v1428, %v1429
      %v1431 = vrot.slane %v1377, 5
      %v1432 = vrot.slane %v1431, 4
      %v1433 = vrot.slane %v281, 5
      %v1434 = vsel %vm1426, %v1432, %v1433
      %v1435 = vrot.slane %v1378, 5
      %v1436 = vrot.slane %v1435, 4
      %v1437 = vrot.slane %v282, 5
      %v1438 = vsel %vm1426, %v1436, %v1437
      %v1439 = vrot.slane %v1379, 5
      %v1440 = vrot.slane %v1439, 4
      %v1441 = vrot.slane %v283, 5
      %v1442 = vsel %vm1426, %v1440, %v1441
      %v1443 = vrot.slane %v1380, 5
      %v1444 = vrot.slane %v1443, 4
      %v1445 = vrot.slane %v284, 5
      %v1446 = vsel %vm1426, %v1444, %v1445
      %v1447 = vrot.slane %v1381, 5
      %v1448 = vrot.slane %v1447, 4
      %v1449 = vrot.slane %v285, 5
      %v1450 = vsel %vm1426, %v1448, %v1449
      %v1451 = vrot.slane %v1382, 5
      %v1452 = vrot.slane %v1451, 4
      %v1453 = vrot.slane %v286, 5
      %v1454 = vsel %vm1426, %v1452, %v1453
      %v1455 = vrot.slane %v1383, 5
      %v1456 = vrot.slane %v1455, 4
      %v1457 = vrot.slane %v287, 5
      %v1458 = vsel %vm1426, %v1456, %v1457
      %v1459 = vrot.slane %v1384, 5
      %v1460 = vrot.slane %v1459, 4
      %v1461 = vrot.slane %v288, 5
      %v1462 = vsel %vm1426, %v1460, %v1461
      %v1463 = vrot.slane %v1385, 5
      %v1464 = vrot.slane %v1463, 4
      %v1465 = vrot.slane %v289, 5
      %v1466 = vsel %vm1426, %v1464, %v1465
      %v1467 = vrot.slane %v1386, 5
      %v1468 = vrot.slane %v1467, 4
      %v1469 = vrot.slane %v290, 5
      %v1470 = vsel %vm1426, %v1468, %v1469
      %v1471 = vrot.slane %v1387, 5
      %v1472 = vrot.slane %v1471, 4
      %v1473 = vrot.slane %v291, 5
      %v1474 = vsel %vm1426, %v1472, %v1473
      %v1475 = vrot.slane %v1388, 5
      %v1476 = vrot.slane %v1475, 4
      %v1477 = vrot.slane %v292, 5
      %v1478 = vsel %vm1426, %v1476, %v1477
      %v1479 = vrot.slane %v1389, 5
      %v1480 = vrot.slane %v1479, 4
      %v1481 = vrot.slane %v293, 5
      %v1482 = vsel %vm1426, %v1480, %v1481
      %v1483 = vrot.slane %v1390, 5
      %v1484 = vrot.slane %v1483, 4
      %v1485 = vrot.slane %v294, 5
      %v1486 = vsel %vm1426, %v1484, %v1485
      %v1487 = vrot.slane %v1391, 5
      %v1488 = vrot.slane %v1487, 4
      %v1489 = vrot.slane %v295, 5
      %v1490 = vsel %vm1426, %v1488, %v1489
      %s1491 = scalar_lea.vmem %s1, 512
      %v1492 = vld [vmem:[%s1491] sm:$0xf]
      %v1493 = vld [vmem:[%s1491 + $0x4] sm:$0xf]
      %v1494 = vld [vmem:[%s1491 + $0x8] sm:$0xf]
      %v1495 = vld [vmem:[%s1491 + $0xc] sm:$0xf]
      %v1496 = vld [vmem:[%s1491 + $0x10] sm:$0xf]
      %v1497 = vld [vmem:[%s1491 + $0x14] sm:$0xf]
      %v1498 = vld [vmem:[%s1491 + $0x18] sm:$0xf]
      %v1499 = vld [vmem:[%s1491 + $0x1c] sm:$0xf]
      %v1500 = vld [vmem:[%s1491 + $0x20] sm:$0xf]
      %v1501 = vld [vmem:[%s1491 + $0x24] sm:$0xf]
      %v1502 = vld [vmem:[%s1491 + $0x28] sm:$0xf]
      %v1503 = vld [vmem:[%s1491 + $0x2c] sm:$0xf]
      %v1504 = vld [vmem:[%s1491 + $0x30] sm:$0xf]
      %v1505 = vld [vmem:[%s1491 + $0x34] sm:$0xf]
      %v1506 = vld [vmem:[%s1491 + $0x38] sm:$0xf]
      %v1507 = vld [vmem:[%s1491 + $0x3c] sm:$0xf]
      %v1508 = vld [vmem:[%s1491 + $0x40] sm:$0xf]
      %v1509 = vld [vmem:[%s1491 + $0x44] sm:$0xf]
      %v1510 = vld [vmem:[%s1491 + $0x48] sm:$0xf]
      %v1511 = vld [vmem:[%s1491 + $0x4c] sm:$0xf]
      %v1512 = vld [vmem:[%s1491 + $0x50] sm:$0xf]
      %v1513 = vld [vmem:[%s1491 + $0x54] sm:$0xf]
      %v1514 = vld [vmem:[%s1491 + $0x58] sm:$0xf]
      %v1515 = vld [vmem:[%s1491 + $0x5c] sm:$0xf]
      %v1516 = vld [vmem:[%s1491 + $0x60] sm:$0xf]
      %v1517 = vld [vmem:[%s1491 + $0x64] sm:$0xf]
      %v1518 = vld [vmem:[%s1491 + $0x68] sm:$0xf]
      %v1519 = vld [vmem:[%s1491 + $0x6c] sm:$0xf]
      %v1520 = vld [vmem:[%s1491 + $0x70] sm:$0xf]
      %v1521 = vld [vmem:[%s1491 + $0x74] sm:$0xf]
      %v1522 = vld [vmem:[%s1491 + $0x78] sm:$0xf]
      %v1523 = vld [vmem:[%s1491 + $0x7c] sm:$0xf]
      %v1524 = vld [vmem:[%s1491 + $0x80] sm:$0xf]
      %v1525 = vld [vmem:[%s1491 + $0x84] sm:$0xf]
      %v1526 = vld [vmem:[%s1491 + $0x88] sm:$0xf]
      %v1527 = vld [vmem:[%s1491 + $0x8c] sm:$0xf]
      %v1528 = vld [vmem:[%s1491 + $0x90] sm:$0xf]
      %v1529 = vld [vmem:[%s1491 + $0x94] sm:$0xf]
      %v1530 = vld [vmem:[%s1491 + $0x98] sm:$0xf]
      %v1531 = vld [vmem:[%s1491 + $0x9c] sm:$0xf]
      %v1532 = vld [vmem:[%s1491 + $0xa0] sm:$0xf]
      %v1533 = vld [vmem:[%s1491 + $0xa4] sm:$0xf]
      %v1534 = vld [vmem:[%s1491 + $0xa8] sm:$0xf]
      %v1535 = vld [vmem:[%s1491 + $0xac] sm:$0xf]
      %v1536 = vld [vmem:[%s1491 + $0xb0] sm:$0xf]
      %v1537 = vld [vmem:[%s1491 + $0xb4] sm:$0xf]
      %v1538 = vld [vmem:[%s1491 + $0xb8] sm:$0xf]
      %v1539 = vld [vmem:[%s1491 + $0xbc] sm:$0xf]
      %v1540 = vld [vmem:[%s1491 + $0xc0] sm:$0xf]
      %v1541 = vld [vmem:[%s1491 + $0xc4] sm:$0xf]
      %v1542 = vld [vmem:[%s1491 + $0xc8] sm:$0xf]
      %v1543 = vld [vmem:[%s1491 + $0xcc] sm:$0xf]
      %v1544 = vld [vmem:[%s1491 + $0xd0] sm:$0xf]
      %v1545 = vld [vmem:[%s1491 + $0xd4] sm:$0xf]
      %v1546 = vld [vmem:[%s1491 + $0xd8] sm:$0xf]
      %v1547 = vld [vmem:[%s1491 + $0xdc] sm:$0xf]
      %v1548 = vld [vmem:[%s1491 + $0xe0] sm:$0xf]
      %v1549 = vld [vmem:[%s1491 + $0xe4] sm:$0xf]
      %v1550 = vld [vmem:[%s1491 + $0xe8] sm:$0xf]
      %v1551 = vld [vmem:[%s1491 + $0xec] sm:$0xf]
      %v1552 = vld [vmem:[%s1491 + $0xf0] sm:$0xf]
      %v1553 = vld [vmem:[%s1491 + $0xf4] sm:$0xf]
      %v1554 = vld [vmem:[%s1491 + $0xf8] sm:$0xf]
      %v1555 = vld [vmem:[%s1491 + $0xfc] sm:$0xf]
      %v1556 = vunpack.c.l.b16 %v1430
      %v1557 = vunpack.c.h.b16 %v1430
      %v1558 = vunpack.c.l.b16 %v1434
      %v1559 = vunpack.c.h.b16 %v1434
      %v1560 = vunpack.c.l.b16 %v1438
      %v1561 = vunpack.c.h.b16 %v1438
      %v1562 = vunpack.c.l.b16 %v1442
      %v1563 = vunpack.c.h.b16 %v1442
      %v1564 = vunpack.c.l.b16 %v1446
      %v1565 = vunpack.c.h.b16 %v1446
      %v1566 = vunpack.c.l.b16 %v1450
      %v1567 = vunpack.c.h.b16 %v1450
      %v1568 = vunpack.c.l.b16 %v1454
      %v1569 = vunpack.c.h.b16 %v1454
      %v1570 = vunpack.c.l.b16 %v1458
      %v1571 = vunpack.c.h.b16 %v1458
      %v1572 = vunpack.c.l.b16 %v1462
      %v1573 = vunpack.c.h.b16 %v1462
      %v1574 = vunpack.c.l.b16 %v1466
      %v1575 = vunpack.c.h.b16 %v1466
      %v1576 = vunpack.c.l.b16 %v1470
      %v1577 = vunpack.c.h.b16 %v1470
      %v1578 = vunpack.c.l.b16 %v1474
      %v1579 = vunpack.c.h.b16 %v1474
      %v1580 = vunpack.c.l.b16 %v1478
      %v1581 = vunpack.c.h.b16 %v1478
      %v1582 = vunpack.c.l.b16 %v1482
      %v1583 = vunpack.c.h.b16 %v1482
      %v1584 = vunpack.c.l.b16 %v1486
      %v1585 = vunpack.c.h.b16 %v1486
      %v1586 = vunpack.c.l.b16 %v1490
      %v1587 = vunpack.c.h.b16 %v1490
      %v1588 = vpack.c.b16 %v1560, %v1556
      %v1589 = vpack.c.b16 %v1561, %v1557
      %v1590 = vpack.c.b16 %v1562, %v1558
      %v1591 = vpack.c.b16 %v1563, %v1559
      %v1592 = vpack.c.b16 %v1568, %v1564
      %v1593 = vpack.c.b16 %v1569, %v1565
      %v1594 = vpack.c.b16 %v1570, %v1566
      %v1595 = vpack.c.b16 %v1571, %v1567
      %v1596 = vpack.c.b16 %v1576, %v1572
      %v1597 = vpack.c.b16 %v1577, %v1573
      %v1598 = vpack.c.b16 %v1578, %v1574
      %v1599 = vpack.c.b16 %v1579, %v1575
      %v1600 = vpack.c.b16 %v1584, %v1580
      %v1601 = vpack.c.b16 %v1585, %v1581
      %v1602 = vpack.c.b16 %v1586, %v1582
      %v1603 = vpack.c.b16 %v1587, %v1583
      %v1684 = vunpack.c.l.b16 %v1492
      %v1685 = vunpack.c.l.b16 %v1493
      %v1686 = vunpack.c.l.b16 %v1494
      %v1687 = vunpack.c.l.b16 %v1495
      %v1688 = vunpack.c.l.b16 %v1496
      %v1689 = vunpack.c.l.b16 %v1497
      %v1690 = vunpack.c.l.b16 %v1498
      %v1691 = vunpack.c.l.b16 %v1499
      %v1692 = vunpack.c.l.b16 %v1500
      %v1693 = vunpack.c.l.b16 %v1501
      %v1694 = vunpack.c.l.b16 %v1502
      %v1695 = vunpack.c.l.b16 %v1503
      %v1696 = vunpack.c.l.b16 %v1504
      %v1697 = vunpack.c.l.b16 %v1505
      %v1698 = vunpack.c.l.b16 %v1506
      %v1699 = vunpack.c.l.b16 %v1507
      %v1700 = vunpack.c.l.b16 %v1508
      %v1701 = vunpack.c.l.b16 %v1509
      %v1702 = vunpack.c.l.b16 %v1510
      %v1703 = vunpack.c.l.b16 %v1511
      %v1704 = vunpack.c.l.b16 %v1512
      %v1705 = vunpack.c.l.b16 %v1513
      %v1706 = vunpack.c.l.b16 %v1514
      %v1707 = vunpack.c.l.b16 %v1515
      %v1708 = vunpack.c.l.b16 %v1516
      %v1709 = vunpack.c.l.b16 %v1517
      %v1710 = vunpack.c.l.b16 %v1518
      %v1711 = vunpack.c.l.b16 %v1519
      %v1712 = vunpack.c.l.b16 %v1520
      %v1713 = vunpack.c.l.b16 %v1521
      %v1714 = vunpack.c.l.b16 %v1522
      %v1715 = vunpack.c.l.b16 %v1523
      %v1716 = vunpack.c.l.b16 %v1524
      %v1717 = vunpack.c.l.b16 %v1525
      %v1718 = vunpack.c.l.b16 %v1526
      %v1719 = vunpack.c.l.b16 %v1527
      %v1720 = vunpack.c.l.b16 %v1528
      %v1721 = vunpack.c.l.b16 %v1529
      %v1722 = vunpack.c.l.b16 %v1530
      %v1723 = vunpack.c.l.b16 %v1531
      %v1724 = vunpack.c.l.b16 %v1532
      %v1725 = vunpack.c.l.b16 %v1533
      %v1726 = vunpack.c.l.b16 %v1534
      %v1727 = vunpack.c.l.b16 %v1535
      %v1728 = vunpack.c.l.b16 %v1536
      %v1729 = vunpack.c.l.b16 %v1537
      %v1730 = vunpack.c.l.b16 %v1538
      %v1731 = vunpack.c.l.b16 %v1539
      %v1732 = vunpack.c.l.b16 %v1540
      %v1733 = vunpack.c.l.b16 %v1541
      %v1734 = vunpack.c.l.b16 %v1542
      %v1735 = vunpack.c.l.b16 %v1543
      %v1736 = vunpack.c.l.b16 %v1544
      %v1737 = vunpack.c.l.b16 %v1545
      %v1738 = vunpack.c.l.b16 %v1546
      %v1739 = vunpack.c.l.b16 %v1547
      %v1740 = vunpack.c.l.b16 %v1548
      %v1741 = vunpack.c.l.b16 %v1549
      %v1742 = vunpack.c.l.b16 %v1550
      %v1743 = vunpack.c.l.b16 %v1551
      %v1744 = vunpack.c.l.b16 %v1552
      %v1745 = vunpack.c.l.b16 %v1553
      %v1746 = vunpack.c.l.b16 %v1554
      %v1747 = vunpack.c.l.b16 %v1555
      %v1748 = vpack.c.b16 %v1685, %v1684
      %v1749 = vpack.c.b16 %v1687, %v1686
      %v1750 = vpack.c.b16 %v1689, %v1688
      %v1751 = vpack.c.b16 %v1691, %v1690
      %v1752 = vpack.c.b16 %v1693, %v1692
      %v1753 = vpack.c.b16 %v1695, %v1694
      %v1754 = vpack.c.b16 %v1697, %v1696
      %v1755 = vpack.c.b16 %v1699, %v1698
      %v1756 = vpack.c.b16 %v1701, %v1700
      %v1757 = vpack.c.b16 %v1703, %v1702
      %v1758 = vpack.c.b16 %v1705, %v1704
      %v1759 = vpack.c.b16 %v1707, %v1706
      %v1760 = vpack.c.b16 %v1709, %v1708
      %v1761 = vpack.c.b16 %v1711, %v1710
      %v1762 = vpack.c.b16 %v1713, %v1712
      %v1763 = vpack.c.b16 %v1715, %v1714
      %v1764 = vpack.c.b16 %v1717, %v1716
      %v1765 = vpack.c.b16 %v1719, %v1718
      %v1766 = vpack.c.b16 %v1721, %v1720
      %v1767 = vpack.c.b16 %v1723, %v1722
      %v1768 = vpack.c.b16 %v1725, %v1724
      %v1769 = vpack.c.b16 %v1727, %v1726
      %v1770 = vpack.c.b16 %v1729, %v1728
      %v1771 = vpack.c.b16 %v1731, %v1730
      %v1772 = vpack.c.b16 %v1733, %v1732
      %v1773 = vpack.c.b16 %v1735, %v1734
      %v1774 = vpack.c.b16 %v1737, %v1736
      %v1775 = vpack.c.b16 %v1739, %v1738
      %v1776 = vpack.c.b16 %v1741, %v1740
      %v1777 = vpack.c.b16 %v1743, %v1742
      %v1778 = vpack.c.b16 %v1745, %v1744
      %v1779 = vpack.c.b16 %v1747, %v1746
      %1812 = vmatprep.subr.bf16.mxu0 0
      %1813 = vmatpush1.bf16.msra.mxu0 %v1755
      %1814 = vmatprep.subr.bf16.mxu0 0
      %1815 = vmatpush1.bf16.msra.mxu0 %v1754
      %1816 = vmatprep.subr.bf16.mxu0 0
      %1817 = vmatpush1.bf16.msra.mxu0 %v1753
      %1818 = vmatprep.subr.bf16.mxu0 0
      %1819 = vmatpush1.bf16.msra.mxu0 %v1752
      %1820 = vmatprep.subr.bf16.mxu0 0
      %1821 = vmatpush1.bf16.msra.mxu0 %v1751
      %1822 = vmatprep.subr.bf16.mxu0 0
      %1823 = vmatpush1.bf16.msra.mxu0 %v1750
      %1824 = vmatprep.subr.bf16.mxu0 0
      %1825 = vmatpush1.bf16.msra.mxu0 %v1749
      %1826 = vmatprep.subr.bf16.mxu0 0
      %1827 = vmatpush1.bf16.msra.mxu0 %v1748
      %1828 = vmatprep.subr.bf16.mxu0 0
      %1829 = vmatpush2.bf16.msra.mxu0 %v1763
      %1830 = vmatprep.subr.bf16.mxu0 0
      %1831 = vmatpush2.bf16.msra.mxu0 %v1762
      %1832 = vmatprep.subr.bf16.mxu0 0
      %1833 = vmatpush2.bf16.msra.mxu0 %v1761
      %1834 = vmatprep.subr.bf16.mxu0 0
      %1835 = vmatpush2.bf16.msra.mxu0 %v1760
      %1836 = vmatprep.subr.bf16.mxu0 0
      %1837 = vmatpush2.bf16.msra.mxu0 %v1759
      %1838 = vmatprep.subr.bf16.mxu0 0
      %1839 = vmatpush2.bf16.msra.mxu0 %v1758
      %1840 = vmatprep.subr.bf16.mxu0 0
      %1841 = vmatpush2.bf16.msra.mxu0 %v1757
      %1842 = vmatprep.subr.bf16.mxu0 0
      %1843 = vmatpush2.bf16.msra.mxu0 %v1756
      %1844 = vmatprep.mubr.bf16.mxu0 %v1589
      %1845 = vmatmul.mubr.bf16.gmra.mxu0 %v1588
      %v1846 = vpop.f32.mrf.mxu0
      %v1847 = vadd.f32 0.0, %v1846
      %v1848 = vpop.f32.mrf.mxu0
      %v1849 = vpop.f32.mrf.mxu0
      %v1850 = vadd.f32 0.0, %v1849
      %v1851 = vpop.f32.mrf.mxu0
      %1852 = vmatprep.mubr.bf16.mxu0 %v1593
      %1853 = vmatmul.mubr.bf16.gmra.mxu0 %v1592
      %v1854 = vpop.f32.mrf.mxu0
      %v1855 = vadd.f32 0.0, %v1854
      %v1856 = vpop.f32.mrf.mxu0
      %v1857 = vpop.f32.mrf.mxu0
      %v1858 = vadd.f32 0.0, %v1857
      %v1859 = vpop.f32.mrf.mxu0
      %1860 = vmatprep.mubr.bf16.mxu0 %v1597
      %1861 = vmatmul.mubr.bf16.gmra.mxu0 %v1596
      %v1862 = vpop.f32.mrf.mxu0
      %v1863 = vadd.f32 0.0, %v1862
      %v1864 = vpop.f32.mrf.mxu0
      %v1865 = vpop.f32.mrf.mxu0
      %v1866 = vadd.f32 0.0, %v1865
      %v1867 = vpop.f32.mrf.mxu0
      %1868 = vmatprep.mubr.bf16.mxu0 %v1601
      %1869 = vmatmul.mubr.bf16.gmra.mxu0 %v1600
      %v1870 = vpop.f32.mrf.mxu0
      %v1871 = vadd.f32 0.0, %v1870
      %v1872 = vpop.f32.mrf.mxu0
      %v1873 = vpop.f32.mrf.mxu0
      %v1874 = vadd.f32 0.0, %v1873
      %v1875 = vpop.f32.mrf.mxu0
      %1876 = vdwg.mxu0
      %1877 = vmatprep.subr.bf16.mxu0 0
      %1878 = vmatpush1.bf16.msra.mxu0 %v1771
      %1879 = vmatprep.subr.bf16.mxu0 0
      %1880 = vmatpush1.bf16.msra.mxu0 %v1770
      %1881 = vmatprep.subr.bf16.mxu0 0
      %1882 = vmatpush1.bf16.msra.mxu0 %v1769
      %1883 = vmatprep.subr.bf16.mxu0 0
      %1884 = vmatpush1.bf16.msra.mxu0 %v1768
      %1885 = vmatprep.subr.bf16.mxu0 0
      %1886 = vmatpush1.bf16.msra.mxu0 %v1767
      %1887 = vmatprep.subr.bf16.mxu0 0
      %1888 = vmatpush1.bf16.msra.mxu0 %v1766
      %1889 = vmatprep.subr.bf16.mxu0 0
      %1890 = vmatpush1.bf16.msra.mxu0 %v1765
      %1891 = vmatprep.subr.bf16.mxu0 0
      %1892 = vmatpush1.bf16.msra.mxu0 %v1764
      %1893 = vmatprep.subr.bf16.mxu0 0
      %1894 = vmatpush2.bf16.msra.mxu0 %v1779
      %1895 = vmatprep.subr.bf16.mxu0 0
      %1896 = vmatpush2.bf16.msra.mxu0 %v1778
      %1897 = vmatprep.subr.bf16.mxu0 0
      %1898 = vmatpush2.bf16.msra.mxu0 %v1777
      %1899 = vmatprep.subr.bf16.mxu0 0
      %1900 = vmatpush2.bf16.msra.mxu0 %v1776
      %1901 = vmatprep.subr.bf16.mxu0 0
      %1902 = vmatpush2.bf16.msra.mxu0 %v1775
      %1903 = vmatprep.subr.bf16.mxu0 0
      %1904 = vmatpush2.bf16.msra.mxu0 %v1774
      %1905 = vmatprep.subr.bf16.mxu0 0
      %1906 = vmatpush2.bf16.msra.mxu0 %v1773
      %1907 = vmatprep.subr.bf16.mxu0 0
      %1908 = vmatpush2.bf16.msra.mxu0 %v1772
      %1909 = vmatprep.mubr.bf16.mxu0 %v1591
      %1910 = vmatmul.mubr.bf16.gmra.mxu0 %v1590
      %v1911 = vpop.f32.mrf.mxu0
      %v1912 = vadd.f32 %v1847, %v1911
      %v1913 = vpop.f32.mrf.mxu0
      %v1914 = vpop.f32.mrf.mxu0
      %v1915 = vadd.f32 %v1850, %v1914
      %v1916 = vpop.f32.mrf.mxu0
      %1917 = vmatprep.mubr.bf16.mxu0 %v1595
      %1918 = vmatmul.mubr.bf16.gmra.mxu0 %v1594
      %v1919 = vpop.f32.mrf.mxu0
      %v1920 = vadd.f32 %v1855, %v1919
      %v1921 = vpop.f32.mrf.mxu0
      %v1922 = vpop.f32.mrf.mxu0
      %v1923 = vadd.f32 %v1858, %v1922
      %v1924 = vpop.f32.mrf.mxu0
      %1925 = vmatprep.mubr.bf16.mxu0 %v1599
      %1926 = vmatmul.mubr.bf16.gmra.mxu0 %v1598
      %v1927 = vpop.f32.mrf.mxu0
      %v1928 = vadd.f32 %v1863, %v1927
      %v1929 = vpop.f32.mrf.mxu0
      %v1930 = vpop.f32.mrf.mxu0
      %v1931 = vadd.f32 %v1866, %v1930
      %v1932 = vpop.f32.mrf.mxu0
      %1933 = vmatprep.mubr.bf16.mxu0 %v1603
      %1934 = vmatmul.mubr.bf16.gmra.mxu0 %v1602
      %v1935 = vpop.f32.mrf.mxu0
      %v1936 = vadd.f32 %v1871, %v1935
      %v1937 = vpop.f32.mrf.mxu0
      %v1938 = vpop.f32.mrf.mxu0
      %v1939 = vadd.f32 %v1874, %v1938
      %v1940 = vpop.f32.mrf.mxu0
      %1941 = vdwg.mxu0
      %v1942 = vadd.f32 %v1346, %v1912
      %v1943 = vadd.f32 %v1349, %v1915
      %v1944 = vadd.f32 %v1354, %v1920
      %v1945 = vadd.f32 %v1357, %v1923
      %v1946 = vadd.f32 %v1362, %v1928
      %v1947 = vadd.f32 %v1365, %v1931
      %v1948 = vadd.f32 %v1370, %v1936
      %v1949 = vadd.f32 %v1373, %v1939
      %s1950 = scalar_lea.vmem %s192, 32
      %v1951 = vld [vmem:[%s1950] sm:$0xff]
      %v1952 = vld [vmem:[%s1950 + $0x8] sm:$0xff]
      %v1953 = vld [vmem:[%s1950 + $0x20] sm:$0xff]
      %v1954 = vld [vmem:[%s1950 + $0x28] sm:$0xff]
      %v1955 = vld [vmem:[%s1950 + $0x40] sm:$0xff]
      %v1956 = vld [vmem:[%s1950 + $0x48] sm:$0xff]
      %v1957 = vld [vmem:[%s1950 + $0x60] sm:$0xff]
      %v1958 = vld [vmem:[%s1950 + $0x68] sm:$0xff]
      %v1959 = vld [vmem:[%s1950 + $0x80] sm:$0xff]
      %v1960 = vld [vmem:[%s1950 + $0x88] sm:$0xff]
      %v1961 = vld [vmem:[%s1950 + $0xa0] sm:$0xff]
      %v1962 = vld [vmem:[%s1950 + $0xa8] sm:$0xff]
      %v1963 = vld [vmem:[%s1950 + $0xc0] sm:$0xff]
      %v1964 = vld [vmem:[%s1950 + $0xc8] sm:$0xff]
      %v1965 = vld [vmem:[%s1950 + $0xe0] sm:$0xff]
      %v1966 = vld [vmem:[%s1950 + $0xe8] sm:$0xff]
      %s1967 = scalar_lea.vmem %s1, 768
      %v1968 = vld [vmem:[%s1967] sm:$0xf]
      %v1969 = vld [vmem:[%s1967 + $0x4] sm:$0xf]
      %v1970 = vld [vmem:[%s1967 + $0x8] sm:$0xf]
      %v1971 = vld [vmem:[%s1967 + $0xc] sm:$0xf]
      %v1972 = vld [vmem:[%s1967 + $0x10] sm:$0xf]
      %v1973 = vld [vmem:[%s1967 + $0x14] sm:$0xf]
      %v1974 = vld [vmem:[%s1967 + $0x18] sm:$0xf]
      %v1975 = vld [vmem:[%s1967 + $0x1c] sm:$0xf]
      %v1976 = vld [vmem:[%s1967 + $0x20] sm:$0xf]
      %v1977 = vld [vmem:[%s1967 + $0x24] sm:$0xf]
      %v1978 = vld [vmem:[%s1967 + $0x28] sm:$0xf]
      %v1979 = vld [vmem:[%s1967 + $0x2c] sm:$0xf]
      %v1980 = vld [vmem:[%s1967 + $0x30] sm:$0xf]
      %v1981 = vld [vmem:[%s1967 + $0x34] sm:$0xf]
      %v1982 = vld [vmem:[%s1967 + $0x38] sm:$0xf]
      %v1983 = vld [vmem:[%s1967 + $0x3c] sm:$0xf]
      %v1984 = vld [vmem:[%s1967 + $0x40] sm:$0xf]
      %v1985 = vld [vmem:[%s1967 + $0x44] sm:$0xf]
      %v1986 = vld [vmem:[%s1967 + $0x48] sm:$0xf]
      %v1987 = vld [vmem:[%s1967 + $0x4c] sm:$0xf]
      %v1988 = vld [vmem:[%s1967 + $0x50] sm:$0xf]
      %v1989 = vld [vmem:[%s1967 + $0x54] sm:$0xf]
      %v1990 = vld [vmem:[%s1967 + $0x58] sm:$0xf]
      %v1991 = vld [vmem:[%s1967 + $0x5c] sm:$0xf]
      %v1992 = vld [vmem:[%s1967 + $0x60] sm:$0xf]
      %v1993 = vld [vmem:[%s1967 + $0x64] sm:$0xf]
      %v1994 = vld [vmem:[%s1967 + $0x68] sm:$0xf]
      %v1995 = vld [vmem:[%s1967 + $0x6c] sm:$0xf]
      %v1996 = vld [vmem:[%s1967 + $0x70] sm:$0xf]
      %v1997 = vld [vmem:[%s1967 + $0x74] sm:$0xf]
      %v1998 = vld [vmem:[%s1967 + $0x78] sm:$0xf]
      %v1999 = vld [vmem:[%s1967 + $0x7c] sm:$0xf]
      %v2000 = vld [vmem:[%s1967 + $0x80] sm:$0xf]
      %v2001 = vld [vmem:[%s1967 + $0x84] sm:$0xf]
      %v2002 = vld [vmem:[%s1967 + $0x88] sm:$0xf]
      %v2003 = vld [vmem:[%s1967 + $0x8c] sm:$0xf]
      %v2004 = vld [vmem:[%s1967 + $0x90] sm:$0xf]
      %v2005 = vld [vmem:[%s1967 + $0x94] sm:$0xf]
      %v2006 = vld [vmem:[%s1967 + $0x98] sm:$0xf]
      %v2007 = vld [vmem:[%s1967 + $0x9c] sm:$0xf]
      %v2008 = vld [vmem:[%s1967 + $0xa0] sm:$0xf]
      %v2009 = vld [vmem:[%s1967 + $0xa4] sm:$0xf]
      %v2010 = vld [vmem:[%s1967 + $0xa8] sm:$0xf]
      %v2011 = vld [vmem:[%s1967 + $0xac] sm:$0xf]
      %v2012 = vld [vmem:[%s1967 + $0xb0] sm:$0xf]
      %v2013 = vld [vmem:[%s1967 + $0xb4] sm:$0xf]
      %v2014 = vld [vmem:[%s1967 + $0xb8] sm:$0xf]
      %v2015 = vld [vmem:[%s1967 + $0xbc] sm:$0xf]
      %v2016 = vld [vmem:[%s1967 + $0xc0] sm:$0xf]
      %v2017 = vld [vmem:[%s1967 + $0xc4] sm:$0xf]
      %v2018 = vld [vmem:[%s1967 + $0xc8] sm:$0xf]
      %v2019 = vld [vmem:[%s1967 + $0xcc] sm:$0xf]
      %v2020 = vld [vmem:[%s1967 + $0xd0] sm:$0xf]
      %v2021 = vld [vmem:[%s1967 + $0xd4] sm:$0xf]
      %v2022 = vld [vmem:[%s1967 + $0xd8] sm:$0xf]
      %v2023 = vld [vmem:[%s1967 + $0xdc] sm:$0xf]
      %v2024 = vld [vmem:[%s1967 + $0xe0] sm:$0xf]
      %v2025 = vld [vmem:[%s1967 + $0xe4] sm:$0xf]
      %v2026 = vld [vmem:[%s1967 + $0xe8] sm:$0xf]
      %v2027 = vld [vmem:[%s1967 + $0xec] sm:$0xf]
      %v2028 = vld [vmem:[%s1967 + $0xf0] sm:$0xf]
      %v2029 = vld [vmem:[%s1967 + $0xf4] sm:$0xf]
      %v2030 = vld [vmem:[%s1967 + $0xf8] sm:$0xf]
      %v2031 = vld [vmem:[%s1967 + $0xfc] sm:$0xf]
      %v2048 = vunpack.c.l.b16 %v1951
      %v2049 = vunpack.c.h.b16 %v1951
      %v2050 = vunpack.c.l.b16 %v1952
      %v2051 = vunpack.c.h.b16 %v1952
      %v2052 = vunpack.c.l.b16 %v1953
      %v2053 = vunpack.c.h.b16 %v1953
      %v2054 = vunpack.c.l.b16 %v1954
      %v2055 = vunpack.c.h.b16 %v1954
      %v2056 = vunpack.c.l.b16 %v1955
      %v2057 = vunpack.c.h.b16 %v1955
      %v2058 = vunpack.c.l.b16 %v1956
      %v2059 = vunpack.c.h.b16 %v1956
      %v2060 = vunpack.c.l.b16 %v1957
      %v2061 = vunpack.c.h.b16 %v1957
      %v2062 = vunpack.c.l.b16 %v1958
      %v2063 = vunpack.c.h.b16 %v1958
      %v2064 = vunpack.c.l.b16 %v1959
      %v2065 = vunpack.c.h.b16 %v1959
      %v2066 = vunpack.c.l.b16 %v1960
      %v2067 = vunpack.c.h.b16 %v1960
      %v2068 = vunpack.c.l.b16 %v1961
      %v2069 = vunpack.c.h.b16 %v1961
      %v2070 = vunpack.c.l.b16 %v1962
      %v2071 = vunpack.c.h.b16 %v1962
      %v2072 = vunpack.c.l.b16 %v1963
      %v2073 = vunpack.c.h.b16 %v1963
      %v2074 = vunpack.c.l.b16 %v1964
      %v2075 = vunpack.c.h.b16 %v1964
      %v2076 = vunpack.c.l.b16 %v1965
      %v2077 = vunpack.c.h.b16 %v1965
      %v2078 = vunpack.c.l.b16 %v1966
      %v2079 = vunpack.c.h.b16 %v1966
      %v2080 = vpack.c.b16 %v2052, %v2048
      %v2081 = vpack.c.b16 %v2053, %v2049
      %v2082 = vpack.c.b16 %v2054, %v2050
      %v2083 = vpack.c.b16 %v2055, %v2051
      %v2084 = vpack.c.b16 %v2060, %v2056
      %v2085 = vpack.c.b16 %v2061, %v2057
      %v2086 = vpack.c.b16 %v2062, %v2058
      %v2087 = vpack.c.b16 %v2063, %v2059
      %v2088 = vpack.c.b16 %v2068, %v2064
      %v2089 = vpack.c.b16 %v2069, %v2065
      %v2090 = vpack.c.b16 %v2070, %v2066
      %v2091 = vpack.c.b16 %v2071, %v2067
      %v2092 = vpack.c.b16 %v2076, %v2072
      %v2093 = vpack.c.b16 %v2077, %v2073
      %v2094 = vpack.c.b16 %v2078, %v2074
      %v2095 = vpack.c.b16 %v2079, %v2075
      %v2176 = vunpack.c.l.b16 %v1968
      %v2177 = vunpack.c.l.b16 %v1969
      %v2178 = vunpack.c.l.b16 %v1970
      %v2179 = vunpack.c.l.b16 %v1971
      %v2180 = vunpack.c.l.b16 %v1972
      %v2181 = vunpack.c.l.b16 %v1973
      %v2182 = vunpack.c.l.b16 %v1974
      %v2183 = vunpack.c.l.b16 %v1975
      %v2184 = vunpack.c.l.b16 %v1976
      %v2185 = vunpack.c.l.b16 %v1977
      %v2186 = vunpack.c.l.b16 %v1978
      %v2187 = vunpack.c.l.b16 %v1979
      %v2188 = vunpack.c.l.b16 %v1980
      %v2189 = vunpack.c.l.b16 %v1981
      %v2190 = vunpack.c.l.b16 %v1982
      %v2191 = vunpack.c.l.b16 %v1983
      %v2192 = vunpack.c.l.b16 %v1984
      %v2193 = vunpack.c.l.b16 %v1985
      %v2194 = vunpack.c.l.b16 %v1986
      %v2195 = vunpack.c.l.b16 %v1987
      %v2196 = vunpack.c.l.b16 %v1988
      %v2197 = vunpack.c.l.b16 %v1989
      %v2198 = vunpack.c.l.b16 %v1990
      %v2199 = vunpack.c.l.b16 %v1991
      %v2200 = vunpack.c.l.b16 %v1992
      %v2201 = vunpack.c.l.b16 %v1993
      %v2202 = vunpack.c.l.b16 %v1994
      %v2203 = vunpack.c.l.b16 %v1995
      %v2204 = vunpack.c.l.b16 %v1996
      %v2205 = vunpack.c.l.b16 %v1997
      %v2206 = vunpack.c.l.b16 %v1998
      %v2207 = vunpack.c.l.b16 %v1999
      %v2208 = vunpack.c.l.b16 %v2000
      %v2209 = vunpack.c.l.b16 %v2001
      %v2210 = vunpack.c.l.b16 %v2002
      %v2211 = vunpack.c.l.b16 %v2003
      %v2212 = vunpack.c.l.b16 %v2004
      %v2213 = vunpack.c.l.b16 %v2005
      %v2214 = vunpack.c.l.b16 %v2006
      %v2215 = vunpack.c.l.b16 %v2007
      %v2216 = vunpack.c.l.b16 %v2008
      %v2217 = vunpack.c.l.b16 %v2009
      %v2218 = vunpack.c.l.b16 %v2010
      %v2219 = vunpack.c.l.b16 %v2011
      %v2220 = vunpack.c.l.b16 %v2012
      %v2221 = vunpack.c.l.b16 %v2013
      %v2222 = vunpack.c.l.b16 %v2014
      %v2223 = vunpack.c.l.b16 %v2015
      %v2224 = vunpack.c.l.b16 %v2016
      %v2225 = vunpack.c.l.b16 %v2017
      %v2226 = vunpack.c.l.b16 %v2018
      %v2227 = vunpack.c.l.b16 %v2019
      %v2228 = vunpack.c.l.b16 %v2020
      %v2229 = vunpack.c.l.b16 %v2021
      %v2230 = vunpack.c.l.b16 %v2022
      %v2231 = vunpack.c.l.b16 %v2023
      %v2232 = vunpack.c.l.b16 %v2024
      %v2233 = vunpack.c.l.b16 %v2025
      %v2234 = vunpack.c.l.b16 %v2026
      %v2235 = vunpack.c.l.b16 %v2027
      %v2236 = vunpack.c.l.b16 %v2028
      %v2237 = vunpack.c.l.b16 %v2029
      %v2238 = vunpack.c.l.b16 %v2030
      %v2239 = vunpack.c.l.b16 %v2031
      %v2240 = vpack.c.b16 %v2177, %v2176
      %v2241 = vpack.c.b16 %v2179, %v2178
      %v2242 = vpack.c.b16 %v2181, %v2180
      %v2243 = vpack.c.b16 %v2183, %v2182
      %v2244 = vpack.c.b16 %v2185, %v2184
      %v2245 = vpack.c.b16 %v2187, %v2186
      %v2246 = vpack.c.b16 %v2189, %v2188
      %v2247 = vpack.c.b16 %v2191, %v2190
      %v2248 = vpack.c.b16 %v2193, %v2192
      %v2249 = vpack.c.b16 %v2195, %v2194
      %v2250 = vpack.c.b16 %v2197, %v2196
      %v2251 = vpack.c.b16 %v2199, %v2198
      %v2252 = vpack.c.b16 %v2201, %v2200
      %v2253 = vpack.c.b16 %v2203, %v2202
      %v2254 = vpack.c.b16 %v2205, %v2204
      %v2255 = vpack.c.b16 %v2207, %v2206
      %v2256 = vpack.c.b16 %v2209, %v2208
      %v2257 = vpack.c.b16 %v2211, %v2210
      %v2258 = vpack.c.b16 %v2213, %v2212
      %v2259 = vpack.c.b16 %v2215, %v2214
      %v2260 = vpack.c.b16 %v2217, %v2216
      %v2261 = vpack.c.b16 %v2219, %v2218
      %v2262 = vpack.c.b16 %v2221, %v2220
      %v2263 = vpack.c.b16 %v2223, %v2222
      %v2264 = vpack.c.b16 %v2225, %v2224
      %v2265 = vpack.c.b16 %v2227, %v2226
      %v2266 = vpack.c.b16 %v2229, %v2228
      %v2267 = vpack.c.b16 %v2231, %v2230
      %v2268 = vpack.c.b16 %v2233, %v2232
      %v2269 = vpack.c.b16 %v2235, %v2234
      %v2270 = vpack.c.b16 %v2237, %v2236
      %v2271 = vpack.c.b16 %v2239, %v2238
      %2304 = vmatprep.subr.bf16.mxu0 0
      %2305 = vmatpush1.bf16.msra.mxu0 %v2247
      %2306 = vmatprep.subr.bf16.mxu0 0
      %2307 = vmatpush1.bf16.msra.mxu0 %v2246
      %2308 = vmatprep.subr.bf16.mxu0 0
      %2309 = vmatpush1.bf16.msra.mxu0 %v2245
      %2310 = vmatprep.subr.bf16.mxu0 0
      %2311 = vmatpush1.bf16.msra.mxu0 %v2244
      %2312 = vmatprep.subr.bf16.mxu0 0
      %2313 = vmatpush1.bf16.msra.mxu0 %v2243
      %2314 = vmatprep.subr.bf16.mxu0 0
      %2315 = vmatpush1.bf16.msra.mxu0 %v2242
      %2316 = vmatprep.subr.bf16.mxu0 0
      %2317 = vmatpush1.bf16.msra.mxu0 %v2241
      %2318 = vmatprep.subr.bf16.mxu0 0
      %2319 = vmatpush1.bf16.msra.mxu0 %v2240
      %2320 = vmatprep.subr.bf16.mxu0 0
      %2321 = vmatpush2.bf16.msra.mxu0 %v2255
      %2322 = vmatprep.subr.bf16.mxu0 0
      %2323 = vmatpush2.bf16.msra.mxu0 %v2254
      %2324 = vmatprep.subr.bf16.mxu0 0
      %2325 = vmatpush2.bf16.msra.mxu0 %v2253
      %2326 = vmatprep.subr.bf16.mxu0 0
      %2327 = vmatpush2.bf16.msra.mxu0 %v2252
      %2328 = vmatprep.subr.bf16.mxu0 0
      %2329 = vmatpush2.bf16.msra.mxu0 %v2251
      %2330 = vmatprep.subr.bf16.mxu0 0
      %2331 = vmatpush2.bf16.msra.mxu0 %v2250
      %2332 = vmatprep.subr.bf16.mxu0 0
      %2333 = vmatpush2.bf16.msra.mxu0 %v2249
      %2334 = vmatprep.subr.bf16.mxu0 0
      %2335 = vmatpush2.bf16.msra.mxu0 %v2248
      %2336 = vmatprep.mubr.bf16.mxu0 %v2081
      %2337 = vmatmul.mubr.bf16.gmra.mxu0 %v2080
      %v2338 = vpop.f32.mrf.mxu0
      %v2339 = vadd.f32 0.0, %v2338
      %v2340 = vpop.f32.mrf.mxu0
      %v2341 = vpop.f32.mrf.mxu0
      %v2342 = vadd.f32 0.0, %v2341
      %v2343 = vpop.f32.mrf.mxu0
      %2344 = vmatprep.mubr.bf16.mxu0 %v2085
      %2345 = vmatmul.mubr.bf16.gmra.mxu0 %v2084
      %v2346 = vpop.f32.mrf.mxu0
      %v2347 = vadd.f32 0.0, %v2346
      %v2348 = vpop.f32.mrf.mxu0
      %v2349 = vpop.f32.mrf.mxu0
      %v2350 = vadd.f32 0.0, %v2349
      %v2351 = vpop.f32.mrf.mxu0
      %2352 = vmatprep.mubr.bf16.mxu0 %v2089
      %2353 = vmatmul.mubr.bf16.gmra.mxu0 %v2088
      %v2354 = vpop.f32.mrf.mxu0
      %v2355 = vadd.f32 0.0, %v2354
      %v2356 = vpop.f32.mrf.mxu0
      %v2357 = vpop.f32.mrf.mxu0
      %v2358 = vadd.f32 0.0, %v2357
      %v2359 = vpop.f32.mrf.mxu0
      %2360 = vmatprep.mubr.bf16.mxu0 %v2093
      %2361 = vmatmul.mubr.bf16.gmra.mxu0 %v2092
      %v2362 = vpop.f32.mrf.mxu0
      %v2363 = vadd.f32 0.0, %v2362
      %v2364 = vpop.f32.mrf.mxu0
      %v2365 = vpop.f32.mrf.mxu0
      %v2366 = vadd.f32 0.0, %v2365
      %v2367 = vpop.f32.mrf.mxu0
      %2368 = vdwg.mxu0
      %2369 = vmatprep.subr.bf16.mxu0 0
      %2370 = vmatpush1.bf16.msra.mxu0 %v2263
      %2371 = vmatprep.subr.bf16.mxu0 0
      %2372 = vmatpush1.bf16.msra.mxu0 %v2262
      %2373 = vmatprep.subr.bf16.mxu0 0
      %2374 = vmatpush1.bf16.msra.mxu0 %v2261
      %2375 = vmatprep.subr.bf16.mxu0 0
      %2376 = vmatpush1.bf16.msra.mxu0 %v2260
      %2377 = vmatprep.subr.bf16.mxu0 0
      %2378 = vmatpush1.bf16.msra.mxu0 %v2259
      %2379 = vmatprep.subr.bf16.mxu0 0
      %2380 = vmatpush1.bf16.msra.mxu0 %v2258
      %2381 = vmatprep.subr.bf16.mxu0 0
      %2382 = vmatpush1.bf16.msra.mxu0 %v2257
      %2383 = vmatprep.subr.bf16.mxu0 0
      %2384 = vmatpush1.bf16.msra.mxu0 %v2256
      %2385 = vmatprep.subr.bf16.mxu0 0
      %2386 = vmatpush2.bf16.msra.mxu0 %v2271
      %2387 = vmatprep.subr.bf16.mxu0 0
      %2388 = vmatpush2.bf16.msra.mxu0 %v2270
      %2389 = vmatprep.subr.bf16.mxu0 0
      %2390 = vmatpush2.bf16.msra.mxu0 %v2269
      %2391 = vmatprep.subr.bf16.mxu0 0
      %2392 = vmatpush2.bf16.msra.mxu0 %v2268
      %2393 = vmatprep.subr.bf16.mxu0 0
      %2394 = vmatpush2.bf16.msra.mxu0 %v2267
      %2395 = vmatprep.subr.bf16.mxu0 0
      %2396 = vmatpush2.bf16.msra.mxu0 %v2266
      %2397 = vmatprep.subr.bf16.mxu0 0
      %2398 = vmatpush2.bf16.msra.mxu0 %v2265
      %2399 = vmatprep.subr.bf16.mxu0 0
      %2400 = vmatpush2.bf16.msra.mxu0 %v2264
      %2401 = vmatprep.mubr.bf16.mxu0 %v2083
      %2402 = vmatmul.mubr.bf16.gmra.mxu0 %v2082
      %v2403 = vpop.f32.mrf.mxu0
      %v2404 = vadd.f32 %v2339, %v2403
      %v2405 = vpop.f32.mrf.mxu0
      %v2406 = vpop.f32.mrf.mxu0
      %v2407 = vadd.f32 %v2342, %v2406
      %v2408 = vpop.f32.mrf.mxu0
      %2409 = vmatprep.mubr.bf16.mxu0 %v2087
      %2410 = vmatmul.mubr.bf16.gmra.mxu0 %v2086
      %v2411 = vpop.f32.mrf.mxu0
      %v2412 = vadd.f32 %v2347, %v2411
      %v2413 = vpop.f32.mrf.mxu0
      %v2414 = vpop.f32.mrf.mxu0
      %v2415 = vadd.f32 %v2350, %v2414
      %v2416 = vpop.f32.mrf.mxu0
      %2417 = vmatprep.mubr.bf16.mxu0 %v2091
      %2418 = vmatmul.mubr.bf16.gmra.mxu0 %v2090
      %v2419 = vpop.f32.mrf.mxu0
      %v2420 = vadd.f32 %v2355, %v2419
      %v2421 = vpop.f32.mrf.mxu0
      %v2422 = vpop.f32.mrf.mxu0
      %v2423 = vadd.f32 %v2358, %v2422
      %v2424 = vpop.f32.mrf.mxu0
      %2425 = vmatprep.mubr.bf16.mxu0 %v2095
      %2426 = vmatmul.mubr.bf16.gmra.mxu0 %v2094
      %v2427 = vpop.f32.mrf.mxu0
      %v2428 = vadd.f32 %v2363, %v2427
      %v2429 = vpop.f32.mrf.mxu0
      %v2430 = vpop.f32.mrf.mxu0
      %v2431 = vadd.f32 %v2366, %v2430
      %v2432 = vpop.f32.mrf.mxu0
      %2433 = vdwg.mxu0
      %v2434 = vadd.f32 %v1942, %v2404
      %v2435 = vadd.f32 %v1943, %v2407
      %v2436 = vadd.f32 %v1944, %v2412
      %v2437 = vadd.f32 %v1945, %v2415
      %v2438 = vadd.f32 %v1946, %v2420
      %v2439 = vadd.f32 %v1947, %v2423
      %v2440 = vadd.f32 %v1948, %v2428
      %v2441 = vadd.f32 %v1949, %v2431
      %v2442 = vld [vmem:[%s1950] sm:$0xff]
      %v2443 = vld [vmem:[%s1950 + $0x8] sm:$0xff]
      %v2444 = vld [vmem:[%s1950 + $0x10] sm:$0x11]
      %v2445 = vld [vmem:[%s1950 + $0x18] sm:$0x11]
      %v2446 = vld [vmem:[%s1950 + $0x20] sm:$0xff]
      %v2447 = vld [vmem:[%s1950 + $0x28] sm:$0xff]
      %v2448 = vld [vmem:[%s1950 + $0x30] sm:$0x11]
      %v2449 = vld [vmem:[%s1950 + $0x38] sm:$0x11]
      %v2450 = vld [vmem:[%s1950 + $0x40] sm:$0xff]
      %v2451 = vld [vmem:[%s1950 + $0x48] sm:$0xff]
      %v2452 = vld [vmem:[%s1950 + $0x50] sm:$0x11]
      %v2453 = vld [vmem:[%s1950 + $0x58] sm:$0x11]
      %v2454 = vld [vmem:[%s1950 + $0x60] sm:$0xff]
      %v2455 = vld [vmem:[%s1950 + $0x68] sm:$0xff]
      %v2456 = vld [vmem:[%s1950 + $0x70] sm:$0x11]
      %v2457 = vld [vmem:[%s1950 + $0x78] sm:$0x11]
      %v2458 = vld [vmem:[%s1950 + $0x80] sm:$0xff]
      %v2459 = vld [vmem:[%s1950 + $0x88] sm:$0xff]
      %v2460 = vld [vmem:[%s1950 + $0x90] sm:$0x11]
      %v2461 = vld [vmem:[%s1950 + $0x98] sm:$0x11]
      %v2462 = vld [vmem:[%s1950 + $0xa0] sm:$0xff]
      %v2463 = vld [vmem:[%s1950 + $0xa8] sm:$0xff]
      %v2464 = vld [vmem:[%s1950 + $0xb0] sm:$0x11]
      %v2465 = vld [vmem:[%s1950 + $0xb8] sm:$0x11]
      %v2466 = vld [vmem:[%s1950 + $0xc0] sm:$0xff]
      %v2467 = vld [vmem:[%s1950 + $0xc8] sm:$0xff]
      %v2468 = vld [vmem:[%s1950 + $0xd0] sm:$0x11]
      %v2469 = vld [vmem:[%s1950 + $0xd8] sm:$0x11]
      %v2470 = vld [vmem:[%s1950 + $0xe0] sm:$0xff]
      %v2471 = vld [vmem:[%s1950 + $0xe8] sm:$0xff]
      %v2472 = vld [vmem:[%s1950 + $0xf0] sm:$0x11]
      %v2473 = vld [vmem:[%s1950 + $0xf8] sm:$0x11]
      %v2475 = vshrl.u32 %v2442, 16
      %v2477 = vrot.slane %v2475, 4
      %v2478 = vshll.u32 %v2442, 16
      %v2480 = vrot.slane %v2478, 5
      %v2481 = vor.u32 %v2477, %v2480
      %v2482 = vrot.slane %v2481, 4
      %v2484 = vshll.u32 %v2444, 16
      %v2486 = vrot.slane %v2484, 5
      %v2487 = vsel %vm298, %v2482, %v2486
      %v2489 = vshrl.u32 %v2443, 16
      %v2491 = vrot.slane %v2489, 4
      %v2492 = vshll.u32 %v2443, 16
      %v2494 = vrot.slane %v2492, 5
      %v2495 = vor.u32 %v2491, %v2494
      %v2496 = vrot.slane %v2495, 4
      %v2498 = vshll.u32 %v2445, 16
      %v2500 = vrot.slane %v2498, 5
      %v2501 = vsel %vm298, %v2496, %v2500
      %v2503 = vshrl.u32 %v2446, 16
      %v2505 = vrot.slane %v2503, 4
      %v2506 = vshll.u32 %v2446, 16
      %v2508 = vrot.slane %v2506, 5
      %v2509 = vor.u32 %v2505, %v2508
      %v2510 = vrot.slane %v2509, 4
      %v2512 = vshll.u32 %v2448, 16
      %v2514 = vrot.slane %v2512, 5
      %v2515 = vsel %vm298, %v2510, %v2514
      %v2517 = vshrl.u32 %v2447, 16
      %v2519 = vrot.slane %v2517, 4
      %v2520 = vshll.u32 %v2447, 16
      %v2522 = vrot.slane %v2520, 5
      %v2523 = vor.u32 %v2519, %v2522
      %v2524 = vrot.slane %v2523, 4
      %v2526 = vshll.u32 %v2449, 16
      %v2528 = vrot.slane %v2526, 5
      %v2529 = vsel %vm298, %v2524, %v2528
      %v2531 = vshrl.u32 %v2450, 16
      %v2533 = vrot.slane %v2531, 4
      %v2534 = vshll.u32 %v2450, 16
      %v2536 = vrot.slane %v2534, 5
      %v2537 = vor.u32 %v2533, %v2536
      %v2538 = vrot.slane %v2537, 4
      %v2540 = vshll.u32 %v2452, 16
      %v2542 = vrot.slane %v2540, 5
      %v2543 = vsel %vm298, %v2538, %v2542
      %v2545 = vshrl.u32 %v2451, 16
      %v2547 = vrot.slane %v2545, 4
      %v2548 = vshll.u32 %v2451, 16
      %v2550 = vrot.slane %v2548, 5
      %v2551 = vor.u32 %v2547, %v2550
      %v2552 = vrot.slane %v2551, 4
      %v2554 = vshll.u32 %v2453, 16
      %v2556 = vrot.slane %v2554, 5
      %v2557 = vsel %vm298, %v2552, %v2556
      %v2559 = vshrl.u32 %v2454, 16
      %v2561 = vrot.slane %v2559, 4
      %v2562 = vshll.u32 %v2454, 16
      %v2564 = vrot.slane %v2562, 5
      %v2565 = vor.u32 %v2561, %v2564
      %v2566 = vrot.slane %v2565, 4
      %v2568 = vshll.u32 %v2456, 16
      %v2570 = vrot.slane %v2568, 5
      %v2571 = vsel %vm298, %v2566, %v2570
      %v2573 = vshrl.u32 %v2455, 16
      %v2575 = vrot.slane %v2573, 4
      %v2576 = vshll.u32 %v2455, 16
      %v2578 = vrot.slane %v2576, 5
      %v2579 = vor.u32 %v2575, %v2578
      %v2580 = vrot.slane %v2579, 4
      %v2582 = vshll.u32 %v2457, 16
      %v2584 = vrot.slane %v2582, 5
      %v2585 = vsel %vm298, %v2580, %v2584
      %v2587 = vshrl.u32 %v2458, 16
      %v2589 = vrot.slane %v2587, 4
      %v2590 = vshll.u32 %v2458, 16
      %v2592 = vrot.slane %v2590, 5
      %v2593 = vor.u32 %v2589, %v2592
      %v2594 = vrot.slane %v2593, 4
      %v2596 = vshll.u32 %v2460, 16
      %v2598 = vrot.slane %v2596, 5
      %v2599 = vsel %vm298, %v2594, %v2598
      %v2601 = vshrl.u32 %v2459, 16
      %v2603 = vrot.slane %v2601, 4
      %v2604 = vshll.u32 %v2459, 16
      %v2606 = vrot.slane %v2604, 5
      %v2607 = vor.u32 %v2603, %v2606
      %v2608 = vrot.slane %v2607, 4
      %v2610 = vshll.u32 %v2461, 16
      %v2612 = vrot.slane %v2610, 5
      %v2613 = vsel %vm298, %v2608, %v2612
      %v2615 = vshrl.u32 %v2462, 16
      %v2617 = vrot.slane %v2615, 4
      %v2618 = vshll.u32 %v2462, 16
      %v2620 = vrot.slane %v2618, 5
      %v2621 = vor.u32 %v2617, %v2620
      %v2622 = vrot.slane %v2621, 4
      %v2624 = vshll.u32 %v2464, 16
      %v2626 = vrot.slane %v2624, 5
      %v2627 = vsel %vm298, %v2622, %v2626
      %v2629 = vshrl.u32 %v2463, 16
      %v2631 = vrot.slane %v2629, 4
      %v2632 = vshll.u32 %v2463, 16
      %v2634 = vrot.slane %v2632, 5
      %v2635 = vor.u32 %v2631, %v2634
      %v2636 = vrot.slane %v2635, 4
      %v2638 = vshll.u32 %v2465, 16
      %v2640 = vrot.slane %v2638, 5
      %v2641 = vsel %vm298, %v2636, %v2640
      %v2643 = vshrl.u32 %v2466, 16
      %v2645 = vrot.slane %v2643, 4
      %v2646 = vshll.u32 %v2466, 16
      %v2648 = vrot.slane %v2646, 5
      %v2649 = vor.u32 %v2645, %v2648
      %v2650 = vrot.slane %v2649, 4
      %v2652 = vshll.u32 %v2468, 16
      %v2654 = vrot.slane %v2652, 5
      %v2655 = vsel %vm298, %v2650, %v2654
      %v2657 = vshrl.u32 %v2467, 16
      %v2659 = vrot.slane %v2657, 4
      %v2660 = vshll.u32 %v2467, 16
      %v2662 = vrot.slane %v2660, 5
      %v2663 = vor.u32 %v2659, %v2662
      %v2664 = vrot.slane %v2663, 4
      %v2666 = vshll.u32 %v2469, 16
      %v2668 = vrot.slane %v2666, 5
      %v2669 = vsel %vm298, %v2664, %v2668
      %v2671 = vshrl.u32 %v2470, 16
      %v2673 = vrot.slane %v2671, 4
      %v2674 = vshll.u32 %v2470, 16
      %v2676 = vrot.slane %v2674, 5
      %v2677 = vor.u32 %v2673, %v2676
      %v2678 = vrot.slane %v2677, 4
      %v2680 = vshll.u32 %v2472, 16
      %v2682 = vrot.slane %v2680, 5
      %v2683 = vsel %vm298, %v2678, %v2682
      %v2685 = vshrl.u32 %v2471, 16
      %v2687 = vrot.slane %v2685, 4
      %v2688 = vshll.u32 %v2471, 16
      %v2690 = vrot.slane %v2688, 5
      %v2691 = vor.u32 %v2687, %v2690
      %v2692 = vrot.slane %v2691, 4
      %v2694 = vshll.u32 %v2473, 16
      %v2696 = vrot.slane %v2694, 5
      %v2697 = vsel %vm298, %v2692, %v2696
      %s2698 = scalar_lea.vmem %s1, 1024
      %v2699 = vld [vmem:[%s2698] sm:$0xf]
      %v2700 = vld [vmem:[%s2698 + $0x4] sm:$0xf]
      %v2701 = vld [vmem:[%s2698 + $0x8] sm:$0xf]
      %v2702 = vld [vmem:[%s2698 + $0xc] sm:$0xf]
      %v2703 = vld [vmem:[%s2698 + $0x10] sm:$0xf]
      %v2704 = vld [vmem:[%s2698 + $0x14] sm:$0xf]
      %v2705 = vld [vmem:[%s2698 + $0x18] sm:$0xf]
      %v2706 = vld [vmem:[%s2698 + $0x1c] sm:$0xf]
      %v2707 = vld [vmem:[%s2698 + $0x20] sm:$0xf]
      %v2708 = vld [vmem:[%s2698 + $0x24] sm:$0xf]
      %v2709 = vld [vmem:[%s2698 + $0x28] sm:$0xf]
      %v2710 = vld [vmem:[%s2698 + $0x2c] sm:$0xf]
      %v2711 = vld [vmem:[%s2698 + $0x30] sm:$0xf]
      %v2712 = vld [vmem:[%s2698 + $0x34] sm:$0xf]
      %v2713 = vld [vmem:[%s2698 + $0x38] sm:$0xf]
      %v2714 = vld [vmem:[%s2698 + $0x3c] sm:$0xf]
      %v2715 = vld [vmem:[%s2698 + $0x40] sm:$0xf]
      %v2716 = vld [vmem:[%s2698 + $0x44] sm:$0xf]
      %v2717 = vld [vmem:[%s2698 + $0x48] sm:$0xf]
      %v2718 = vld [vmem:[%s2698 + $0x4c] sm:$0xf]
      %v2719 = vld [vmem:[%s2698 + $0x50] sm:$0xf]
      %v2720 = vld [vmem:[%s2698 + $0x54] sm:$0xf]
      %v2721 = vld [vmem:[%s2698 + $0x58] sm:$0xf]
      %v2722 = vld [vmem:[%s2698 + $0x5c] sm:$0xf]
      %v2723 = vld [vmem:[%s2698 + $0x60] sm:$0xf]
      %v2724 = vld [vmem:[%s2698 + $0x64] sm:$0xf]
      %v2725 = vld [vmem:[%s2698 + $0x68] sm:$0xf]
      %v2726 = vld [vmem:[%s2698 + $0x6c] sm:$0xf]
      %v2727 = vld [vmem:[%s2698 + $0x70] sm:$0xf]
      %v2728 = vld [vmem:[%s2698 + $0x74] sm:$0xf]
      %v2729 = vld [vmem:[%s2698 + $0x78] sm:$0xf]
      %v2730 = vld [vmem:[%s2698 + $0x7c] sm:$0xf]
      %v2731 = vld [vmem:[%s2698 + $0x80] sm:$0xf]
      %v2732 = vld [vmem:[%s2698 + $0x84] sm:$0xf]
      %v2733 = vld [vmem:[%s2698 + $0x88] sm:$0xf]
      %v2734 = vld [vmem:[%s2698 + $0x8c] sm:$0xf]
      %v2735 = vld [vmem:[%s2698 + $0x90] sm:$0xf]
      %v2736 = vld [vmem:[%s2698 + $0x94] sm:$0xf]
      %v2737 = vld [vmem:[%s2698 + $0x98] sm:$0xf]
      %v2738 = vld [vmem:[%s2698 + $0x9c] sm:$0xf]
      %v2739 = vld [vmem:[%s2698 + $0xa0] sm:$0xf]
      %v2740 = vld [vmem:[%s2698 + $0xa4] sm:$0xf]
      %v2741 = vld [vmem:[%s2698 + $0xa8] sm:$0xf]
      %v2742 = vld [vmem:[%s2698 + $0xac] sm:$0xf]
      %v2743 = vld [vmem:[%s2698 + $0xb0] sm:$0xf]
      %v2744 = vld [vmem:[%s2698 + $0xb4] sm:$0xf]
      %v2745 = vld [vmem:[%s2698 + $0xb8] sm:$0xf]
      %v2746 = vld [vmem:[%s2698 + $0xbc] sm:$0xf]
      %v2747 = vld [vmem:[%s2698 + $0xc0] sm:$0xf]
      %v2748 = vld [vmem:[%s2698 + $0xc4] sm:$0xf]
      %v2749 = vld [vmem:[%s2698 + $0xc8] sm:$0xf]
      %v2750 = vld [vmem:[%s2698 + $0xcc] sm:$0xf]
      %v2751 = vld [vmem:[%s2698 + $0xd0] sm:$0xf]
      %v2752 = vld [vmem:[%s2698 + $0xd4] sm:$0xf]
      %v2753 = vld [vmem:[%s2698 + $0xd8] sm:$0xf]
      %v2754 = vld [vmem:[%s2698 + $0xdc] sm:$0xf]
      %v2755 = vld [vmem:[%s2698 + $0xe0] sm:$0xf]
      %v2756 = vld [vmem:[%s2698 + $0xe4] sm:$0xf]
      %v2757 = vld [vmem:[%s2698 + $0xe8] sm:$0xf]
      %v2758 = vld [vmem:[%s2698 + $0xec] sm:$0xf]
      %v2759 = vld [vmem:[%s2698 + $0xf0] sm:$0xf]
      %v2760 = vld [vmem:[%s2698 + $0xf4] sm:$0xf]
      %v2761 = vld [vmem:[%s2698 + $0xf8] sm:$0xf]
      %v2762 = vld [vmem:[%s2698 + $0xfc] sm:$0xf]
      %v2763 = vunpack.c.l.b16 %v2487
      %v2764 = vunpack.c.h.b16 %v2487
      %v2765 = vunpack.c.l.b16 %v2501
      %v2766 = vunpack.c.h.b16 %v2501
      %v2767 = vunpack.c.l.b16 %v2515
      %v2768 = vunpack.c.h.b16 %v2515
      %v2769 = vunpack.c.l.b16 %v2529
      %v2770 = vunpack.c.h.b16 %v2529
      %v2771 = vunpack.c.l.b16 %v2543
      %v2772 = vunpack.c.h.b16 %v2543
      %v2773 = vunpack.c.l.b16 %v2557
      %v2774 = vunpack.c.h.b16 %v2557
      %v2775 = vunpack.c.l.b16 %v2571
      %v2776 = vunpack.c.h.b16 %v2571
      %v2777 = vunpack.c.l.b16 %v2585
      %v2778 = vunpack.c.h.b16 %v2585
      %v2779 = vunpack.c.l.b16 %v2599
      %v2780 = vunpack.c.h.b16 %v2599
      %v2781 = vunpack.c.l.b16 %v2613
      %v2782 = vunpack.c.h.b16 %v2613
      %v2783 = vunpack.c.l.b16 %v2627
      %v2784 = vunpack.c.h.b16 %v2627
      %v2785 = vunpack.c.l.b16 %v2641
      %v2786 = vunpack.c.h.b16 %v2641
      %v2787 = vunpack.c.l.b16 %v2655
      %v2788 = vunpack.c.h.b16 %v2655
      %v2789 = vunpack.c.l.b16 %v2669
      %v2790 = vunpack.c.h.b16 %v2669
      %v2791 = vunpack.c.l.b16 %v2683
      %v2792 = vunpack.c.h.b16 %v2683
      %v2793 = vunpack.c.l.b16 %v2697
      %v2794 = vunpack.c.h.b16 %v2697
      %v2795 = vpack.c.b16 %v2767, %v2763
      %v2796 = vpack.c.b16 %v2768, %v2764
      %v2797 = vpack.c.b16 %v2769, %v2765
      %v2798 = vpack.c.b16 %v2770, %v2766
      %v2799 = vpack.c.b16 %v2775, %v2771
      %v2800 = vpack.c.b16 %v2776, %v2772
      %v2801 = vpack.c.b16 %v2777, %v2773
      %v2802 = vpack.c.b16 %v2778, %v2774
      %v2803 = vpack.c.b16 %v2783, %v2779
      %v2804 = vpack.c.b16 %v2784, %v2780
      %v2805 = vpack.c.b16 %v2785, %v2781
      %v2806 = vpack.c.b16 %v2786, %v2782
      %v2807 = vpack.c.b16 %v2791, %v2787
      %v2808 = vpack.c.b16 %v2792, %v2788
      %v2809 = vpack.c.b16 %v2793, %v2789
      %v2810 = vpack.c.b16 %v2794, %v2790
      %v2891 = vunpack.c.l.b16 %v2699
      %v2892 = vunpack.c.l.b16 %v2700
      %v2893 = vunpack.c.l.b16 %v2701
      %v2894 = vunpack.c.l.b16 %v2702
      %v2895 = vunpack.c.l.b16 %v2703
      %v2896 = vunpack.c.l.b16 %v2704
      %v2897 = vunpack.c.l.b16 %v2705
      %v2898 = vunpack.c.l.b16 %v2706
      %v2899 = vunpack.c.l.b16 %v2707
      %v2900 = vunpack.c.l.b16 %v2708
      %v2901 = vunpack.c.l.b16 %v2709
      %v2902 = vunpack.c.l.b16 %v2710
      %v2903 = vunpack.c.l.b16 %v2711
      %v2904 = vunpack.c.l.b16 %v2712
      %v2905 = vunpack.c.l.b16 %v2713
      %v2906 = vunpack.c.l.b16 %v2714
      %v2907 = vunpack.c.l.b16 %v2715
      %v2908 = vunpack.c.l.b16 %v2716
      %v2909 = vunpack.c.l.b16 %v2717
      %v2910 = vunpack.c.l.b16 %v2718
      %v2911 = vunpack.c.l.b16 %v2719
      %v2912 = vunpack.c.l.b16 %v2720
      %v2913 = vunpack.c.l.b16 %v2721
      %v2914 = vunpack.c.l.b16 %v2722
      %v2915 = vunpack.c.l.b16 %v2723
      %v2916 = vunpack.c.l.b16 %v2724
      %v2917 = vunpack.c.l.b16 %v2725
      %v2918 = vunpack.c.l.b16 %v2726
      %v2919 = vunpack.c.l.b16 %v2727
      %v2920 = vunpack.c.l.b16 %v2728
      %v2921 = vunpack.c.l.b16 %v2729
      %v2922 = vunpack.c.l.b16 %v2730
      %v2923 = vunpack.c.l.b16 %v2731
      %v2924 = vunpack.c.l.b16 %v2732
      %v2925 = vunpack.c.l.b16 %v2733
      %v2926 = vunpack.c.l.b16 %v2734
      %v2927 = vunpack.c.l.b16 %v2735
      %v2928 = vunpack.c.l.b16 %v2736
      %v2929 = vunpack.c.l.b16 %v2737
      %v2930 = vunpack.c.l.b16 %v2738
      %v2931 = vunpack.c.l.b16 %v2739
      %v2932 = vunpack.c.l.b16 %v2740
      %v2933 = vunpack.c.l.b16 %v2741
      %v2934 = vunpack.c.l.b16 %v2742
      %v2935 = vunpack.c.l.b16 %v2743
      %v2936 = vunpack.c.l.b16 %v2744
      %v2937 = vunpack.c.l.b16 %v2745
      %v2938 = vunpack.c.l.b16 %v2746
      %v2939 = vunpack.c.l.b16 %v2747
      %v2940 = vunpack.c.l.b16 %v2748
      %v2941 = vunpack.c.l.b16 %v2749
      %v2942 = vunpack.c.l.b16 %v2750
      %v2943 = vunpack.c.l.b16 %v2751
      %v2944 = vunpack.c.l.b16 %v2752
      %v2945 = vunpack.c.l.b16 %v2753
      %v2946 = vunpack.c.l.b16 %v2754
      %v2947 = vunpack.c.l.b16 %v2755
      %v2948 = vunpack.c.l.b16 %v2756
      %v2949 = vunpack.c.l.b16 %v2757
      %v2950 = vunpack.c.l.b16 %v2758
      %v2951 = vunpack.c.l.b16 %v2759
      %v2952 = vunpack.c.l.b16 %v2760
      %v2953 = vunpack.c.l.b16 %v2761
      %v2954 = vunpack.c.l.b16 %v2762
      %v2955 = vpack.c.b16 %v2892, %v2891
      %v2956 = vpack.c.b16 %v2894, %v2893
      %v2957 = vpack.c.b16 %v2896, %v2895
      %v2958 = vpack.c.b16 %v2898, %v2897
      %v2959 = vpack.c.b16 %v2900, %v2899
      %v2960 = vpack.c.b16 %v2902, %v2901
      %v2961 = vpack.c.b16 %v2904, %v2903
      %v2962 = vpack.c.b16 %v2906, %v2905
      %v2963 = vpack.c.b16 %v2908, %v2907
      %v2964 = vpack.c.b16 %v2910, %v2909
      %v2965 = vpack.c.b16 %v2912, %v2911
      %v2966 = vpack.c.b16 %v2914, %v2913
      %v2967 = vpack.c.b16 %v2916, %v2915
      %v2968 = vpack.c.b16 %v2918, %v2917
      %v2969 = vpack.c.b16 %v2920, %v2919
      %v2970 = vpack.c.b16 %v2922, %v2921
      %v2971 = vpack.c.b16 %v2924, %v2923
      %v2972 = vpack.c.b16 %v2926, %v2925
      %v2973 = vpack.c.b16 %v2928, %v2927
      %v2974 = vpack.c.b16 %v2930, %v2929
      %v2975 = vpack.c.b16 %v2932, %v2931
      %v2976 = vpack.c.b16 %v2934, %v2933
      %v2977 = vpack.c.b16 %v2936, %v2935
      %v2978 = vpack.c.b16 %v2938, %v2937
      %v2979 = vpack.c.b16 %v2940, %v2939
      %v2980 = vpack.c.b16 %v2942, %v2941
      %v2981 = vpack.c.b16 %v2944, %v2943
      %v2982 = vpack.c.b16 %v2946, %v2945
      %v2983 = vpack.c.b16 %v2948, %v2947
      %v2984 = vpack.c.b16 %v2950, %v2949
      %v2985 = vpack.c.b16 %v2952, %v2951
      %v2986 = vpack.c.b16 %v2954, %v2953
      %3019 = vmatprep.subr.bf16.mxu0 0
      %3020 = vmatpush1.bf16.msra.mxu0 %v2962
      %3021 = vmatprep.subr.bf16.mxu0 0
      %3022 = vmatpush1.bf16.msra.mxu0 %v2961
      %3023 = vmatprep.subr.bf16.mxu0 0
      %3024 = vmatpush1.bf16.msra.mxu0 %v2960
      %3025 = vmatprep.subr.bf16.mxu0 0
      %3026 = vmatpush1.bf16.msra.mxu0 %v2959
      %3027 = vmatprep.subr.bf16.mxu0 0
      %3028 = vmatpush1.bf16.msra.mxu0 %v2958
      %3029 = vmatprep.subr.bf16.mxu0 0
      %3030 = vmatpush1.bf16.msra.mxu0 %v2957
      %3031 = vmatprep.subr.bf16.mxu0 0
      %3032 = vmatpush1.bf16.msra.mxu0 %v2956
      %3033 = vmatprep.subr.bf16.mxu0 0
      %3034 = vmatpush1.bf16.msra.mxu0 %v2955
      %3035 = vmatprep.subr.bf16.mxu0 0
      %3036 = vmatpush2.bf16.msra.mxu0 %v2970
      %3037 = vmatprep.subr.bf16.mxu0 0
      %3038 = vmatpush2.bf16.msra.mxu0 %v2969
      %3039 = vmatprep.subr.bf16.mxu0 0
      %3040 = vmatpush2.bf16.msra.mxu0 %v2968
      %3041 = vmatprep.subr.bf16.mxu0 0
      %3042 = vmatpush2.bf16.msra.mxu0 %v2967
      %3043 = vmatprep.subr.bf16.mxu0 0
      %3044 = vmatpush2.bf16.msra.mxu0 %v2966
      %3045 = vmatprep.subr.bf16.mxu0 0
      %3046 = vmatpush2.bf16.msra.mxu0 %v2965
      %3047 = vmatprep.subr.bf16.mxu0 0
      %3048 = vmatpush2.bf16.msra.mxu0 %v2964
      %3049 = vmatprep.subr.bf16.mxu0 0
      %3050 = vmatpush2.bf16.msra.mxu0 %v2963
      %3051 = vmatprep.mubr.bf16.mxu0 %v2796
      %3052 = vmatmul.mubr.bf16.gmra.mxu0 %v2795
      %v3053 = vpop.f32.mrf.mxu0
      %v3054 = vadd.f32 0.0, %v3053
      %v3055 = vpop.f32.mrf.mxu0
      %v3056 = vpop.f32.mrf.mxu0
      %v3057 = vadd.f32 0.0, %v3056
      %v3058 = vpop.f32.mrf.mxu0
      %3059 = vmatprep.mubr.bf16.mxu0 %v2800
      %3060 = vmatmul.mubr.bf16.gmra.mxu0 %v2799
      %v3061 = vpop.f32.mrf.mxu0
      %v3062 = vadd.f32 0.0, %v3061
      %v3063 = vpop.f32.mrf.mxu0
      %v3064 = vpop.f32.mrf.mxu0
      %v3065 = vadd.f32 0.0, %v3064
      %v3066 = vpop.f32.mrf.mxu0
      %3067 = vmatprep.mubr.bf16.mxu0 %v2804
      %3068 = vmatmul.mubr.bf16.gmra.mxu0 %v2803
      %v3069 = vpop.f32.mrf.mxu0
      %v3070 = vadd.f32 0.0, %v3069
      %v3071 = vpop.f32.mrf.mxu0
      %v3072 = vpop.f32.mrf.mxu0
      %v3073 = vadd.f32 0.0, %v3072
      %v3074 = vpop.f32.mrf.mxu0
      %3075 = vmatprep.mubr.bf16.mxu0 %v2808
      %3076 = vmatmul.mubr.bf16.gmra.mxu0 %v2807
      %v3077 = vpop.f32.mrf.mxu0
      %v3078 = vadd.f32 0.0, %v3077
      %v3079 = vpop.f32.mrf.mxu0
      %v3080 = vpop.f32.mrf.mxu0
      %v3081 = vadd.f32 0.0, %v3080
      %v3082 = vpop.f32.mrf.mxu0
      %3083 = vdwg.mxu0
      %3084 = vmatprep.subr.bf16.mxu0 0
      %3085 = vmatpush1.bf16.msra.mxu0 %v2978
      %3086 = vmatprep.subr.bf16.mxu0 0
      %3087 = vmatpush1.bf16.msra.mxu0 %v2977
      %3088 = vmatprep.subr.bf16.mxu0 0
      %3089 = vmatpush1.bf16.msra.mxu0 %v2976
      %3090 = vmatprep.subr.bf16.mxu0 0
      %3091 = vmatpush1.bf16.msra.mxu0 %v2975
      %3092 = vmatprep.subr.bf16.mxu0 0
      %3093 = vmatpush1.bf16.msra.mxu0 %v2974
      %3094 = vmatprep.subr.bf16.mxu0 0
      %3095 = vmatpush1.bf16.msra.mxu0 %v2973
      %3096 = vmatprep.subr.bf16.mxu0 0
      %3097 = vmatpush1.bf16.msra.mxu0 %v2972
      %3098 = vmatprep.subr.bf16.mxu0 0
      %3099 = vmatpush1.bf16.msra.mxu0 %v2971
      %3100 = vmatprep.subr.bf16.mxu0 0
      %3101 = vmatpush2.bf16.msra.mxu0 %v2986
      %3102 = vmatprep.subr.bf16.mxu0 0
      %3103 = vmatpush2.bf16.msra.mxu0 %v2985
      %3104 = vmatprep.subr.bf16.mxu0 0
      %3105 = vmatpush2.bf16.msra.mxu0 %v2984
      %3106 = vmatprep.subr.bf16.mxu0 0
      %3107 = vmatpush2.bf16.msra.mxu0 %v2983
      %3108 = vmatprep.subr.bf16.mxu0 0
      %3109 = vmatpush2.bf16.msra.mxu0 %v2982
      %3110 = vmatprep.subr.bf16.mxu0 0
      %3111 = vmatpush2.bf16.msra.mxu0 %v2981
      %3112 = vmatprep.subr.bf16.mxu0 0
      %3113 = vmatpush2.bf16.msra.mxu0 %v2980
      %3114 = vmatprep.subr.bf16.mxu0 0
      %3115 = vmatpush2.bf16.msra.mxu0 %v2979
      %3116 = vmatprep.mubr.bf16.mxu0 %v2798
      %3117 = vmatmul.mubr.bf16.gmra.mxu0 %v2797
      %v3118 = vpop.f32.mrf.mxu0
      %v3119 = vadd.f32 %v3054, %v3118
      %v3120 = vpop.f32.mrf.mxu0
      %v3121 = vpop.f32.mrf.mxu0
      %v3122 = vadd.f32 %v3057, %v3121
      %v3123 = vpop.f32.mrf.mxu0
      %3124 = vmatprep.mubr.bf16.mxu0 %v2802
      %3125 = vmatmul.mubr.bf16.gmra.mxu0 %v2801
      %v3126 = vpop.f32.mrf.mxu0
      %v3127 = vadd.f32 %v3062, %v3126
      %v3128 = vpop.f32.mrf.mxu0
      %v3129 = vpop.f32.mrf.mxu0
      %v3130 = vadd.f32 %v3065, %v3129
      %v3131 = vpop.f32.mrf.mxu0
      %3132 = vmatprep.mubr.bf16.mxu0 %v2806
      %3133 = vmatmul.mubr.bf16.gmra.mxu0 %v2805
      %v3134 = vpop.f32.mrf.mxu0
      %v3135 = vadd.f32 %v3070, %v3134
      %v3136 = vpop.f32.mrf.mxu0
      %v3137 = vpop.f32.mrf.mxu0
      %v3138 = vadd.f32 %v3073, %v3137
      %v3139 = vpop.f32.mrf.mxu0
      %3140 = vmatprep.mubr.bf16.mxu0 %v2810
      %3141 = vmatmul.mubr.bf16.gmra.mxu0 %v2809
      %v3142 = vpop.f32.mrf.mxu0
      %v3143 = vadd.f32 %v3078, %v3142
      %v3144 = vpop.f32.mrf.mxu0
      %v3145 = vpop.f32.mrf.mxu0
      %v3146 = vadd.f32 %v3081, %v3145
      %v3147 = vpop.f32.mrf.mxu0
      %3148 = vdwg.mxu0
      %v3149 = vadd.f32 %v2434, %v3119
      %v3150 = vadd.f32 %v2435, %v3122
      %v3151 = vadd.f32 %v2436, %v3127
      %v3152 = vadd.f32 %v2437, %v3130
      %v3153 = vadd.f32 %v2438, %v3135
      %v3154 = vadd.f32 %v2439, %v3138
      %v3155 = vadd.f32 %v2440, %v3143
      %v3156 = vadd.f32 %v2441, %v3146
      %v3157 = vld [vmem:[%s1950] sm:$0xee]
      %v3158 = vld [vmem:[%s1950 + $0x8] sm:$0xee]
      %v3159 = vld [vmem:[%s1950 + $0x20] sm:$0xee]
      %v3160 = vld [vmem:[%s1950 + $0x28] sm:$0xee]
      %v3161 = vld [vmem:[%s1950 + $0x40] sm:$0xee]
      %v3162 = vld [vmem:[%s1950 + $0x48] sm:$0xee]
      %v3163 = vld [vmem:[%s1950 + $0x60] sm:$0xee]
      %v3164 = vld [vmem:[%s1950 + $0x68] sm:$0xee]
      %v3165 = vld [vmem:[%s1950 + $0x80] sm:$0xee]
      %v3166 = vld [vmem:[%s1950 + $0x88] sm:$0xee]
      %v3167 = vld [vmem:[%s1950 + $0xa0] sm:$0xee]
      %v3168 = vld [vmem:[%s1950 + $0xa8] sm:$0xee]
      %v3169 = vld [vmem:[%s1950 + $0xc0] sm:$0xee]
      %v3170 = vld [vmem:[%s1950 + $0xc8] sm:$0xee]
      %v3171 = vld [vmem:[%s1950 + $0xe0] sm:$0xee]
      %v3172 = vld [vmem:[%s1950 + $0xe8] sm:$0xee]
      %v3205 = vrot.slane %v3157, 5
      %v3206 = vrot.slane %v3205, 4
      %v3207 = vrot.slane %v2444, 5
      %v3208 = vsel %vm1426, %v3206, %v3207
      %v3209 = vrot.slane %v3158, 5
      %v3210 = vrot.slane %v3209, 4
      %v3211 = vrot.slane %v2445, 5
      %v3212 = vsel %vm1426, %v3210, %v3211
      %v3213 = vrot.slane %v3159, 5
      %v3214 = vrot.slane %v3213, 4
      %v3215 = vrot.slane %v2448, 5
      %v3216 = vsel %vm1426, %v3214, %v3215
      %v3217 = vrot.slane %v3160, 5
      %v3218 = vrot.slane %v3217, 4
      %v3219 = vrot.slane %v2449, 5
      %v3220 = vsel %vm1426, %v3218, %v3219
      %v3221 = vrot.slane %v3161, 5
      %v3222 = vrot.slane %v3221, 4
      %v3223 = vrot.slane %v2452, 5
      %v3224 = vsel %vm1426, %v3222, %v3223
      %v3225 = vrot.slane %v3162, 5
      %v3226 = vrot.slane %v3225, 4
      %v3227 = vrot.slane %v2453, 5
      %v3228 = vsel %vm1426, %v3226, %v3227
      %v3229 = vrot.slane %v3163, 5
      %v3230 = vrot.slane %v3229, 4
      %v3231 = vrot.slane %v2456, 5
      %v3232 = vsel %vm1426, %v3230, %v3231
      %v3233 = vrot.slane %v3164, 5
      %v3234 = vrot.slane %v3233, 4
      %v3235 = vrot.slane %v2457, 5
      %v3236 = vsel %vm1426, %v3234, %v3235
      %v3237 = vrot.slane %v3165, 5
      %v3238 = vrot.slane %v3237, 4
      %v3239 = vrot.slane %v2460, 5
      %v3240 = vsel %vm1426, %v3238, %v3239
      %v3241 = vrot.slane %v3166, 5
      %v3242 = vrot.slane %v3241, 4
      %v3243 = vrot.slane %v2461, 5
      %v3244 = vsel %vm1426, %v3242, %v3243
      %v3245 = vrot.slane %v3167, 5
      %v3246 = vrot.slane %v3245, 4
      %v3247 = vrot.slane %v2464, 5
      %v3248 = vsel %vm1426, %v3246, %v3247
      %v3249 = vrot.slane %v3168, 5
      %v3250 = vrot.slane %v3249, 4
      %v3251 = vrot.slane %v2465, 5
      %v3252 = vsel %vm1426, %v3250, %v3251
      %v3253 = vrot.slane %v3169, 5
      %v3254 = vrot.slane %v3253, 4
      %v3255 = vrot.slane %v2468, 5
      %v3256 = vsel %vm1426, %v3254, %v3255
      %v3257 = vrot.slane %v3170, 5
      %v3258 = vrot.slane %v3257, 4
      %v3259 = vrot.slane %v2469, 5
      %v3260 = vsel %vm1426, %v3258, %v3259
      %v3261 = vrot.slane %v3171, 5
      %v3262 = vrot.slane %v3261, 4
      %v3263 = vrot.slane %v2472, 5
      %v3264 = vsel %vm1426, %v3262, %v3263
      %v3265 = vrot.slane %v3172, 5
      %v3266 = vrot.slane %v3265, 4
      %v3267 = vrot.slane %v2473, 5
      %v3268 = vsel %vm1426, %v3266, %v3267
      %s3269 = scalar_lea.vmem %s1, 1280
      %v3270 = vld [vmem:[%s3269] sm:$0xf]
      %v3271 = vld [vmem:[%s3269 + $0x4] sm:$0xf]
      %v3272 = vld [vmem:[%s3269 + $0x8] sm:$0xf]
      %v3273 = vld [vmem:[%s3269 + $0xc] sm:$0xf]
      %v3274 = vld [vmem:[%s3269 + $0x10] sm:$0xf]
      %v3275 = vld [vmem:[%s3269 + $0x14] sm:$0xf]
      %v3276 = vld [vmem:[%s3269 + $0x18] sm:$0xf]
      %v3277 = vld [vmem:[%s3269 + $0x1c] sm:$0xf]
      %v3278 = vld [vmem:[%s3269 + $0x20] sm:$0xf]
      %v3279 = vld [vmem:[%s3269 + $0x24] sm:$0xf]
      %v3280 = vld [vmem:[%s3269 + $0x28] sm:$0xf]
      %v3281 = vld [vmem:[%s3269 + $0x2c] sm:$0xf]
      %v3282 = vld [vmem:[%s3269 + $0x30] sm:$0xf]
      %v3283 = vld [vmem:[%s3269 + $0x34] sm:$0xf]
      %v3284 = vld [vmem:[%s3269 + $0x38] sm:$0xf]
      %v3285 = vld [vmem:[%s3269 + $0x3c] sm:$0xf]
      %v3286 = vld [vmem:[%s3269 + $0x40] sm:$0xf]
      %v3287 = vld [vmem:[%s3269 + $0x44] sm:$0xf]
      %v3288 = vld [vmem:[%s3269 + $0x48] sm:$0xf]
      %v3289 = vld [vmem:[%s3269 + $0x4c] sm:$0xf]
      %v3290 = vld [vmem:[%s3269 + $0x50] sm:$0xf]
      %v3291 = vld [vmem:[%s3269 + $0x54] sm:$0xf]
      %v3292 = vld [vmem:[%s3269 + $0x58] sm:$0xf]
      %v3293 = vld [vmem:[%s3269 + $0x5c] sm:$0xf]
      %v3294 = vld [vmem:[%s3269 + $0x60] sm:$0xf]
      %v3295 = vld [vmem:[%s3269 + $0x64] sm:$0xf]
      %v3296 = vld [vmem:[%s3269 + $0x68] sm:$0xf]
      %v3297 = vld [vmem:[%s3269 + $0x6c] sm:$0xf]
      %v3298 = vld [vmem:[%s3269 + $0x70] sm:$0xf]
      %v3299 = vld [vmem:[%s3269 + $0x74] sm:$0xf]
      %v3300 = vld [vmem:[%s3269 + $0x78] sm:$0xf]
      %v3301 = vld [vmem:[%s3269 + $0x7c] sm:$0xf]
      %v3302 = vld [vmem:[%s3269 + $0x80] sm:$0xf]
      %v3303 = vld [vmem:[%s3269 + $0x84] sm:$0xf]
      %v3304 = vld [vmem:[%s3269 + $0x88] sm:$0xf]
      %v3305 = vld [vmem:[%s3269 + $0x8c] sm:$0xf]
      %v3306 = vld [vmem:[%s3269 + $0x90] sm:$0xf]
      %v3307 = vld [vmem:[%s3269 + $0x94] sm:$0xf]
      %v3308 = vld [vmem:[%s3269 + $0x98] sm:$0xf]
      %v3309 = vld [vmem:[%s3269 + $0x9c] sm:$0xf]
      %v3310 = vld [vmem:[%s3269 + $0xa0] sm:$0xf]
      %v3311 = vld [vmem:[%s3269 + $0xa4] sm:$0xf]
      %v3312 = vld [vmem:[%s3269 + $0xa8] sm:$0xf]
      %v3313 = vld [vmem:[%s3269 + $0xac] sm:$0xf]
      %v3314 = vld [vmem:[%s3269 + $0xb0] sm:$0xf]
      %v3315 = vld [vmem:[%s3269 + $0xb4] sm:$0xf]
      %v3316 = vld [vmem:[%s3269 + $0xb8] sm:$0xf]
      %v3317 = vld [vmem:[%s3269 + $0xbc] sm:$0xf]
      %v3318 = vld [vmem:[%s3269 + $0xc0] sm:$0xf]
      %v3319 = vld [vmem:[%s3269 + $0xc4] sm:$0xf]
      %v3320 = vld [vmem:[%s3269 + $0xc8] sm:$0xf]
      %v3321 = vld [vmem:[%s3269 + $0xcc] sm:$0xf]
      %v3322 = vld [vmem:[%s3269 + $0xd0] sm:$0xf]
      %v3323 = vld [vmem:[%s3269 + $0xd4] sm:$0xf]
      %v3324 = vld [vmem:[%s3269 + $0xd8] sm:$0xf]
      %v3325 = vld [vmem:[%s3269 + $0xdc] sm:$0xf]
      %v3326 = vld [vmem:[%s3269 + $0xe0] sm:$0xf]
      %v3327 = vld [vmem:[%s3269 + $0xe4] sm:$0xf]
      %v3328 = vld [vmem:[%s3269 + $0xe8] sm:$0xf]
      %v3329 = vld [vmem:[%s3269 + $0xec] sm:$0xf]
      %v3330 = vld [vmem:[%s3269 + $0xf0] sm:$0xf]
      %v3331 = vld [vmem:[%s3269 + $0xf4] sm:$0xf]
      %v3332 = vld [vmem:[%s3269 + $0xf8] sm:$0xf]
      %v3333 = vld [vmem:[%s3269 + $0xfc] sm:$0xf]
      %v3334 = vunpack.c.l.b16 %v3208
      %v3335 = vunpack.c.h.b16 %v3208
      %v3336 = vunpack.c.l.b16 %v3212
      %v3337 = vunpack.c.h.b16 %v3212
      %v3338 = vunpack.c.l.b16 %v3216
      %v3339 = vunpack.c.h.b16 %v3216
      %v3340 = vunpack.c.l.b16 %v3220
      %v3341 = vunpack.c.h.b16 %v3220
      %v3342 = vunpack.c.l.b16 %v3224
      %v3343 = vunpack.c.h.b16 %v3224
      %v3344 = vunpack.c.l.b16 %v3228
      %v3345 = vunpack.c.h.b16 %v3228
      %v3346 = vunpack.c.l.b16 %v3232
      %v3347 = vunpack.c.h.b16 %v3232
      %v3348 = vunpack.c.l.b16 %v3236
      %v3349 = vunpack.c.h.b16 %v3236
      %v3350 = vunpack.c.l.b16 %v3240
      %v3351 = vunpack.c.h.b16 %v3240
      %v3352 = vunpack.c.l.b16 %v3244
      %v3353 = vunpack.c.h.b16 %v3244
      %v3354 = vunpack.c.l.b16 %v3248
      %v3355 = vunpack.c.h.b16 %v3248
      %v3356 = vunpack.c.l.b16 %v3252
      %v3357 = vunpack.c.h.b16 %v3252
      %v3358 = vunpack.c.l.b16 %v3256
      %v3359 = vunpack.c.h.b16 %v3256
      %v3360 = vunpack.c.l.b16 %v3260
      %v3361 = vunpack.c.h.b16 %v3260
      %v3362 = vunpack.c.l.b16 %v3264
      %v3363 = vunpack.c.h.b16 %v3264
      %v3364 = vunpack.c.l.b16 %v3268
      %v3365 = vunpack.c.h.b16 %v3268
      %v3366 = vpack.c.b16 %v3338, %v3334
      %v3367 = vpack.c.b16 %v3339, %v3335
      %v3368 = vpack.c.b16 %v3340, %v3336
      %v3369 = vpack.c.b16 %v3341, %v3337
      %v3370 = vpack.c.b16 %v3346, %v3342
      %v3371 = vpack.c.b16 %v3347, %v3343
      %v3372 = vpack.c.b16 %v3348, %v3344
      %v3373 = vpack.c.b16 %v3349, %v3345
      %v3374 = vpack.c.b16 %v3354, %v3350
      %v3375 = vpack.c.b16 %v3355, %v3351
      %v3376 = vpack.c.b16 %v3356, %v3352
      %v3377 = vpack.c.b16 %v3357, %v3353
      %v3378 = vpack.c.b16 %v3362, %v3358
      %v3379 = vpack.c.b16 %v3363, %v3359
      %v3380 = vpack.c.b16 %v3364, %v3360
      %v3381 = vpack.c.b16 %v3365, %v3361
      %v3462 = vunpack.c.l.b16 %v3270
      %v3463 = vunpack.c.l.b16 %v3271
      %v3464 = vunpack.c.l.b16 %v3272
      %v3465 = vunpack.c.l.b16 %v3273
      %v3466 = vunpack.c.l.b16 %v3274
      %v3467 = vunpack.c.l.b16 %v3275
      %v3468 = vunpack.c.l.b16 %v3276
      %v3469 = vunpack.c.l.b16 %v3277
      %v3470 = vunpack.c.l.b16 %v3278
      %v3471 = vunpack.c.l.b16 %v3279
      %v3472 = vunpack.c.l.b16 %v3280
      %v3473 = vunpack.c.l.b16 %v3281
      %v3474 = vunpack.c.l.b16 %v3282
      %v3475 = vunpack.c.l.b16 %v3283
      %v3476 = vunpack.c.l.b16 %v3284
      %v3477 = vunpack.c.l.b16 %v3285
      %v3478 = vunpack.c.l.b16 %v3286
      %v3479 = vunpack.c.l.b16 %v3287
      %v3480 = vunpack.c.l.b16 %v3288
      %v3481 = vunpack.c.l.b16 %v3289
      %v3482 = vunpack.c.l.b16 %v3290
      %v3483 = vunpack.c.l.b16 %v3291
      %v3484 = vunpack.c.l.b16 %v3292
      %v3485 = vunpack.c.l.b16 %v3293
      %v3486 = vunpack.c.l.b16 %v3294
      %v3487 = vunpack.c.l.b16 %v3295
      %v3488 = vunpack.c.l.b16 %v3296
      %v3489 = vunpack.c.l.b16 %v3297
      %v3490 = vunpack.c.l.b16 %v3298
      %v3491 = vunpack.c.l.b16 %v3299
      %v3492 = vunpack.c.l.b16 %v3300
      %v3493 = vunpack.c.l.b16 %v3301
      %v3494 = vunpack.c.l.b16 %v3302
      %v3495 = vunpack.c.l.b16 %v3303
      %v3496 = vunpack.c.l.b16 %v3304
      %v3497 = vunpack.c.l.b16 %v3305
      %v3498 = vunpack.c.l.b16 %v3306
      %v3499 = vunpack.c.l.b16 %v3307
      %v3500 = vunpack.c.l.b16 %v3308
      %v3501 = vunpack.c.l.b16 %v3309
      %v3502 = vunpack.c.l.b16 %v3310
      %v3503 = vunpack.c.l.b16 %v3311
      %v3504 = vunpack.c.l.b16 %v3312
      %v3505 = vunpack.c.l.b16 %v3313
      %v3506 = vunpack.c.l.b16 %v3314
      %v3507 = vunpack.c.l.b16 %v3315
      %v3508 = vunpack.c.l.b16 %v3316
      %v3509 = vunpack.c.l.b16 %v3317
      %v3510 = vunpack.c.l.b16 %v3318
      %v3511 = vunpack.c.l.b16 %v3319
      %v3512 = vunpack.c.l.b16 %v3320
      %v3513 = vunpack.c.l.b16 %v3321
      %v3514 = vunpack.c.l.b16 %v3322
      %v3515 = vunpack.c.l.b16 %v3323
      %v3516 = vunpack.c.l.b16 %v3324
      %v3517 = vunpack.c.l.b16 %v3325
      %v3518 = vunpack.c.l.b16 %v3326
      %v3519 = vunpack.c.l.b16 %v3327
      %v3520 = vunpack.c.l.b16 %v3328
      %v3521 = vunpack.c.l.b16 %v3329
      %v3522 = vunpack.c.l.b16 %v3330
      %v3523 = vunpack.c.l.b16 %v3331
      %v3524 = vunpack.c.l.b16 %v3332
      %v3525 = vunpack.c.l.b16 %v3333
      %v3526 = vpack.c.b16 %v3463, %v3462
      %v3527 = vpack.c.b16 %v3465, %v3464
      %v3528 = vpack.c.b16 %v3467, %v3466
      %v3529 = vpack.c.b16 %v3469, %v3468
      %v3530 = vpack.c.b16 %v3471, %v3470
      %v3531 = vpack.c.b16 %v3473, %v3472
      %v3532 = vpack.c.b16 %v3475, %v3474
      %v3533 = vpack.c.b16 %v3477, %v3476
      %v3534 = vpack.c.b16 %v3479, %v3478
      %v3535 = vpack.c.b16 %v3481, %v3480
      %v3536 = vpack.c.b16 %v3483, %v3482
      %v3537 = vpack.c.b16 %v3485, %v3484
      %v3538 = vpack.c.b16 %v3487, %v3486
      %v3539 = vpack.c.b16 %v3489, %v3488
      %v3540 = vpack.c.b16 %v3491, %v3490
      %v3541 = vpack.c.b16 %v3493, %v3492
      %v3542 = vpack.c.b16 %v3495, %v3494
      %v3543 = vpack.c.b16 %v3497, %v3496
      %v3544 = vpack.c.b16 %v3499, %v3498
      %v3545 = vpack.c.b16 %v3501, %v3500
      %v3546 = vpack.c.b16 %v3503, %v3502
      %v3547 = vpack.c.b16 %v3505, %v3504
      %v3548 = vpack.c.b16 %v3507, %v3506
      %v3549 = vpack.c.b16 %v3509, %v3508
      %v3550 = vpack.c.b16 %v3511, %v3510
      %v3551 = vpack.c.b16 %v3513, %v3512
      %v3552 = vpack.c.b16 %v3515, %v3514
      %v3553 = vpack.c.b16 %v3517, %v3516
      %v3554 = vpack.c.b16 %v3519, %v3518
      %v3555 = vpack.c.b16 %v3521, %v3520
      %v3556 = vpack.c.b16 %v3523, %v3522
      %v3557 = vpack.c.b16 %v3525, %v3524
      %3590 = vmatprep.subr.bf16.mxu0 0
      %3591 = vmatpush1.bf16.msra.mxu0 %v3533
      %3592 = vmatprep.subr.bf16.mxu0 0
      %3593 = vmatpush1.bf16.msra.mxu0 %v3532
      %3594 = vmatprep.subr.bf16.mxu0 0
      %3595 = vmatpush1.bf16.msra.mxu0 %v3531
      %3596 = vmatprep.subr.bf16.mxu0 0
      %3597 = vmatpush1.bf16.msra.mxu0 %v3530
      %3598 = vmatprep.subr.bf16.mxu0 0
      %3599 = vmatpush1.bf16.msra.mxu0 %v3529
      %3600 = vmatprep.subr.bf16.mxu0 0
      %3601 = vmatpush1.bf16.msra.mxu0 %v3528
      %3602 = vmatprep.subr.bf16.mxu0 0
      %3603 = vmatpush1.bf16.msra.mxu0 %v3527
      %3604 = vmatprep.subr.bf16.mxu0 0
      %3605 = vmatpush1.bf16.msra.mxu0 %v3526
      %3606 = vmatprep.subr.bf16.mxu0 0
      %3607 = vmatpush2.bf16.msra.mxu0 %v3541
      %3608 = vmatprep.subr.bf16.mxu0 0
      %3609 = vmatpush2.bf16.msra.mxu0 %v3540
      %3610 = vmatprep.subr.bf16.mxu0 0
      %3611 = vmatpush2.bf16.msra.mxu0 %v3539
      %3612 = vmatprep.subr.bf16.mxu0 0
      %3613 = vmatpush2.bf16.msra.mxu0 %v3538
      %3614 = vmatprep.subr.bf16.mxu0 0
      %3615 = vmatpush2.bf16.msra.mxu0 %v3537
      %3616 = vmatprep.subr.bf16.mxu0 0
      %3617 = vmatpush2.bf16.msra.mxu0 %v3536
      %3618 = vmatprep.subr.bf16.mxu0 0
      %3619 = vmatpush2.bf16.msra.mxu0 %v3535
      %3620 = vmatprep.subr.bf16.mxu0 0
      %3621 = vmatpush2.bf16.msra.mxu0 %v3534
      %3622 = vmatprep.mubr.bf16.mxu0 %v3367
      %3623 = vmatmul.mubr.bf16.gmra.mxu0 %v3366
      %v3624 = vpop.f32.mrf.mxu0
      %v3625 = vadd.f32 0.0, %v3624
      %v3626 = vpop.f32.mrf.mxu0
      %v3627 = vpop.f32.mrf.mxu0
      %v3628 = vadd.f32 0.0, %v3627
      %v3629 = vpop.f32.mrf.mxu0
      %3630 = vmatprep.mubr.bf16.mxu0 %v3371
      %3631 = vmatmul.mubr.bf16.gmra.mxu0 %v3370
      %v3632 = vpop.f32.mrf.mxu0
      %v3633 = vadd.f32 0.0, %v3632
      %v3634 = vpop.f32.mrf.mxu0
      %v3635 = vpop.f32.mrf.mxu0
      %v3636 = vadd.f32 0.0, %v3635
      %v3637 = vpop.f32.mrf.mxu0
      %3638 = vmatprep.mubr.bf16.mxu0 %v3375
      %3639 = vmatmul.mubr.bf16.gmra.mxu0 %v3374
      %v3640 = vpop.f32.mrf.mxu0
      %v3641 = vadd.f32 0.0, %v3640
      %v3642 = vpop.f32.mrf.mxu0
      %v3643 = vpop.f32.mrf.mxu0
      %v3644 = vadd.f32 0.0, %v3643
      %v3645 = vpop.f32.mrf.mxu0
      %3646 = vmatprep.mubr.bf16.mxu0 %v3379
      %3647 = vmatmul.mubr.bf16.gmra.mxu0 %v3378
      %v3648 = vpop.f32.mrf.mxu0
      %v3649 = vadd.f32 0.0, %v3648
      %v3650 = vpop.f32.mrf.mxu0
      %v3651 = vpop.f32.mrf.mxu0
      %v3652 = vadd.f32 0.0, %v3651
      %v3653 = vpop.f32.mrf.mxu0
      %3654 = vdwg.mxu0
      %3655 = vmatprep.subr.bf16.mxu0 0
      %3656 = vmatpush1.bf16.msra.mxu0 %v3549
      %3657 = vmatprep.subr.bf16.mxu0 0
      %3658 = vmatpush1.bf16.msra.mxu0 %v3548
      %3659 = vmatprep.subr.bf16.mxu0 0
      %3660 = vmatpush1.bf16.msra.mxu0 %v3547
      %3661 = vmatprep.subr.bf16.mxu0 0
      %3662 = vmatpush1.bf16.msra.mxu0 %v3546
      %3663 = vmatprep.subr.bf16.mxu0 0
      %3664 = vmatpush1.bf16.msra.mxu0 %v3545
      %3665 = vmatprep.subr.bf16.mxu0 0
      %3666 = vmatpush1.bf16.msra.mxu0 %v3544
      %3667 = vmatprep.subr.bf16.mxu0 0
      %3668 = vmatpush1.bf16.msra.mxu0 %v3543
      %3669 = vmatprep.subr.bf16.mxu0 0
      %3670 = vmatpush1.bf16.msra.mxu0 %v3542
      %3671 = vmatprep.subr.bf16.mxu0 0
      %3672 = vmatpush2.bf16.msra.mxu0 %v3557
      %3673 = vmatprep.subr.bf16.mxu0 0
      %3674 = vmatpush2.bf16.msra.mxu0 %v3556
      %3675 = vmatprep.subr.bf16.mxu0 0
      %3676 = vmatpush2.bf16.msra.mxu0 %v3555
      %3677 = vmatprep.subr.bf16.mxu0 0
      %3678 = vmatpush2.bf16.msra.mxu0 %v3554
      %3679 = vmatprep.subr.bf16.mxu0 0
      %3680 = vmatpush2.bf16.msra.mxu0 %v3553
      %3681 = vmatprep.subr.bf16.mxu0 0
      %3682 = vmatpush2.bf16.msra.mxu0 %v3552
      %3683 = vmatprep.subr.bf16.mxu0 0
      %3684 = vmatpush2.bf16.msra.mxu0 %v3551
      %3685 = vmatprep.subr.bf16.mxu0 0
      %3686 = vmatpush2.bf16.msra.mxu0 %v3550
      %3687 = vmatprep.mubr.bf16.mxu0 %v3369
      %3688 = vmatmul.mubr.bf16.gmra.mxu0 %v3368
      %v3689 = vpop.f32.mrf.mxu0
      %v3690 = vadd.f32 %v3625, %v3689
      %v3691 = vpop.f32.mrf.mxu0
      %v3692 = vpop.f32.mrf.mxu0
      %v3693 = vadd.f32 %v3628, %v3692
      %v3694 = vpop.f32.mrf.mxu0
      %3695 = vmatprep.mubr.bf16.mxu0 %v3373
      %3696 = vmatmul.mubr.bf16.gmra.mxu0 %v3372
      %v3697 = vpop.f32.mrf.mxu0
      %v3698 = vadd.f32 %v3633, %v3697
      %v3699 = vpop.f32.mrf.mxu0
      %v3700 = vpop.f32.mrf.mxu0
      %v3701 = vadd.f32 %v3636, %v3700
      %v3702 = vpop.f32.mrf.mxu0
      %3703 = vmatprep.mubr.bf16.mxu0 %v3377
      %3704 = vmatmul.mubr.bf16.gmra.mxu0 %v3376
      %v3705 = vpop.f32.mrf.mxu0
      %v3706 = vadd.f32 %v3641, %v3705
      %v3707 = vpop.f32.mrf.mxu0
      %v3708 = vpop.f32.mrf.mxu0
      %v3709 = vadd.f32 %v3644, %v3708
      %v3710 = vpop.f32.mrf.mxu0
      %3711 = vmatprep.mubr.bf16.mxu0 %v3381
      %3712 = vmatmul.mubr.bf16.gmra.mxu0 %v3380
      %v3713 = vpop.f32.mrf.mxu0
      %v3714 = vadd.f32 %v3649, %v3713
      %v3715 = vpop.f32.mrf.mxu0
      %v3716 = vpop.f32.mrf.mxu0
      %v3717 = vadd.f32 %v3652, %v3716
      %v3718 = vpop.f32.mrf.mxu0
      %3719 = vdwg.mxu0
      %v3720 = vadd.f32 %v3149, %v3690
      %v3721 = vadd.f32 %v3150, %v3693
      %v3722 = vadd.f32 %v3151, %v3698
      %v3723 = vadd.f32 %v3152, %v3701
      %v3724 = vadd.f32 %v3153, %v3706
      %v3725 = vadd.f32 %v3154, %v3709
      %v3726 = vadd.f32 %v3155, %v3714
      %v3727 = vadd.f32 %v3156, %v3717
      %s3728 = scalar_lea.vmem %s192, 64
      %v3729 = vld [vmem:[%s3728] sm:$0xff]
      %v3730 = vld [vmem:[%s3728 + $0x8] sm:$0xff]
      %v3731 = vld [vmem:[%s3728 + $0x20] sm:$0xff]
      %v3732 = vld [vmem:[%s3728 + $0x28] sm:$0xff]
      %v3733 = vld [vmem:[%s3728 + $0x40] sm:$0xff]
      %v3734 = vld [vmem:[%s3728 + $0x48] sm:$0xff]
      %v3735 = vld [vmem:[%s3728 + $0x60] sm:$0xff]
      %v3736 = vld [vmem:[%s3728 + $0x68] sm:$0xff]
      %v3737 = vld [vmem:[%s3728 + $0x80] sm:$0xff]
      %v3738 = vld [vmem:[%s3728 + $0x88] sm:$0xff]
      %v3739 = vld [vmem:[%s3728 + $0xa0] sm:$0xff]
      %v3740 = vld [vmem:[%s3728 + $0xa8] sm:$0xff]
      %v3741 = vld [vmem:[%s3728 + $0xc0] sm:$0xff]
      %v3742 = vld [vmem:[%s3728 + $0xc8] sm:$0xff]
      %v3743 = vld [vmem:[%s3728 + $0xe0] sm:$0xff]
      %v3744 = vld [vmem:[%s3728 + $0xe8] sm:$0xff]
      %s3745 = scalar_lea.vmem %s1, 1536
      %v3746 = vld [vmem:[%s3745] sm:$0xf]
      %v3747 = vld [vmem:[%s3745 + $0x4] sm:$0xf]
      %v3748 = vld [vmem:[%s3745 + $0x8] sm:$0xf]
      %v3749 = vld [vmem:[%s3745 + $0xc] sm:$0xf]
      %v3750 = vld [vmem:[%s3745 + $0x10] sm:$0xf]
      %v3751 = vld [vmem:[%s3745 + $0x14] sm:$0xf]
      %v3752 = vld [vmem:[%s3745 + $0x18] sm:$0xf]
      %v3753 = vld [vmem:[%s3745 + $0x1c] sm:$0xf]
      %v3754 = vld [vmem:[%s3745 + $0x20] sm:$0xf]
      %v3755 = vld [vmem:[%s3745 + $0x24] sm:$0xf]
      %v3756 = vld [vmem:[%s3745 + $0x28] sm:$0xf]
      %v3757 = vld [vmem:[%s3745 + $0x2c] sm:$0xf]
      %v3758 = vld [vmem:[%s3745 + $0x30] sm:$0xf]
      %v3759 = vld [vmem:[%s3745 + $0x34] sm:$0xf]
      %v3760 = vld [vmem:[%s3745 + $0x38] sm:$0xf]
      %v3761 = vld [vmem:[%s3745 + $0x3c] sm:$0xf]
      %v3762 = vld [vmem:[%s3745 + $0x40] sm:$0xf]
      %v3763 = vld [vmem:[%s3745 + $0x44] sm:$0xf]
      %v3764 = vld [vmem:[%s3745 + $0x48] sm:$0xf]
      %v3765 = vld [vmem:[%s3745 + $0x4c] sm:$0xf]
      %v3766 = vld [vmem:[%s3745 + $0x50] sm:$0xf]
      %v3767 = vld [vmem:[%s3745 + $0x54] sm:$0xf]
      %v3768 = vld [vmem:[%s3745 + $0x58] sm:$0xf]
      %v3769 = vld [vmem:[%s3745 + $0x5c] sm:$0xf]
      %v3770 = vld [vmem:[%s3745 + $0x60] sm:$0xf]
      %v3771 = vld [vmem:[%s3745 + $0x64] sm:$0xf]
      %v3772 = vld [vmem:[%s3745 + $0x68] sm:$0xf]
      %v3773 = vld [vmem:[%s3745 + $0x6c] sm:$0xf]
      %v3774 = vld [vmem:[%s3745 + $0x70] sm:$0xf]
      %v3775 = vld [vmem:[%s3745 + $0x74] sm:$0xf]
      %v3776 = vld [vmem:[%s3745 + $0x78] sm:$0xf]
      %v3777 = vld [vmem:[%s3745 + $0x7c] sm:$0xf]
      %v3778 = vld [vmem:[%s3745 + $0x80] sm:$0xf]
      %v3779 = vld [vmem:[%s3745 + $0x84] sm:$0xf]
      %v3780 = vld [vmem:[%s3745 + $0x88] sm:$0xf]
      %v3781 = vld [vmem:[%s3745 + $0x8c] sm:$0xf]
      %v3782 = vld [vmem:[%s3745 + $0x90] sm:$0xf]
      %v3783 = vld [vmem:[%s3745 + $0x94] sm:$0xf]
      %v3784 = vld [vmem:[%s3745 + $0x98] sm:$0xf]
      %v3785 = vld [vmem:[%s3745 + $0x9c] sm:$0xf]
      %v3786 = vld [vmem:[%s3745 + $0xa0] sm:$0xf]
      %v3787 = vld [vmem:[%s3745 + $0xa4] sm:$0xf]
      %v3788 = vld [vmem:[%s3745 + $0xa8] sm:$0xf]
      %v3789 = vld [vmem:[%s3745 + $0xac] sm:$0xf]
      %v3790 = vld [vmem:[%s3745 + $0xb0] sm:$0xf]
      %v3791 = vld [vmem:[%s3745 + $0xb4] sm:$0xf]
      %v3792 = vld [vmem:[%s3745 + $0xb8] sm:$0xf]
      %v3793 = vld [vmem:[%s3745 + $0xbc] sm:$0xf]
      %v3794 = vld [vmem:[%s3745 + $0xc0] sm:$0xf]
      %v3795 = vld [vmem:[%s3745 + $0xc4] sm:$0xf]
      %v3796 = vld [vmem:[%s3745 + $0xc8] sm:$0xf]
      %v3797 = vld [vmem:[%s3745 + $0xcc] sm:$0xf]
      %v3798 = vld [vmem:[%s3745 + $0xd0] sm:$0xf]
      %v3799 = vld [vmem:[%s3745 + $0xd4] sm:$0xf]
      %v3800 = vld [vmem:[%s3745 + $0xd8] sm:$0xf]
      %v3801 = vld [vmem:[%s3745 + $0xdc] sm:$0xf]
      %v3802 = vld [vmem:[%s3745 + $0xe0] sm:$0xf]
      %v3803 = vld [vmem:[%s3745 + $0xe4] sm:$0xf]
      %v3804 = vld [vmem:[%s3745 + $0xe8] sm:$0xf]
      %v3805 = vld [vmem:[%s3745 + $0xec] sm:$0xf]
      %v3806 = vld [vmem:[%s3745 + $0xf0] sm:$0xf]
      %v3807 = vld [vmem:[%s3745 + $0xf4] sm:$0xf]
      %v3808 = vld [vmem:[%s3745 + $0xf8] sm:$0xf]
      %v3809 = vld [vmem:[%s3745 + $0xfc] sm:$0xf]
      %v3826 = vunpack.c.l.b16 %v3729
      %v3827 = vunpack.c.h.b16 %v3729
      %v3828 = vunpack.c.l.b16 %v3730
      %v3829 = vunpack.c.h.b16 %v3730
      %v3830 = vunpack.c.l.b16 %v3731
      %v3831 = vunpack.c.h.b16 %v3731
      %v3832 = vunpack.c.l.b16 %v3732
      %v3833 = vunpack.c.h.b16 %v3732
      %v3834 = vunpack.c.l.b16 %v3733
      %v3835 = vunpack.c.h.b16 %v3733
      %v3836 = vunpack.c.l.b16 %v3734
      %v3837 = vunpack.c.h.b16 %v3734
      %v3838 = vunpack.c.l.b16 %v3735
      %v3839 = vunpack.c.h.b16 %v3735
      %v3840 = vunpack.c.l.b16 %v3736
      %v3841 = vunpack.c.h.b16 %v3736
      %v3842 = vunpack.c.l.b16 %v3737
      %v3843 = vunpack.c.h.b16 %v3737
      %v3844 = vunpack.c.l.b16 %v3738
      %v3845 = vunpack.c.h.b16 %v3738
      %v3846 = vunpack.c.l.b16 %v3739
      %v3847 = vunpack.c.h.b16 %v3739
      %v3848 = vunpack.c.l.b16 %v3740
      %v3849 = vunpack.c.h.b16 %v3740
      %v3850 = vunpack.c.l.b16 %v3741
      %v3851 = vunpack.c.h.b16 %v3741
      %v3852 = vunpack.c.l.b16 %v3742
      %v3853 = vunpack.c.h.b16 %v3742
      %v3854 = vunpack.c.l.b16 %v3743
      %v3855 = vunpack.c.h.b16 %v3743
      %v3856 = vunpack.c.l.b16 %v3744
      %v3857 = vunpack.c.h.b16 %v3744
      %v3858 = vpack.c.b16 %v3830, %v3826
      %v3859 = vpack.c.b16 %v3831, %v3827
      %v3860 = vpack.c.b16 %v3832, %v3828
      %v3861 = vpack.c.b16 %v3833, %v3829
      %v3862 = vpack.c.b16 %v3838, %v3834
      %v3863 = vpack.c.b16 %v3839, %v3835
      %v3864 = vpack.c.b16 %v3840, %v3836
      %v3865 = vpack.c.b16 %v3841, %v3837
      %v3866 = vpack.c.b16 %v3846, %v3842
      %v3867 = vpack.c.b16 %v3847, %v3843
      %v3868 = vpack.c.b16 %v3848, %v3844
      %v3869 = vpack.c.b16 %v3849, %v3845
      %v3870 = vpack.c.b16 %v3854, %v3850
      %v3871 = vpack.c.b16 %v3855, %v3851
      %v3872 = vpack.c.b16 %v3856, %v3852
      %v3873 = vpack.c.b16 %v3857, %v3853
      %v3954 = vunpack.c.l.b16 %v3746
      %v3955 = vunpack.c.l.b16 %v3747
      %v3956 = vunpack.c.l.b16 %v3748
      %v3957 = vunpack.c.l.b16 %v3749
      %v3958 = vunpack.c.l.b16 %v3750
      %v3959 = vunpack.c.l.b16 %v3751
      %v3960 = vunpack.c.l.b16 %v3752
      %v3961 = vunpack.c.l.b16 %v3753
      %v3962 = vunpack.c.l.b16 %v3754
      %v3963 = vunpack.c.l.b16 %v3755
      %v3964 = vunpack.c.l.b16 %v3756
      %v3965 = vunpack.c.l.b16 %v3757
      %v3966 = vunpack.c.l.b16 %v3758
      %v3967 = vunpack.c.l.b16 %v3759
      %v3968 = vunpack.c.l.b16 %v3760
      %v3969 = vunpack.c.l.b16 %v3761
      %v3970 = vunpack.c.l.b16 %v3762
      %v3971 = vunpack.c.l.b16 %v3763
      %v3972 = vunpack.c.l.b16 %v3764
      %v3973 = vunpack.c.l.b16 %v3765
      %v3974 = vunpack.c.l.b16 %v3766
      %v3975 = vunpack.c.l.b16 %v3767
      %v3976 = vunpack.c.l.b16 %v3768
      %v3977 = vunpack.c.l.b16 %v3769
      %v3978 = vunpack.c.l.b16 %v3770
      %v3979 = vunpack.c.l.b16 %v3771
      %v3980 = vunpack.c.l.b16 %v3772
      %v3981 = vunpack.c.l.b16 %v3773
      %v3982 = vunpack.c.l.b16 %v3774
      %v3983 = vunpack.c.l.b16 %v3775
      %v3984 = vunpack.c.l.b16 %v3776
      %v3985 = vunpack.c.l.b16 %v3777
      %v3986 = vunpack.c.l.b16 %v3778
      %v3987 = vunpack.c.l.b16 %v3779
      %v3988 = vunpack.c.l.b16 %v3780
      %v3989 = vunpack.c.l.b16 %v3781
      %v3990 = vunpack.c.l.b16 %v3782
      %v3991 = vunpack.c.l.b16 %v3783
      %v3992 = vunpack.c.l.b16 %v3784
      %v3993 = vunpack.c.l.b16 %v3785
      %v3994 = vunpack.c.l.b16 %v3786
      %v3995 = vunpack.c.l.b16 %v3787
      %v3996 = vunpack.c.l.b16 %v3788
      %v3997 = vunpack.c.l.b16 %v3789
      %v3998 = vunpack.c.l.b16 %v3790
      %v3999 = vunpack.c.l.b16 %v3791
      %v4000 = vunpack.c.l.b16 %v3792
      %v4001 = vunpack.c.l.b16 %v3793
      %v4002 = vunpack.c.l.b16 %v3794
      %v4003 = vunpack.c.l.b16 %v3795
      %v4004 = vunpack.c.l.b16 %v3796
      %v4005 = vunpack.c.l.b16 %v3797
      %v4006 = vunpack.c.l.b16 %v3798
      %v4007 = vunpack.c.l.b16 %v3799
      %v4008 = vunpack.c.l.b16 %v3800
      %v4009 = vunpack.c.l.b16 %v3801
      %v4010 = vunpack.c.l.b16 %v3802
      %v4011 = vunpack.c.l.b16 %v3803
      %v4012 = vunpack.c.l.b16 %v3804
      %v4013 = vunpack.c.l.b16 %v3805
      %v4014 = vunpack.c.l.b16 %v3806
      %v4015 = vunpack.c.l.b16 %v3807
      %v4016 = vunpack.c.l.b16 %v3808
      %v4017 = vunpack.c.l.b16 %v3809
      %v4018 = vpack.c.b16 %v3955, %v3954
      %v4019 = vpack.c.b16 %v3957, %v3956
      %v4020 = vpack.c.b16 %v3959, %v3958
      %v4021 = vpack.c.b16 %v3961, %v3960
      %v4022 = vpack.c.b16 %v3963, %v3962
      %v4023 = vpack.c.b16 %v3965, %v3964
      %v4024 = vpack.c.b16 %v3967, %v3966
      %v4025 = vpack.c.b16 %v3969, %v3968
      %v4026 = vpack.c.b16 %v3971, %v3970
      %v4027 = vpack.c.b16 %v3973, %v3972
      %v4028 = vpack.c.b16 %v3975, %v3974
      %v4029 = vpack.c.b16 %v3977, %v3976
      %v4030 = vpack.c.b16 %v3979, %v3978
      %v4031 = vpack.c.b16 %v3981, %v3980
      %v4032 = vpack.c.b16 %v3983, %v3982
      %v4033 = vpack.c.b16 %v3985, %v3984
      %v4034 = vpack.c.b16 %v3987, %v3986
      %v4035 = vpack.c.b16 %v3989, %v3988
      %v4036 = vpack.c.b16 %v3991, %v3990
      %v4037 = vpack.c.b16 %v3993, %v3992
      %v4038 = vpack.c.b16 %v3995, %v3994
      %v4039 = vpack.c.b16 %v3997, %v3996
      %v4040 = vpack.c.b16 %v3999, %v3998
      %v4041 = vpack.c.b16 %v4001, %v4000
      %v4042 = vpack.c.b16 %v4003, %v4002
      %v4043 = vpack.c.b16 %v4005, %v4004
      %v4044 = vpack.c.b16 %v4007, %v4006
      %v4045 = vpack.c.b16 %v4009, %v4008
      %v4046 = vpack.c.b16 %v4011, %v4010
      %v4047 = vpack.c.b16 %v4013, %v4012
      %v4048 = vpack.c.b16 %v4015, %v4014
      %v4049 = vpack.c.b16 %v4017, %v4016
      %4082 = vmatprep.subr.bf16.mxu0 0
      %4083 = vmatpush1.bf16.msra.mxu0 %v4025
      %4084 = vmatprep.subr.bf16.mxu0 0
      %4085 = vmatpush1.bf16.msra.mxu0 %v4024
      %4086 = vmatprep.subr.bf16.mxu0 0
      %4087 = vmatpush1.bf16.msra.mxu0 %v4023
      %4088 = vmatprep.subr.bf16.mxu0 0
      %4089 = vmatpush1.bf16.msra.mxu0 %v4022
      %4090 = vmatprep.subr.bf16.mxu0 0
      %4091 = vmatpush1.bf16.msra.mxu0 %v4021
      %4092 = vmatprep.subr.bf16.mxu0 0
      %4093 = vmatpush1.bf16.msra.mxu0 %v4020
      %4094 = vmatprep.subr.bf16.mxu0 0
      %4095 = vmatpush1.bf16.msra.mxu0 %v4019
      %4096 = vmatprep.subr.bf16.mxu0 0
      %4097 = vmatpush1.bf16.msra.mxu0 %v4018
      %4098 = vmatprep.subr.bf16.mxu0 0
      %4099 = vmatpush2.bf16.msra.mxu0 %v4033
      %4100 = vmatprep.subr.bf16.mxu0 0
      %4101 = vmatpush2.bf16.msra.mxu0 %v4032
      %4102 = vmatprep.subr.bf16.mxu0 0
      %4103 = vmatpush2.bf16.msra.mxu0 %v4031
      %4104 = vmatprep.subr.bf16.mxu0 0
      %4105 = vmatpush2.bf16.msra.mxu0 %v4030
      %4106 = vmatprep.subr.bf16.mxu0 0
      %4107 = vmatpush2.bf16.msra.mxu0 %v4029
      %4108 = vmatprep.subr.bf16.mxu0 0
      %4109 = vmatpush2.bf16.msra.mxu0 %v4028
      %4110 = vmatprep.subr.bf16.mxu0 0
      %4111 = vmatpush2.bf16.msra.mxu0 %v4027
      %4112 = vmatprep.subr.bf16.mxu0 0
      %4113 = vmatpush2.bf16.msra.mxu0 %v4026
      %4114 = vmatprep.mubr.bf16.mxu0 %v3859
      %4115 = vmatmul.mubr.bf16.gmra.mxu0 %v3858
      %v4116 = vpop.f32.mrf.mxu0
      %v4117 = vadd.f32 0.0, %v4116
      %v4118 = vpop.f32.mrf.mxu0
      %v4119 = vpop.f32.mrf.mxu0
      %v4120 = vadd.f32 0.0, %v4119
      %v4121 = vpop.f32.mrf.mxu0
      %4122 = vmatprep.mubr.bf16.mxu0 %v3863
      %4123 = vmatmul.mubr.bf16.gmra.mxu0 %v3862
      %v4124 = vpop.f32.mrf.mxu0
      %v4125 = vadd.f32 0.0, %v4124
      %v4126 = vpop.f32.mrf.mxu0
      %v4127 = vpop.f32.mrf.mxu0
      %v4128 = vadd.f32 0.0, %v4127
      %v4129 = vpop.f32.mrf.mxu0
      %4130 = vmatprep.mubr.bf16.mxu0 %v3867
      %4131 = vmatmul.mubr.bf16.gmra.mxu0 %v3866
      %v4132 = vpop.f32.mrf.mxu0
      %v4133 = vadd.f32 0.0, %v4132
      %v4134 = vpop.f32.mrf.mxu0
      %v4135 = vpop.f32.mrf.mxu0
      %v4136 = vadd.f32 0.0, %v4135
      %v4137 = vpop.f32.mrf.mxu0
      %4138 = vmatprep.mubr.bf16.mxu0 %v3871
      %4139 = vmatmul.mubr.bf16.gmra.mxu0 %v3870
      %v4140 = vpop.f32.mrf.mxu0
      %v4141 = vadd.f32 0.0, %v4140
      %v4142 = vpop.f32.mrf.mxu0
      %v4143 = vpop.f32.mrf.mxu0
      %v4144 = vadd.f32 0.0, %v4143
      %v4145 = vpop.f32.mrf.mxu0
      %4146 = vdwg.mxu0
      %4147 = vmatprep.subr.bf16.mxu0 0
      %4148 = vmatpush1.bf16.msra.mxu0 %v4041
      %4149 = vmatprep.subr.bf16.mxu0 0
      %4150 = vmatpush1.bf16.msra.mxu0 %v4040
      %4151 = vmatprep.subr.bf16.mxu0 0
      %4152 = vmatpush1.bf16.msra.mxu0 %v4039
      %4153 = vmatprep.subr.bf16.mxu0 0
      %4154 = vmatpush1.bf16.msra.mxu0 %v4038
      %4155 = vmatprep.subr.bf16.mxu0 0
      %4156 = vmatpush1.bf16.msra.mxu0 %v4037
      %4157 = vmatprep.subr.bf16.mxu0 0
      %4158 = vmatpush1.bf16.msra.mxu0 %v4036
      %4159 = vmatprep.subr.bf16.mxu0 0
      %4160 = vmatpush1.bf16.msra.mxu0 %v4035
      %4161 = vmatprep.subr.bf16.mxu0 0
      %4162 = vmatpush1.bf16.msra.mxu0 %v4034
      %4163 = vmatprep.subr.bf16.mxu0 0
      %4164 = vmatpush2.bf16.msra.mxu0 %v4049
      %4165 = vmatprep.subr.bf16.mxu0 0
      %4166 = vmatpush2.bf16.msra.mxu0 %v4048
      %4167 = vmatprep.subr.bf16.mxu0 0
      %4168 = vmatpush2.bf16.msra.mxu0 %v4047
      %4169 = vmatprep.subr.bf16.mxu0 0
      %4170 = vmatpush2.bf16.msra.mxu0 %v4046
      %4171 = vmatprep.subr.bf16.mxu0 0
      %4172 = vmatpush2.bf16.msra.mxu0 %v4045
      %4173 = vmatprep.subr.bf16.mxu0 0
      %4174 = vmatpush2.bf16.msra.mxu0 %v4044
      %4175 = vmatprep.subr.bf16.mxu0 0
      %4176 = vmatpush2.bf16.msra.mxu0 %v4043
      %4177 = vmatprep.subr.bf16.mxu0 0
      %4178 = vmatpush2.bf16.msra.mxu0 %v4042
      %4179 = vmatprep.mubr.bf16.mxu0 %v3861
      %4180 = vmatmul.mubr.bf16.gmra.mxu0 %v3860
      %v4181 = vpop.f32.mrf.mxu0
      %v4182 = vadd.f32 %v4117, %v4181
      %v4183 = vpop.f32.mrf.mxu0
      %v4184 = vpop.f32.mrf.mxu0
      %v4185 = vadd.f32 %v4120, %v4184
      %v4186 = vpop.f32.mrf.mxu0
      %4187 = vmatprep.mubr.bf16.mxu0 %v3865
      %4188 = vmatmul.mubr.bf16.gmra.mxu0 %v3864
      %v4189 = vpop.f32.mrf.mxu0
      %v4190 = vadd.f32 %v4125, %v4189
      %v4191 = vpop.f32.mrf.mxu0
      %v4192 = vpop.f32.mrf.mxu0
      %v4193 = vadd.f32 %v4128, %v4192
      %v4194 = vpop.f32.mrf.mxu0
      %4195 = vmatprep.mubr.bf16.mxu0 %v3869
      %4196 = vmatmul.mubr.bf16.gmra.mxu0 %v3868
      %v4197 = vpop.f32.mrf.mxu0
      %v4198 = vadd.f32 %v4133, %v4197
      %v4199 = vpop.f32.mrf.mxu0
      %v4200 = vpop.f32.mrf.mxu0
      %v4201 = vadd.f32 %v4136, %v4200
      %v4202 = vpop.f32.mrf.mxu0
      %4203 = vmatprep.mubr.bf16.mxu0 %v3873
      %4204 = vmatmul.mubr.bf16.gmra.mxu0 %v3872
      %v4205 = vpop.f32.mrf.mxu0
      %v4206 = vadd.f32 %v4141, %v4205
      %v4207 = vpop.f32.mrf.mxu0
      %v4208 = vpop.f32.mrf.mxu0
      %v4209 = vadd.f32 %v4144, %v4208
      %v4210 = vpop.f32.mrf.mxu0
      %4211 = vdwg.mxu0
      %v4212 = vadd.f32 %v3720, %v4182
      %v4213 = vadd.f32 %v3721, %v4185
      %v4214 = vadd.f32 %v3722, %v4190
      %v4215 = vadd.f32 %v3723, %v4193
      %v4216 = vadd.f32 %v3724, %v4198
      %v4217 = vadd.f32 %v3725, %v4201
      %v4218 = vadd.f32 %v3726, %v4206
      %v4219 = vadd.f32 %v3727, %v4209
      %v4220 = vld [vmem:[%s3728] sm:$0xff]
      %v4221 = vld [vmem:[%s3728 + $0x8] sm:$0xff]
      %v4222 = vld [vmem:[%s3728 + $0x10] sm:$0x11]
      %v4223 = vld [vmem:[%s3728 + $0x18] sm:$0x11]
      %v4224 = vld [vmem:[%s3728 + $0x20] sm:$0xff]
      %v4225 = vld [vmem:[%s3728 + $0x28] sm:$0xff]
      %v4226 = vld [vmem:[%s3728 + $0x30] sm:$0x11]
      %v4227 = vld [vmem:[%s3728 + $0x38] sm:$0x11]
      %v4228 = vld [vmem:[%s3728 + $0x40] sm:$0xff]
      %v4229 = vld [vmem:[%s3728 + $0x48] sm:$0xff]
      %v4230 = vld [vmem:[%s3728 + $0x50] sm:$0x11]
      %v4231 = vld [vmem:[%s3728 + $0x58] sm:$0x11]
      %v4232 = vld [vmem:[%s3728 + $0x60] sm:$0xff]
      %v4233 = vld [vmem:[%s3728 + $0x68] sm:$0xff]
      %v4234 = vld [vmem:[%s3728 + $0x70] sm:$0x11]
      %v4235 = vld [vmem:[%s3728 + $0x78] sm:$0x11]
      %v4236 = vld [vmem:[%s3728 + $0x80] sm:$0xff]
      %v4237 = vld [vmem:[%s3728 + $0x88] sm:$0xff]
      %v4238 = vld [vmem:[%s3728 + $0x90] sm:$0x11]
      %v4239 = vld [vmem:[%s3728 + $0x98] sm:$0x11]
      %v4240 = vld [vmem:[%s3728 + $0xa0] sm:$0xff]
      %v4241 = vld [vmem:[%s3728 + $0xa8] sm:$0xff]
      %v4242 = vld [vmem:[%s3728 + $0xb0] sm:$0x11]
      %v4243 = vld [vmem:[%s3728 + $0xb8] sm:$0x11]
      %v4244 = vld [vmem:[%s3728 + $0xc0] sm:$0xff]
      %v4245 = vld [vmem:[%s3728 + $0xc8] sm:$0xff]
      %v4246 = vld [vmem:[%s3728 + $0xd0] sm:$0x11]
      %v4247 = vld [vmem:[%s3728 + $0xd8] sm:$0x11]
      %v4248 = vld [vmem:[%s3728 + $0xe0] sm:$0xff]
      %v4249 = vld [vmem:[%s3728 + $0xe8] sm:$0xff]
      %v4250 = vld [vmem:[%s3728 + $0xf0] sm:$0x11]
      %v4251 = vld [vmem:[%s3728 + $0xf8] sm:$0x11]
      %v4253 = vshrl.u32 %v4220, 16
      %v4255 = vrot.slane %v4253, 4
      %v4256 = vshll.u32 %v4220, 16
      %v4258 = vrot.slane %v4256, 5
      %v4259 = vor.u32 %v4255, %v4258
      %v4260 = vrot.slane %v4259, 4
      %v4262 = vshll.u32 %v4222, 16
      %v4264 = vrot.slane %v4262, 5
      %v4265 = vsel %vm298, %v4260, %v4264
      %v4267 = vshrl.u32 %v4221, 16
      %v4269 = vrot.slane %v4267, 4
      %v4270 = vshll.u32 %v4221, 16
      %v4272 = vrot.slane %v4270, 5
      %v4273 = vor.u32 %v4269, %v4272
      %v4274 = vrot.slane %v4273, 4
      %v4276 = vshll.u32 %v4223, 16
      %v4278 = vrot.slane %v4276, 5
      %v4279 = vsel %vm298, %v4274, %v4278
      %v4281 = vshrl.u32 %v4224, 16
      %v4283 = vrot.slane %v4281, 4
      %v4284 = vshll.u32 %v4224, 16
      %v4286 = vrot.slane %v4284, 5
      %v4287 = vor.u32 %v4283, %v4286
      %v4288 = vrot.slane %v4287, 4
      %v4290 = vshll.u32 %v4226, 16
      %v4292 = vrot.slane %v4290, 5
      %v4293 = vsel %vm298, %v4288, %v4292
      %v4295 = vshrl.u32 %v4225, 16
      %v4297 = vrot.slane %v4295, 4
      %v4298 = vshll.u32 %v4225, 16
      %v4300 = vrot.slane %v4298, 5
      %v4301 = vor.u32 %v4297, %v4300
      %v4302 = vrot.slane %v4301, 4
      %v4304 = vshll.u32 %v4227, 16
      %v4306 = vrot.slane %v4304, 5
      %v4307 = vsel %vm298, %v4302, %v4306
      %v4309 = vshrl.u32 %v4228, 16
      %v4311 = vrot.slane %v4309, 4
      %v4312 = vshll.u32 %v4228, 16
      %v4314 = vrot.slane %v4312, 5
      %v4315 = vor.u32 %v4311, %v4314
      %v4316 = vrot.slane %v4315, 4
      %v4318 = vshll.u32 %v4230, 16
      %v4320 = vrot.slane %v4318, 5
      %v4321 = vsel %vm298, %v4316, %v4320
      %v4323 = vshrl.u32 %v4229, 16
      %v4325 = vrot.slane %v4323, 4
      %v4326 = vshll.u32 %v4229, 16
      %v4328 = vrot.slane %v4326, 5
      %v4329 = vor.u32 %v4325, %v4328
      %v4330 = vrot.slane %v4329, 4
      %v4332 = vshll.u32 %v4231, 16
      %v4334 = vrot.slane %v4332, 5
      %v4335 = vsel %vm298, %v4330, %v4334
      %v4337 = vshrl.u32 %v4232, 16
      %v4339 = vrot.slane %v4337, 4
      %v4340 = vshll.u32 %v4232, 16
      %v4342 = vrot.slane %v4340, 5
      %v4343 = vor.u32 %v4339, %v4342
      %v4344 = vrot.slane %v4343, 4
      %v4346 = vshll.u32 %v4234, 16
      %v4348 = vrot.slane %v4346, 5
      %v4349 = vsel %vm298, %v4344, %v4348
      %v4351 = vshrl.u32 %v4233, 16
      %v4353 = vrot.slane %v4351, 4
      %v4354 = vshll.u32 %v4233, 16
      %v4356 = vrot.slane %v4354, 5
      %v4357 = vor.u32 %v4353, %v4356
      %v4358 = vrot.slane %v4357, 4
      %v4360 = vshll.u32 %v4235, 16
      %v4362 = vrot.slane %v4360, 5
      %v4363 = vsel %vm298, %v4358, %v4362
      %v4365 = vshrl.u32 %v4236, 16
      %v4367 = vrot.slane %v4365, 4
      %v4368 = vshll.u32 %v4236, 16
      %v4370 = vrot.slane %v4368, 5
      %v4371 = vor.u32 %v4367, %v4370
      %v4372 = vrot.slane %v4371, 4
      %v4374 = vshll.u32 %v4238, 16
      %v4376 = vrot.slane %v4374, 5
      %v4377 = vsel %vm298, %v4372, %v4376
      %v4379 = vshrl.u32 %v4237, 16
      %v4381 = vrot.slane %v4379, 4
      %v4382 = vshll.u32 %v4237, 16
      %v4384 = vrot.slane %v4382, 5
      %v4385 = vor.u32 %v4381, %v4384
      %v4386 = vrot.slane %v4385, 4
      %v4388 = vshll.u32 %v4239, 16
      %v4390 = vrot.slane %v4388, 5
      %v4391 = vsel %vm298, %v4386, %v4390
      %v4393 = vshrl.u32 %v4240, 16
      %v4395 = vrot.slane %v4393, 4
      %v4396 = vshll.u32 %v4240, 16
      %v4398 = vrot.slane %v4396, 5
      %v4399 = vor.u32 %v4395, %v4398
      %v4400 = vrot.slane %v4399, 4
      %v4402 = vshll.u32 %v4242, 16
      %v4404 = vrot.slane %v4402, 5
      %v4405 = vsel %vm298, %v4400, %v4404
      %v4407 = vshrl.u32 %v4241, 16
      %v4409 = vrot.slane %v4407, 4
      %v4410 = vshll.u32 %v4241, 16
      %v4412 = vrot.slane %v4410, 5
      %v4413 = vor.u32 %v4409, %v4412
      %v4414 = vrot.slane %v4413, 4
      %v4416 = vshll.u32 %v4243, 16
      %v4418 = vrot.slane %v4416, 5
      %v4419 = vsel %vm298, %v4414, %v4418
      %v4421 = vshrl.u32 %v4244, 16
      %v4423 = vrot.slane %v4421, 4
      %v4424 = vshll.u32 %v4244, 16
      %v4426 = vrot.slane %v4424, 5
      %v4427 = vor.u32 %v4423, %v4426
      %v4428 = vrot.slane %v4427, 4
      %v4430 = vshll.u32 %v4246, 16
      %v4432 = vrot.slane %v4430, 5
      %v4433 = vsel %vm298, %v4428, %v4432
      %v4435 = vshrl.u32 %v4245, 16
      %v4437 = vrot.slane %v4435, 4
      %v4438 = vshll.u32 %v4245, 16
      %v4440 = vrot.slane %v4438, 5
      %v4441 = vor.u32 %v4437, %v4440
      %v4442 = vrot.slane %v4441, 4
      %v4444 = vshll.u32 %v4247, 16
      %v4446 = vrot.slane %v4444, 5
      %v4447 = vsel %vm298, %v4442, %v4446
      %v4449 = vshrl.u32 %v4248, 16
      %v4451 = vrot.slane %v4449, 4
      %v4452 = vshll.u32 %v4248, 16
      %v4454 = vrot.slane %v4452, 5
      %v4455 = vor.u32 %v4451, %v4454
      %v4456 = vrot.slane %v4455, 4
      %v4458 = vshll.u32 %v4250, 16
      %v4460 = vrot.slane %v4458, 5
      %v4461 = vsel %vm298, %v4456, %v4460
      %v4463 = vshrl.u32 %v4249, 16
      %v4465 = vrot.slane %v4463, 4
      %v4466 = vshll.u32 %v4249, 16
      %v4468 = vrot.slane %v4466, 5
      %v4469 = vor.u32 %v4465, %v4468
      %v4470 = vrot.slane %v4469, 4
      %v4472 = vshll.u32 %v4251, 16
      %v4474 = vrot.slane %v4472, 5
      %v4475 = vsel %vm298, %v4470, %v4474
      %s4476 = scalar_lea.vmem %s1, 1792
      %v4477 = vld [vmem:[%s4476] sm:$0xf]
      %v4478 = vld [vmem:[%s4476 + $0x4] sm:$0xf]
      %v4479 = vld [vmem:[%s4476 + $0x8] sm:$0xf]
      %v4480 = vld [vmem:[%s4476 + $0xc] sm:$0xf]
      %v4481 = vld [vmem:[%s4476 + $0x10] sm:$0xf]
      %v4482 = vld [vmem:[%s4476 + $0x14] sm:$0xf]
      %v4483 = vld [vmem:[%s4476 + $0x18] sm:$0xf]
      %v4484 = vld [vmem:[%s4476 + $0x1c] sm:$0xf]
      %v4485 = vld [vmem:[%s4476 + $0x20] sm:$0xf]
      %v4486 = vld [vmem:[%s4476 + $0x24] sm:$0xf]
      %v4487 = vld [vmem:[%s4476 + $0x28] sm:$0xf]
      %v4488 = vld [vmem:[%s4476 + $0x2c] sm:$0xf]
      %v4489 = vld [vmem:[%s4476 + $0x30] sm:$0xf]
      %v4490 = vld [vmem:[%s4476 + $0x34] sm:$0xf]
      %v4491 = vld [vmem:[%s4476 + $0x38] sm:$0xf]
      %v4492 = vld [vmem:[%s4476 + $0x3c] sm:$0xf]
      %v4493 = vld [vmem:[%s4476 + $0x40] sm:$0xf]
      %v4494 = vld [vmem:[%s4476 + $0x44] sm:$0xf]
      %v4495 = vld [vmem:[%s4476 + $0x48] sm:$0xf]
      %v4496 = vld [vmem:[%s4476 + $0x4c] sm:$0xf]
      %v4497 = vld [vmem:[%s4476 + $0x50] sm:$0xf]
      %v4498 = vld [vmem:[%s4476 + $0x54] sm:$0xf]
      %v4499 = vld [vmem:[%s4476 + $0x58] sm:$0xf]
      %v4500 = vld [vmem:[%s4476 + $0x5c] sm:$0xf]
      %v4501 = vld [vmem:[%s4476 + $0x60] sm:$0xf]
      %v4502 = vld [vmem:[%s4476 + $0x64] sm:$0xf]
      %v4503 = vld [vmem:[%s4476 + $0x68] sm:$0xf]
      %v4504 = vld [vmem:[%s4476 + $0x6c] sm:$0xf]
      %v4505 = vld [vmem:[%s4476 + $0x70] sm:$0xf]
      %v4506 = vld [vmem:[%s4476 + $0x74] sm:$0xf]
      %v4507 = vld [vmem:[%s4476 + $0x78] sm:$0xf]
      %v4508 = vld [vmem:[%s4476 + $0x7c] sm:$0xf]
      %v4509 = vld [vmem:[%s4476 + $0x80] sm:$0xf]
      %v4510 = vld [vmem:[%s4476 + $0x84] sm:$0xf]
      %v4511 = vld [vmem:[%s4476 + $0x88] sm:$0xf]
      %v4512 = vld [vmem:[%s4476 + $0x8c] sm:$0xf]
      %v4513 = vld [vmem:[%s4476 + $0x90] sm:$0xf]
      %v4514 = vld [vmem:[%s4476 + $0x94] sm:$0xf]
      %v4515 = vld [vmem:[%s4476 + $0x98] sm:$0xf]
      %v4516 = vld [vmem:[%s4476 + $0x9c] sm:$0xf]
      %v4517 = vld [vmem:[%s4476 + $0xa0] sm:$0xf]
      %v4518 = vld [vmem:[%s4476 + $0xa4] sm:$0xf]
      %v4519 = vld [vmem:[%s4476 + $0xa8] sm:$0xf]
      %v4520 = vld [vmem:[%s4476 + $0xac] sm:$0xf]
      %v4521 = vld [vmem:[%s4476 + $0xb0] sm:$0xf]
      %v4522 = vld [vmem:[%s4476 + $0xb4] sm:$0xf]
      %v4523 = vld [vmem:[%s4476 + $0xb8] sm:$0xf]
      %v4524 = vld [vmem:[%s4476 + $0xbc] sm:$0xf]
      %v4525 = vld [vmem:[%s4476 + $0xc0] sm:$0xf]
      %v4526 = vld [vmem:[%s4476 + $0xc4] sm:$0xf]
      %v4527 = vld [vmem:[%s4476 + $0xc8] sm:$0xf]
      %v4528 = vld [vmem:[%s4476 + $0xcc] sm:$0xf]
      %v4529 = vld [vmem:[%s4476 + $0xd0] sm:$0xf]
      %v4530 = vld [vmem:[%s4476 + $0xd4] sm:$0xf]
      %v4531 = vld [vmem:[%s4476 + $0xd8] sm:$0xf]
      %v4532 = vld [vmem:[%s4476 + $0xdc] sm:$0xf]
      %v4533 = vld [vmem:[%s4476 + $0xe0] sm:$0xf]
      %v4534 = vld [vmem:[%s4476 + $0xe4] sm:$0xf]
      %v4535 = vld [vmem:[%s4476 + $0xe8] sm:$0xf]
      %v4536 = vld [vmem:[%s4476 + $0xec] sm:$0xf]
      %v4537 = vld [vmem:[%s4476 + $0xf0] sm:$0xf]
      %v4538 = vld [vmem:[%s4476 + $0xf4] sm:$0xf]
      %v4539 = vld [vmem:[%s4476 + $0xf8] sm:$0xf]
      %v4540 = vld [vmem:[%s4476 + $0xfc] sm:$0xf]
      %v4541 = vunpack.c.l.b16 %v4265
      %v4542 = vunpack.c.h.b16 %v4265
      %v4543 = vunpack.c.l.b16 %v4279
      %v4544 = vunpack.c.h.b16 %v4279
      %v4545 = vunpack.c.l.b16 %v4293
      %v4546 = vunpack.c.h.b16 %v4293
      %v4547 = vunpack.c.l.b16 %v4307
      %v4548 = vunpack.c.h.b16 %v4307
      %v4549 = vunpack.c.l.b16 %v4321
      %v4550 = vunpack.c.h.b16 %v4321
      %v4551 = vunpack.c.l.b16 %v4335
      %v4552 = vunpack.c.h.b16 %v4335
      %v4553 = vunpack.c.l.b16 %v4349
      %v4554 = vunpack.c.h.b16 %v4349
      %v4555 = vunpack.c.l.b16 %v4363
      %v4556 = vunpack.c.h.b16 %v4363
      %v4557 = vunpack.c.l.b16 %v4377
      %v4558 = vunpack.c.h.b16 %v4377
      %v4559 = vunpack.c.l.b16 %v4391
      %v4560 = vunpack.c.h.b16 %v4391
      %v4561 = vunpack.c.l.b16 %v4405
      %v4562 = vunpack.c.h.b16 %v4405
      %v4563 = vunpack.c.l.b16 %v4419
      %v4564 = vunpack.c.h.b16 %v4419
      %v4565 = vunpack.c.l.b16 %v4433
      %v4566 = vunpack.c.h.b16 %v4433
      %v4567 = vunpack.c.l.b16 %v4447
      %v4568 = vunpack.c.h.b16 %v4447
      %v4569 = vunpack.c.l.b16 %v4461
      %v4570 = vunpack.c.h.b16 %v4461
      %v4571 = vunpack.c.l.b16 %v4475
      %v4572 = vunpack.c.h.b16 %v4475
      %v4573 = vpack.c.b16 %v4545, %v4541
      %v4574 = vpack.c.b16 %v4546, %v4542
      %v4575 = vpack.c.b16 %v4547, %v4543
      %v4576 = vpack.c.b16 %v4548, %v4544
      %v4577 = vpack.c.b16 %v4553, %v4549
      %v4578 = vpack.c.b16 %v4554, %v4550
      %v4579 = vpack.c.b16 %v4555, %v4551
      %v4580 = vpack.c.b16 %v4556, %v4552
      %v4581 = vpack.c.b16 %v4561, %v4557
      %v4582 = vpack.c.b16 %v4562, %v4558
      %v4583 = vpack.c.b16 %v4563, %v4559
      %v4584 = vpack.c.b16 %v4564, %v4560
      %v4585 = vpack.c.b16 %v4569, %v4565
      %v4586 = vpack.c.b16 %v4570, %v4566
      %v4587 = vpack.c.b16 %v4571, %v4567
      %v4588 = vpack.c.b16 %v4572, %v4568
      %v4669 = vunpack.c.l.b16 %v4477
      %v4670 = vunpack.c.l.b16 %v4478
      %v4671 = vunpack.c.l.b16 %v4479
      %v4672 = vunpack.c.l.b16 %v4480
      %v4673 = vunpack.c.l.b16 %v4481
      %v4674 = vunpack.c.l.b16 %v4482
      %v4675 = vunpack.c.l.b16 %v4483
      %v4676 = vunpack.c.l.b16 %v4484
      %v4677 = vunpack.c.l.b16 %v4485
      %v4678 = vunpack.c.l.b16 %v4486
      %v4679 = vunpack.c.l.b16 %v4487
      %v4680 = vunpack.c.l.b16 %v4488
      %v4681 = vunpack.c.l.b16 %v4489
      %v4682 = vunpack.c.l.b16 %v4490
      %v4683 = vunpack.c.l.b16 %v4491
      %v4684 = vunpack.c.l.b16 %v4492
      %v4685 = vunpack.c.l.b16 %v4493
      %v4686 = vunpack.c.l.b16 %v4494
      %v4687 = vunpack.c.l.b16 %v4495
      %v4688 = vunpack.c.l.b16 %v4496
      %v4689 = vunpack.c.l.b16 %v4497
      %v4690 = vunpack.c.l.b16 %v4498
      %v4691 = vunpack.c.l.b16 %v4499
      %v4692 = vunpack.c.l.b16 %v4500
      %v4693 = vunpack.c.l.b16 %v4501
      %v4694 = vunpack.c.l.b16 %v4502
      %v4695 = vunpack.c.l.b16 %v4503
      %v4696 = vunpack.c.l.b16 %v4504
      %v4697 = vunpack.c.l.b16 %v4505
      %v4698 = vunpack.c.l.b16 %v4506
      %v4699 = vunpack.c.l.b16 %v4507
      %v4700 = vunpack.c.l.b16 %v4508
      %v4701 = vunpack.c.l.b16 %v4509
      %v4702 = vunpack.c.l.b16 %v4510
      %v4703 = vunpack.c.l.b16 %v4511
      %v4704 = vunpack.c.l.b16 %v4512
      %v4705 = vunpack.c.l.b16 %v4513
      %v4706 = vunpack.c.l.b16 %v4514
      %v4707 = vunpack.c.l.b16 %v4515
      %v4708 = vunpack.c.l.b16 %v4516
      %v4709 = vunpack.c.l.b16 %v4517
      %v4710 = vunpack.c.l.b16 %v4518
      %v4711 = vunpack.c.l.b16 %v4519
      %v4712 = vunpack.c.l.b16 %v4520
      %v4713 = vunpack.c.l.b16 %v4521
      %v4714 = vunpack.c.l.b16 %v4522
      %v4715 = vunpack.c.l.b16 %v4523
      %v4716 = vunpack.c.l.b16 %v4524
      %v4717 = vunpack.c.l.b16 %v4525
      %v4718 = vunpack.c.l.b16 %v4526
      %v4719 = vunpack.c.l.b16 %v4527
      %v4720 = vunpack.c.l.b16 %v4528
      %v4721 = vunpack.c.l.b16 %v4529
      %v4722 = vunpack.c.l.b16 %v4530
      %v4723 = vunpack.c.l.b16 %v4531
      %v4724 = vunpack.c.l.b16 %v4532
      %v4725 = vunpack.c.l.b16 %v4533
      %v4726 = vunpack.c.l.b16 %v4534
      %v4727 = vunpack.c.l.b16 %v4535
      %v4728 = vunpack.c.l.b16 %v4536
      %v4729 = vunpack.c.l.b16 %v4537
      %v4730 = vunpack.c.l.b16 %v4538
      %v4731 = vunpack.c.l.b16 %v4539
      %v4732 = vunpack.c.l.b16 %v4540
      %v4733 = vpack.c.b16 %v4670, %v4669
      %v4734 = vpack.c.b16 %v4672, %v4671
      %v4735 = vpack.c.b16 %v4674, %v4673
      %v4736 = vpack.c.b16 %v4676, %v4675
      %v4737 = vpack.c.b16 %v4678, %v4677
      %v4738 = vpack.c.b16 %v4680, %v4679
      %v4739 = vpack.c.b16 %v4682, %v4681
      %v4740 = vpack.c.b16 %v4684, %v4683
      %v4741 = vpack.c.b16 %v4686, %v4685
      %v4742 = vpack.c.b16 %v4688, %v4687
      %v4743 = vpack.c.b16 %v4690, %v4689
      %v4744 = vpack.c.b16 %v4692, %v4691
      %v4745 = vpack.c.b16 %v4694, %v4693
      %v4746 = vpack.c.b16 %v4696, %v4695
      %v4747 = vpack.c.b16 %v4698, %v4697
      %v4748 = vpack.c.b16 %v4700, %v4699
      %v4749 = vpack.c.b16 %v4702, %v4701
      %v4750 = vpack.c.b16 %v4704, %v4703
      %v4751 = vpack.c.b16 %v4706, %v4705
      %v4752 = vpack.c.b16 %v4708, %v4707
      %v4753 = vpack.c.b16 %v4710, %v4709
      %v4754 = vpack.c.b16 %v4712, %v4711
      %v4755 = vpack.c.b16 %v4714, %v4713
      %v4756 = vpack.c.b16 %v4716, %v4715
      %v4757 = vpack.c.b16 %v4718, %v4717
      %v4758 = vpack.c.b16 %v4720, %v4719
      %v4759 = vpack.c.b16 %v4722, %v4721
      %v4760 = vpack.c.b16 %v4724, %v4723
      %v4761 = vpack.c.b16 %v4726, %v4725
      %v4762 = vpack.c.b16 %v4728, %v4727
      %v4763 = vpack.c.b16 %v4730, %v4729
      %v4764 = vpack.c.b16 %v4732, %v4731
      %4797 = vmatprep.subr.bf16.mxu0 0
      %4798 = vmatpush1.bf16.msra.mxu0 %v4740
      %4799 = vmatprep.subr.bf16.mxu0 0
      %4800 = vmatpush1.bf16.msra.mxu0 %v4739
      %4801 = vmatprep.subr.bf16.mxu0 0
      %4802 = vmatpush1.bf16.msra.mxu0 %v4738
      %4803 = vmatprep.subr.bf16.mxu0 0
      %4804 = vmatpush1.bf16.msra.mxu0 %v4737
      %4805 = vmatprep.subr.bf16.mxu0 0
      %4806 = vmatpush1.bf16.msra.mxu0 %v4736
      %4807 = vmatprep.subr.bf16.mxu0 0
      %4808 = vmatpush1.bf16.msra.mxu0 %v4735
      %4809 = vmatprep.subr.bf16.mxu0 0
      %4810 = vmatpush1.bf16.msra.mxu0 %v4734
      %4811 = vmatprep.subr.bf16.mxu0 0
      %4812 = vmatpush1.bf16.msra.mxu0 %v4733
      %4813 = vmatprep.subr.bf16.mxu0 0
      %4814 = vmatpush2.bf16.msra.mxu0 %v4748
      %4815 = vmatprep.subr.bf16.mxu0 0
      %4816 = vmatpush2.bf16.msra.mxu0 %v4747
      %4817 = vmatprep.subr.bf16.mxu0 0
      %4818 = vmatpush2.bf16.msra.mxu0 %v4746
      %4819 = vmatprep.subr.bf16.mxu0 0
      %4820 = vmatpush2.bf16.msra.mxu0 %v4745
      %4821 = vmatprep.subr.bf16.mxu0 0
      %4822 = vmatpush2.bf16.msra.mxu0 %v4744
      %4823 = vmatprep.subr.bf16.mxu0 0
      %4824 = vmatpush2.bf16.msra.mxu0 %v4743
      %4825 = vmatprep.subr.bf16.mxu0 0
      %4826 = vmatpush2.bf16.msra.mxu0 %v4742
      %4827 = vmatprep.subr.bf16.mxu0 0
      %4828 = vmatpush2.bf16.msra.mxu0 %v4741
      %4829 = vmatprep.mubr.bf16.mxu0 %v4574
      %4830 = vmatmul.mubr.bf16.gmra.mxu0 %v4573
      %v4831 = vpop.f32.mrf.mxu0
      %v4832 = vadd.f32 0.0, %v4831
      %v4833 = vpop.f32.mrf.mxu0
      %v4834 = vpop.f32.mrf.mxu0
      %v4835 = vadd.f32 0.0, %v4834
      %v4836 = vpop.f32.mrf.mxu0
      %4837 = vmatprep.mubr.bf16.mxu0 %v4578
      %4838 = vmatmul.mubr.bf16.gmra.mxu0 %v4577
      %v4839 = vpop.f32.mrf.mxu0
      %v4840 = vadd.f32 0.0, %v4839
      %v4841 = vpop.f32.mrf.mxu0
      %v4842 = vpop.f32.mrf.mxu0
      %v4843 = vadd.f32 0.0, %v4842
      %v4844 = vpop.f32.mrf.mxu0
      %4845 = vmatprep.mubr.bf16.mxu0 %v4582
      %4846 = vmatmul.mubr.bf16.gmra.mxu0 %v4581
      %v4847 = vpop.f32.mrf.mxu0
      %v4848 = vadd.f32 0.0, %v4847
      %v4849 = vpop.f32.mrf.mxu0
      %v4850 = vpop.f32.mrf.mxu0
      %v4851 = vadd.f32 0.0, %v4850
      %v4852 = vpop.f32.mrf.mxu0
      %4853 = vmatprep.mubr.bf16.mxu0 %v4586
      %4854 = vmatmul.mubr.bf16.gmra.mxu0 %v4585
      %v4855 = vpop.f32.mrf.mxu0
      %v4856 = vadd.f32 0.0, %v4855
      %v4857 = vpop.f32.mrf.mxu0
      %v4858 = vpop.f32.mrf.mxu0
      %v4859 = vadd.f32 0.0, %v4858
      %v4860 = vpop.f32.mrf.mxu0
      %4861 = vdwg.mxu0
      %4862 = vmatprep.subr.bf16.mxu0 0
      %4863 = vmatpush1.bf16.msra.mxu0 %v4756
      %4864 = vmatprep.subr.bf16.mxu0 0
      %4865 = vmatpush1.bf16.msra.mxu0 %v4755
      %4866 = vmatprep.subr.bf16.mxu0 0
      %4867 = vmatpush1.bf16.msra.mxu0 %v4754
      %4868 = vmatprep.subr.bf16.mxu0 0
      %4869 = vmatpush1.bf16.msra.mxu0 %v4753
      %4870 = vmatprep.subr.bf16.mxu0 0
      %4871 = vmatpush1.bf16.msra.mxu0 %v4752
      %4872 = vmatprep.subr.bf16.mxu0 0
      %4873 = vmatpush1.bf16.msra.mxu0 %v4751
      %4874 = vmatprep.subr.bf16.mxu0 0
      %4875 = vmatpush1.bf16.msra.mxu0 %v4750
      %4876 = vmatprep.subr.bf16.mxu0 0
      %4877 = vmatpush1.bf16.msra.mxu0 %v4749
      %4878 = vmatprep.subr.bf16.mxu0 0
      %4879 = vmatpush2.bf16.msra.mxu0 %v4764
      %4880 = vmatprep.subr.bf16.mxu0 0
      %4881 = vmatpush2.bf16.msra.mxu0 %v4763
      %4882 = vmatprep.subr.bf16.mxu0 0
      %4883 = vmatpush2.bf16.msra.mxu0 %v4762
      %4884 = vmatprep.subr.bf16.mxu0 0
      %4885 = vmatpush2.bf16.msra.mxu0 %v4761
      %4886 = vmatprep.subr.bf16.mxu0 0
      %4887 = vmatpush2.bf16.msra.mxu0 %v4760
      %4888 = vmatprep.subr.bf16.mxu0 0
      %4889 = vmatpush2.bf16.msra.mxu0 %v4759
      %4890 = vmatprep.subr.bf16.mxu0 0
      %4891 = vmatpush2.bf16.msra.mxu0 %v4758
      %4892 = vmatprep.subr.bf16.mxu0 0
      %4893 = vmatpush2.bf16.msra.mxu0 %v4757
      %4894 = vmatprep.mubr.bf16.mxu0 %v4576
      %4895 = vmatmul.mubr.bf16.gmra.mxu0 %v4575
      %v4896 = vpop.f32.mrf.mxu0
      %v4897 = vadd.f32 %v4832, %v4896
      %v4898 = vpop.f32.mrf.mxu0
      %v4899 = vpop.f32.mrf.mxu0
      %v4900 = vadd.f32 %v4835, %v4899
      %v4901 = vpop.f32.mrf.mxu0
      %4902 = vmatprep.mubr.bf16.mxu0 %v4580
      %4903 = vmatmul.mubr.bf16.gmra.mxu0 %v4579
      %v4904 = vpop.f32.mrf.mxu0
      %v4905 = vadd.f32 %v4840, %v4904
      %v4906 = vpop.f32.mrf.mxu0
      %v4907 = vpop.f32.mrf.mxu0
      %v4908 = vadd.f32 %v4843, %v4907
      %v4909 = vpop.f32.mrf.mxu0
      %4910 = vmatprep.mubr.bf16.mxu0 %v4584
      %4911 = vmatmul.mubr.bf16.gmra.mxu0 %v4583
      %v4912 = vpop.f32.mrf.mxu0
      %v4913 = vadd.f32 %v4848, %v4912
      %v4914 = vpop.f32.mrf.mxu0
      %v4915 = vpop.f32.mrf.mxu0
      %v4916 = vadd.f32 %v4851, %v4915
      %v4917 = vpop.f32.mrf.mxu0
      %4918 = vmatprep.mubr.bf16.mxu0 %v4588
      %4919 = vmatmul.mubr.bf16.gmra.mxu0 %v4587
      %v4920 = vpop.f32.mrf.mxu0
      %v4921 = vadd.f32 %v4856, %v4920
      %v4922 = vpop.f32.mrf.mxu0
      %v4923 = vpop.f32.mrf.mxu0
      %v4924 = vadd.f32 %v4859, %v4923
      %v4925 = vpop.f32.mrf.mxu0
      %4926 = vdwg.mxu0
      %v4927 = vadd.f32 %v4212, %v4897
      %v4928 = vadd.f32 %v4213, %v4900
      %v4929 = vadd.f32 %v4214, %v4905
      %v4930 = vadd.f32 %v4215, %v4908
      %v4931 = vadd.f32 %v4216, %v4913
      %v4932 = vadd.f32 %v4217, %v4916
      %v4933 = vadd.f32 %v4218, %v4921
      %v4934 = vadd.f32 %v4219, %v4924
      %v4935 = vld [vmem:[%s3728] sm:$0xee]
      %v4936 = vld [vmem:[%s3728 + $0x8] sm:$0xee]
      %v4937 = vld [vmem:[%s3728 + $0x20] sm:$0xee]
      %v4938 = vld [vmem:[%s3728 + $0x28] sm:$0xee]
      %v4939 = vld [vmem:[%s3728 + $0x40] sm:$0xee]
      %v4940 = vld [vmem:[%s3728 + $0x48] sm:$0xee]
      %v4941 = vld [vmem:[%s3728 + $0x60] sm:$0xee]
      %v4942 = vld [vmem:[%s3728 + $0x68] sm:$0xee]
      %v4943 = vld [vmem:[%s3728 + $0x80] sm:$0xee]
      %v4944 = vld [vmem:[%s3728 + $0x88] sm:$0xee]
      %v4945 = vld [vmem:[%s3728 + $0xa0] sm:$0xee]
      %v4946 = vld [vmem:[%s3728 + $0xa8] sm:$0xee]
      %v4947 = vld [vmem:[%s3728 + $0xc0] sm:$0xee]
      %v4948 = vld [vmem:[%s3728 + $0xc8] sm:$0xee]
      %v4949 = vld [vmem:[%s3728 + $0xe0] sm:$0xee]
      %v4950 = vld [vmem:[%s3728 + $0xe8] sm:$0xee]
      %v4983 = vrot.slane %v4935, 5
      %v4984 = vrot.slane %v4983, 4
      %v4985 = vrot.slane %v4222, 5
      %v4986 = vsel %vm1426, %v4984, %v4985
      %v4987 = vrot.slane %v4936, 5
      %v4988 = vrot.slane %v4987, 4
      %v4989 = vrot.slane %v4223, 5
      %v4990 = vsel %vm1426, %v4988, %v4989
      %v4991 = vrot.slane %v4937, 5
      %v4992 = vrot.slane %v4991, 4
      %v4993 = vrot.slane %v4226, 5
      %v4994 = vsel %vm1426, %v4992, %v4993
      %v4995 = vrot.slane %v4938, 5
      %v4996 = vrot.slane %v4995, 4
      %v4997 = vrot.slane %v4227, 5
      %v4998 = vsel %vm1426, %v4996, %v4997
      %v4999 = vrot.slane %v4939, 5
      %v5000 = vrot.slane %v4999, 4
      %v5001 = vrot.slane %v4230, 5
      %v5002 = vsel %vm1426, %v5000, %v5001
      %v5003 = vrot.slane %v4940, 5
      %v5004 = vrot.slane %v5003, 4
      %v5005 = vrot.slane %v4231, 5
      %v5006 = vsel %vm1426, %v5004, %v5005
      %v5007 = vrot.slane %v4941, 5
      %v5008 = vrot.slane %v5007, 4
      %v5009 = vrot.slane %v4234, 5
      %v5010 = vsel %vm1426, %v5008, %v5009
      %v5011 = vrot.slane %v4942, 5
      %v5012 = vrot.slane %v5011, 4
      %v5013 = vrot.slane %v4235, 5
      %v5014 = vsel %vm1426, %v5012, %v5013
      %v5015 = vrot.slane %v4943, 5
      %v5016 = vrot.slane %v5015, 4
      %v5017 = vrot.slane %v4238, 5
      %v5018 = vsel %vm1426, %v5016, %v5017
      %v5019 = vrot.slane %v4944, 5
      %v5020 = vrot.slane %v5019, 4
      %v5021 = vrot.slane %v4239, 5
      %v5022 = vsel %vm1426, %v5020, %v5021
      %v5023 = vrot.slane %v4945, 5
      %v5024 = vrot.slane %v5023, 4
      %v5025 = vrot.slane %v4242, 5
      %v5026 = vsel %vm1426, %v5024, %v5025
      %v5027 = vrot.slane %v4946, 5
      %v5028 = vrot.slane %v5027, 4
      %v5029 = vrot.slane %v4243, 5
      %v5030 = vsel %vm1426, %v5028, %v5029
      %v5031 = vrot.slane %v4947, 5
      %v5032 = vrot.slane %v5031, 4
      %v5033 = vrot.slane %v4246, 5
      %v5034 = vsel %vm1426, %v5032, %v5033
      %v5035 = vrot.slane %v4948, 5
      %v5036 = vrot.slane %v5035, 4
      %v5037 = vrot.slane %v4247, 5
      %v5038 = vsel %vm1426, %v5036, %v5037
      %v5039 = vrot.slane %v4949, 5
      %v5040 = vrot.slane %v5039, 4
      %v5041 = vrot.slane %v4250, 5
      %v5042 = vsel %vm1426, %v5040, %v5041
      %v5043 = vrot.slane %v4950, 5
      %v5044 = vrot.slane %v5043, 4
      %v5045 = vrot.slane %v4251, 5
      %v5046 = vsel %vm1426, %v5044, %v5045
      %s5047 = scalar_lea.vmem %s1, 2048
      %v5048 = vld [vmem:[%s5047] sm:$0xf]
      %v5049 = vld [vmem:[%s5047 + $0x4] sm:$0xf]
      %v5050 = vld [vmem:[%s5047 + $0x8] sm:$0xf]
      %v5051 = vld [vmem:[%s5047 + $0xc] sm:$0xf]
      %v5052 = vld [vmem:[%s5047 + $0x10] sm:$0xf]
      %v5053 = vld [vmem:[%s5047 + $0x14] sm:$0xf]
      %v5054 = vld [vmem:[%s5047 + $0x18] sm:$0xf]
      %v5055 = vld [vmem:[%s5047 + $0x1c] sm:$0xf]
      %v5056 = vld [vmem:[%s5047 + $0x20] sm:$0xf]
      %v5057 = vld [vmem:[%s5047 + $0x24] sm:$0xf]
      %v5058 = vld [vmem:[%s5047 + $0x28] sm:$0xf]
      %v5059 = vld [vmem:[%s5047 + $0x2c] sm:$0xf]
      %v5060 = vld [vmem:[%s5047 + $0x30] sm:$0xf]
      %v5061 = vld [vmem:[%s5047 + $0x34] sm:$0xf]
      %v5062 = vld [vmem:[%s5047 + $0x38] sm:$0xf]
      %v5063 = vld [vmem:[%s5047 + $0x3c] sm:$0xf]
      %v5064 = vld [vmem:[%s5047 + $0x40] sm:$0xf]
      %v5065 = vld [vmem:[%s5047 + $0x44] sm:$0xf]
      %v5066 = vld [vmem:[%s5047 + $0x48] sm:$0xf]
      %v5067 = vld [vmem:[%s5047 + $0x4c] sm:$0xf]
      %v5068 = vld [vmem:[%s5047 + $0x50] sm:$0xf]
      %v5069 = vld [vmem:[%s5047 + $0x54] sm:$0xf]
      %v5070 = vld [vmem:[%s5047 + $0x58] sm:$0xf]
      %v5071 = vld [vmem:[%s5047 + $0x5c] sm:$0xf]
      %v5072 = vld [vmem:[%s5047 + $0x60] sm:$0xf]
      %v5073 = vld [vmem:[%s5047 + $0x64] sm:$0xf]
      %v5074 = vld [vmem:[%s5047 + $0x68] sm:$0xf]
      %v5075 = vld [vmem:[%s5047 + $0x6c] sm:$0xf]
      %v5076 = vld [vmem:[%s5047 + $0x70] sm:$0xf]
      %v5077 = vld [vmem:[%s5047 + $0x74] sm:$0xf]
      %v5078 = vld [vmem:[%s5047 + $0x78] sm:$0xf]
      %v5079 = vld [vmem:[%s5047 + $0x7c] sm:$0xf]
      %v5080 = vld [vmem:[%s5047 + $0x80] sm:$0xf]
      %v5081 = vld [vmem:[%s5047 + $0x84] sm:$0xf]
      %v5082 = vld [vmem:[%s5047 + $0x88] sm:$0xf]
      %v5083 = vld [vmem:[%s5047 + $0x8c] sm:$0xf]
      %v5084 = vld [vmem:[%s5047 + $0x90] sm:$0xf]
      %v5085 = vld [vmem:[%s5047 + $0x94] sm:$0xf]
      %v5086 = vld [vmem:[%s5047 + $0x98] sm:$0xf]
      %v5087 = vld [vmem:[%s5047 + $0x9c] sm:$0xf]
      %v5088 = vld [vmem:[%s5047 + $0xa0] sm:$0xf]
      %v5089 = vld [vmem:[%s5047 + $0xa4] sm:$0xf]
      %v5090 = vld [vmem:[%s5047 + $0xa8] sm:$0xf]
      %v5091 = vld [vmem:[%s5047 + $0xac] sm:$0xf]
      %v5092 = vld [vmem:[%s5047 + $0xb0] sm:$0xf]
      %v5093 = vld [vmem:[%s5047 + $0xb4] sm:$0xf]
      %v5094 = vld [vmem:[%s5047 + $0xb8] sm:$0xf]
      %v5095 = vld [vmem:[%s5047 + $0xbc] sm:$0xf]
      %v5096 = vld [vmem:[%s5047 + $0xc0] sm:$0xf]
      %v5097 = vld [vmem:[%s5047 + $0xc4] sm:$0xf]
      %v5098 = vld [vmem:[%s5047 + $0xc8] sm:$0xf]
      %v5099 = vld [vmem:[%s5047 + $0xcc] sm:$0xf]
      %v5100 = vld [vmem:[%s5047 + $0xd0] sm:$0xf]
      %v5101 = vld [vmem:[%s5047 + $0xd4] sm:$0xf]
      %v5102 = vld [vmem:[%s5047 + $0xd8] sm:$0xf]
      %v5103 = vld [vmem:[%s5047 + $0xdc] sm:$0xf]
      %v5104 = vld [vmem:[%s5047 + $0xe0] sm:$0xf]
      %v5105 = vld [vmem:[%s5047 + $0xe4] sm:$0xf]
      %v5106 = vld [vmem:[%s5047 + $0xe8] sm:$0xf]
      %v5107 = vld [vmem:[%s5047 + $0xec] sm:$0xf]
      %v5108 = vld [vmem:[%s5047 + $0xf0] sm:$0xf]
      %v5109 = vld [vmem:[%s5047 + $0xf4] sm:$0xf]
      %v5110 = vld [vmem:[%s5047 + $0xf8] sm:$0xf]
      %v5111 = vld [vmem:[%s5047 + $0xfc] sm:$0xf]
      %v5112 = vunpack.c.l.b16 %v4986
      %v5113 = vunpack.c.h.b16 %v4986
      %v5114 = vunpack.c.l.b16 %v4990
      %v5115 = vunpack.c.h.b16 %v4990
      %v5116 = vunpack.c.l.b16 %v4994
      %v5117 = vunpack.c.h.b16 %v4994
      %v5118 = vunpack.c.l.b16 %v4998
      %v5119 = vunpack.c.h.b16 %v4998
      %v5120 = vunpack.c.l.b16 %v5002
      %v5121 = vunpack.c.h.b16 %v5002
      %v5122 = vunpack.c.l.b16 %v5006
      %v5123 = vunpack.c.h.b16 %v5006
      %v5124 = vunpack.c.l.b16 %v5010
      %v5125 = vunpack.c.h.b16 %v5010
      %v5126 = vunpack.c.l.b16 %v5014
      %v5127 = vunpack.c.h.b16 %v5014
      %v5128 = vunpack.c.l.b16 %v5018
      %v5129 = vunpack.c.h.b16 %v5018
      %v5130 = vunpack.c.l.b16 %v5022
      %v5131 = vunpack.c.h.b16 %v5022
      %v5132 = vunpack.c.l.b16 %v5026
      %v5133 = vunpack.c.h.b16 %v5026
      %v5134 = vunpack.c.l.b16 %v5030
      %v5135 = vunpack.c.h.b16 %v5030
      %v5136 = vunpack.c.l.b16 %v5034
      %v5137 = vunpack.c.h.b16 %v5034
      %v5138 = vunpack.c.l.b16 %v5038
      %v5139 = vunpack.c.h.b16 %v5038
      %v5140 = vunpack.c.l.b16 %v5042
      %v5141 = vunpack.c.h.b16 %v5042
      %v5142 = vunpack.c.l.b16 %v5046
      %v5143 = vunpack.c.h.b16 %v5046
      %v5144 = vpack.c.b16 %v5116, %v5112
      %v5145 = vpack.c.b16 %v5117, %v5113
      %v5146 = vpack.c.b16 %v5118, %v5114
      %v5147 = vpack.c.b16 %v5119, %v5115
      %v5148 = vpack.c.b16 %v5124, %v5120
      %v5149 = vpack.c.b16 %v5125, %v5121
      %v5150 = vpack.c.b16 %v5126, %v5122
      %v5151 = vpack.c.b16 %v5127, %v5123
      %v5152 = vpack.c.b16 %v5132, %v5128
      %v5153 = vpack.c.b16 %v5133, %v5129
      %v5154 = vpack.c.b16 %v5134, %v5130
      %v5155 = vpack.c.b16 %v5135, %v5131
      %v5156 = vpack.c.b16 %v5140, %v5136
      %v5157 = vpack.c.b16 %v5141, %v5137
      %v5158 = vpack.c.b16 %v5142, %v5138
      %v5159 = vpack.c.b16 %v5143, %v5139
      %v5240 = vunpack.c.l.b16 %v5048
      %v5241 = vunpack.c.l.b16 %v5049
      %v5242 = vunpack.c.l.b16 %v5050
      %v5243 = vunpack.c.l.b16 %v5051
      %v5244 = vunpack.c.l.b16 %v5052
      %v5245 = vunpack.c.l.b16 %v5053
      %v5246 = vunpack.c.l.b16 %v5054
      %v5247 = vunpack.c.l.b16 %v5055
      %v5248 = vunpack.c.l.b16 %v5056
      %v5249 = vunpack.c.l.b16 %v5057
      %v5250 = vunpack.c.l.b16 %v5058
      %v5251 = vunpack.c.l.b16 %v5059
      %v5252 = vunpack.c.l.b16 %v5060
      %v5253 = vunpack.c.l.b16 %v5061
      %v5254 = vunpack.c.l.b16 %v5062
      %v5255 = vunpack.c.l.b16 %v5063
      %v5256 = vunpack.c.l.b16 %v5064
      %v5257 = vunpack.c.l.b16 %v5065
      %v5258 = vunpack.c.l.b16 %v5066
      %v5259 = vunpack.c.l.b16 %v5067
      %v5260 = vunpack.c.l.b16 %v5068
      %v5261 = vunpack.c.l.b16 %v5069
      %v5262 = vunpack.c.l.b16 %v5070
      %v5263 = vunpack.c.l.b16 %v5071
      %v5264 = vunpack.c.l.b16 %v5072
      %v5265 = vunpack.c.l.b16 %v5073
      %v5266 = vunpack.c.l.b16 %v5074
      %v5267 = vunpack.c.l.b16 %v5075
      %v5268 = vunpack.c.l.b16 %v5076
      %v5269 = vunpack.c.l.b16 %v5077
      %v5270 = vunpack.c.l.b16 %v5078
      %v5271 = vunpack.c.l.b16 %v5079
      %v5272 = vunpack.c.l.b16 %v5080
      %v5273 = vunpack.c.l.b16 %v5081
      %v5274 = vunpack.c.l.b16 %v5082
      %v5275 = vunpack.c.l.b16 %v5083
      %v5276 = vunpack.c.l.b16 %v5084
      %v5277 = vunpack.c.l.b16 %v5085
      %v5278 = vunpack.c.l.b16 %v5086
      %v5279 = vunpack.c.l.b16 %v5087
      %v5280 = vunpack.c.l.b16 %v5088
      %v5281 = vunpack.c.l.b16 %v5089
      %v5282 = vunpack.c.l.b16 %v5090
      %v5283 = vunpack.c.l.b16 %v5091
      %v5284 = vunpack.c.l.b16 %v5092
      %v5285 = vunpack.c.l.b16 %v5093
      %v5286 = vunpack.c.l.b16 %v5094
      %v5287 = vunpack.c.l.b16 %v5095
      %v5288 = vunpack.c.l.b16 %v5096
      %v5289 = vunpack.c.l.b16 %v5097
      %v5290 = vunpack.c.l.b16 %v5098
      %v5291 = vunpack.c.l.b16 %v5099
      %v5292 = vunpack.c.l.b16 %v5100
      %v5293 = vunpack.c.l.b16 %v5101
      %v5294 = vunpack.c.l.b16 %v5102
      %v5295 = vunpack.c.l.b16 %v5103
      %v5296 = vunpack.c.l.b16 %v5104
      %v5297 = vunpack.c.l.b16 %v5105
      %v5298 = vunpack.c.l.b16 %v5106
      %v5299 = vunpack.c.l.b16 %v5107
      %v5300 = vunpack.c.l.b16 %v5108
      %v5301 = vunpack.c.l.b16 %v5109
      %v5302 = vunpack.c.l.b16 %v5110
      %v5303 = vunpack.c.l.b16 %v5111
      %v5304 = vpack.c.b16 %v5241, %v5240
      %v5305 = vpack.c.b16 %v5243, %v5242
      %v5306 = vpack.c.b16 %v5245, %v5244
      %v5307 = vpack.c.b16 %v5247, %v5246
      %v5308 = vpack.c.b16 %v5249, %v5248
      %v5309 = vpack.c.b16 %v5251, %v5250
      %v5310 = vpack.c.b16 %v5253, %v5252
      %v5311 = vpack.c.b16 %v5255, %v5254
      %v5312 = vpack.c.b16 %v5257, %v5256
      %v5313 = vpack.c.b16 %v5259, %v5258
      %v5314 = vpack.c.b16 %v5261, %v5260
      %v5315 = vpack.c.b16 %v5263, %v5262
      %v5316 = vpack.c.b16 %v5265, %v5264
      %v5317 = vpack.c.b16 %v5267, %v5266
      %v5318 = vpack.c.b16 %v5269, %v5268
      %v5319 = vpack.c.b16 %v5271, %v5270
      %v5320 = vpack.c.b16 %v5273, %v5272
      %v5321 = vpack.c.b16 %v5275, %v5274
      %v5322 = vpack.c.b16 %v5277, %v5276
      %v5323 = vpack.c.b16 %v5279, %v5278
      %v5324 = vpack.c.b16 %v5281, %v5280
      %v5325 = vpack.c.b16 %v5283, %v5282
      %v5326 = vpack.c.b16 %v5285, %v5284
      %v5327 = vpack.c.b16 %v5287, %v5286
      %v5328 = vpack.c.b16 %v5289, %v5288
      %v5329 = vpack.c.b16 %v5291, %v5290
      %v5330 = vpack.c.b16 %v5293, %v5292
      %v5331 = vpack.c.b16 %v5295, %v5294
      %v5332 = vpack.c.b16 %v5297, %v5296
      %v5333 = vpack.c.b16 %v5299, %v5298
      %v5334 = vpack.c.b16 %v5301, %v5300
      %v5335 = vpack.c.b16 %v5303, %v5302
      %5368 = vmatprep.subr.bf16.mxu0 0
      %5369 = vmatpush1.bf16.msra.mxu0 %v5311
      %5370 = vmatprep.subr.bf16.mxu0 0
      %5371 = vmatpush1.bf16.msra.mxu0 %v5310
      %5372 = vmatprep.subr.bf16.mxu0 0
      %5373 = vmatpush1.bf16.msra.mxu0 %v5309
      %5374 = vmatprep.subr.bf16.mxu0 0
      %5375 = vmatpush1.bf16.msra.mxu0 %v5308
      %5376 = vmatprep.subr.bf16.mxu0 0
      %5377 = vmatpush1.bf16.msra.mxu0 %v5307
      %5378 = vmatprep.subr.bf16.mxu0 0
      %5379 = vmatpush1.bf16.msra.mxu0 %v5306
      %5380 = vmatprep.subr.bf16.mxu0 0
      %5381 = vmatpush1.bf16.msra.mxu0 %v5305
      %5382 = vmatprep.subr.bf16.mxu0 0
      %5383 = vmatpush1.bf16.msra.mxu0 %v5304
      %5384 = vmatprep.subr.bf16.mxu0 0
      %5385 = vmatpush2.bf16.msra.mxu0 %v5319
      %5386 = vmatprep.subr.bf16.mxu0 0
      %5387 = vmatpush2.bf16.msra.mxu0 %v5318
      %5388 = vmatprep.subr.bf16.mxu0 0
      %5389 = vmatpush2.bf16.msra.mxu0 %v5317
      %5390 = vmatprep.subr.bf16.mxu0 0
      %5391 = vmatpush2.bf16.msra.mxu0 %v5316
      %5392 = vmatprep.subr.bf16.mxu0 0
      %5393 = vmatpush2.bf16.msra.mxu0 %v5315
      %5394 = vmatprep.subr.bf16.mxu0 0
      %5395 = vmatpush2.bf16.msra.mxu0 %v5314
      %5396 = vmatprep.subr.bf16.mxu0 0
      %5397 = vmatpush2.bf16.msra.mxu0 %v5313
      %5398 = vmatprep.subr.bf16.mxu0 0
      %5399 = vmatpush2.bf16.msra.mxu0 %v5312
      %5400 = vmatprep.mubr.bf16.mxu0 %v5145
      %5401 = vmatmul.mubr.bf16.gmra.mxu0 %v5144
      %v5402 = vpop.f32.mrf.mxu0
      %v5403 = vadd.f32 0.0, %v5402
      %v5404 = vpop.f32.mrf.mxu0
      %v5405 = vpop.f32.mrf.mxu0
      %v5406 = vadd.f32 0.0, %v5405
      %v5407 = vpop.f32.mrf.mxu0
      %5408 = vmatprep.mubr.bf16.mxu0 %v5149
      %5409 = vmatmul.mubr.bf16.gmra.mxu0 %v5148
      %v5410 = vpop.f32.mrf.mxu0
      %v5411 = vadd.f32 0.0, %v5410
      %v5412 = vpop.f32.mrf.mxu0
      %v5413 = vpop.f32.mrf.mxu0
      %v5414 = vadd.f32 0.0, %v5413
      %v5415 = vpop.f32.mrf.mxu0
      %5416 = vmatprep.mubr.bf16.mxu0 %v5153
      %5417 = vmatmul.mubr.bf16.gmra.mxu0 %v5152
      %v5418 = vpop.f32.mrf.mxu0
      %v5419 = vadd.f32 0.0, %v5418
      %v5420 = vpop.f32.mrf.mxu0
      %v5421 = vpop.f32.mrf.mxu0
      %v5422 = vadd.f32 0.0, %v5421
      %v5423 = vpop.f32.mrf.mxu0
      %5424 = vmatprep.mubr.bf16.mxu0 %v5157
      %5425 = vmatmul.mubr.bf16.gmra.mxu0 %v5156
      %v5426 = vpop.f32.mrf.mxu0
      %v5427 = vadd.f32 0.0, %v5426
      %v5428 = vpop.f32.mrf.mxu0
      %v5429 = vpop.f32.mrf.mxu0
      %v5430 = vadd.f32 0.0, %v5429
      %v5431 = vpop.f32.mrf.mxu0
      %5432 = vdwg.mxu0
      %5433 = vmatprep.subr.bf16.mxu0 0
      %5434 = vmatpush1.bf16.msra.mxu0 %v5327
      %5435 = vmatprep.subr.bf16.mxu0 0
      %5436 = vmatpush1.bf16.msra.mxu0 %v5326
      %5437 = vmatprep.subr.bf16.mxu0 0
      %5438 = vmatpush1.bf16.msra.mxu0 %v5325
      %5439 = vmatprep.subr.bf16.mxu0 0
      %5440 = vmatpush1.bf16.msra.mxu0 %v5324
      %5441 = vmatprep.subr.bf16.mxu0 0
      %5442 = vmatpush1.bf16.msra.mxu0 %v5323
      %5443 = vmatprep.subr.bf16.mxu0 0
      %5444 = vmatpush1.bf16.msra.mxu0 %v5322
      %5445 = vmatprep.subr.bf16.mxu0 0
      %5446 = vmatpush1.bf16.msra.mxu0 %v5321
      %5447 = vmatprep.subr.bf16.mxu0 0
      %5448 = vmatpush1.bf16.msra.mxu0 %v5320
      %5449 = vmatprep.subr.bf16.mxu0 0
      %5450 = vmatpush2.bf16.msra.mxu0 %v5335
      %5451 = vmatprep.subr.bf16.mxu0 0
      %5452 = vmatpush2.bf16.msra.mxu0 %v5334
      %5453 = vmatprep.subr.bf16.mxu0 0
      %5454 = vmatpush2.bf16.msra.mxu0 %v5333
      %5455 = vmatprep.subr.bf16.mxu0 0
      %5456 = vmatpush2.bf16.msra.mxu0 %v5332
      %5457 = vmatprep.subr.bf16.mxu0 0
      %5458 = vmatpush2.bf16.msra.mxu0 %v5331
      %5459 = vmatprep.subr.bf16.mxu0 0
      %5460 = vmatpush2.bf16.msra.mxu0 %v5330
      %5461 = vmatprep.subr.bf16.mxu0 0
      %5462 = vmatpush2.bf16.msra.mxu0 %v5329
      %5463 = vmatprep.subr.bf16.mxu0 0
      %5464 = vmatpush2.bf16.msra.mxu0 %v5328
      %5465 = vmatprep.mubr.bf16.mxu0 %v5147
      %5466 = vmatmul.mubr.bf16.gmra.mxu0 %v5146
      %v5467 = vpop.f32.mrf.mxu0
      %v5468 = vadd.f32 %v5403, %v5467
      %v5469 = vpop.f32.mrf.mxu0
      %v5470 = vpop.f32.mrf.mxu0
      %v5471 = vadd.f32 %v5406, %v5470
      %v5472 = vpop.f32.mrf.mxu0
      %5473 = vmatprep.mubr.bf16.mxu0 %v5151
      %5474 = vmatmul.mubr.bf16.gmra.mxu0 %v5150
      %v5475 = vpop.f32.mrf.mxu0
      %v5476 = vadd.f32 %v5411, %v5475
      %v5477 = vpop.f32.mrf.mxu0
      %v5478 = vpop.f32.mrf.mxu0
      %v5479 = vadd.f32 %v5414, %v5478
      %v5480 = vpop.f32.mrf.mxu0
      %5481 = vmatprep.mubr.bf16.mxu0 %v5155
      %5482 = vmatmul.mubr.bf16.gmra.mxu0 %v5154
      %v5483 = vpop.f32.mrf.mxu0
      %v5484 = vadd.f32 %v5419, %v5483
      %v5485 = vpop.f32.mrf.mxu0
      %v5486 = vpop.f32.mrf.mxu0
      %v5487 = vadd.f32 %v5422, %v5486
      %v5488 = vpop.f32.mrf.mxu0
      %5489 = vmatprep.mubr.bf16.mxu0 %v5159
      %5490 = vmatmul.mubr.bf16.gmra.mxu0 %v5158
      %v5491 = vpop.f32.mrf.mxu0
      %v5492 = vadd.f32 %v5427, %v5491
      %v5493 = vpop.f32.mrf.mxu0
      %v5494 = vpop.f32.mrf.mxu0
      %v5495 = vadd.f32 %v5430, %v5494
      %v5496 = vpop.f32.mrf.mxu0
      %5497 = vdwg.mxu0
      %v5498 = vadd.f32 %v4927, %v5468
      %v5499 = vadd.f32 %v4928, %v5471
      %v5500 = vadd.f32 %v4929, %v5476
      %v5501 = vadd.f32 %v4930, %v5479
      %v5502 = vadd.f32 %v4931, %v5484
      %v5503 = vadd.f32 %v4932, %v5487
      %v5504 = vadd.f32 %v4933, %v5492
      %v5505 = vadd.f32 %v4934, %v5495
      %v5506 = vld [vmem:[%s2] sm:$0x1]
      %v5508 = vlaneseq
      %v5509 = vshrl.u32 %v5508, 7
      %v5510 = vsub.s32 0, %v5509
      %v5511 = vrot.slane %v5506, %v5510
      %v5513 = vadd.f32 %v5498, %v5511
      %v5514 = vadd.f32 %v5499, %v5511
      %v5515 = vadd.f32 %v5500, %v5511
      %v5516 = vadd.f32 %v5501, %v5511
      %v5517 = vadd.f32 %v5502, %v5511
      %v5518 = vadd.f32 %v5503, %v5511
      %v5519 = vadd.f32 %v5504, %v5511
      %v5520 = vadd.f32 %v5505, %v5511
      %vm5521 = vcmp.ge.f32.partialorder %v5513, 0.0
      %vm5522 = vcmp.ge.f32.partialorder %v5514, 0.0
      %vm5523 = vcmp.ge.f32.partialorder %v5515, 0.0
      %vm5524 = vcmp.ge.f32.partialorder %v5516, 0.0
      %vm5525 = vcmp.ge.f32.partialorder %v5517, 0.0
      %vm5526 = vcmp.ge.f32.partialorder %v5518, 0.0
      %vm5527 = vcmp.ge.f32.partialorder %v5519, 0.0
      %vm5528 = vcmp.ge.f32.partialorder %v5520, 0.0
      %v5529 = vmul.f32 %v5513, 0.25
      %v5530 = vmul.f32 %v5514, 0.25
      %v5531 = vmul.f32 %v5515, 0.25
      %v5532 = vmul.f32 %v5516, 0.25
      %v5533 = vmul.f32 %v5517, 0.25
      %v5534 = vmul.f32 %v5518, 0.25
      %v5535 = vmul.f32 %v5519, 0.25
      %v5536 = vmul.f32 %v5520, 0.25
      %v5537 = vsel %vm5521, %v5513, %v5529
      %v5538 = vsel %vm5522, %v5514, %v5530
      %v5539 = vsel %vm5523, %v5515, %v5531
      %v5540 = vsel %vm5524, %v5516, %v5532
      %v5541 = vsel %vm5525, %v5517, %v5533
      %v5542 = vsel %vm5526, %v5518, %v5534
      %v5543 = vsel %vm5527, %v5519, %v5535
      %v5544 = vsel %vm5528, %v5520, %v5536
      %v5545 = vpack.c.bf16 %v5538, %v5537
      %v5546 = vpack.c.bf16 %v5540, %v5539
      %v5547 = vpack.c.bf16 %v5542, %v5541
      %v5548 = vpack.c.bf16 %v5544, %v5543
      %v5549 = vld [vmem:[%s3] sm:$0x3]
      %vm5550 = vcmask 23552
      %v5552 = vsel %vm5550, %v5545, 0
      %v5555 = vsel %vm5550, %v5546, 0
      %v5558 = vsel %vm5550, %v5547, 0
      %v5561 = vsel %vm5550, %v5548, 0
      %vm5563 = vcmask 1040384
      %vm5564 = vcmask 1041408
      %v5565 = vsel %vm5563, 4294967295, 65535
      %v5566 = vsel %vm5564, %v5565, 0
      %v5568 = vand.u32 %v5549, %v5566
      %5570 = vmatprep.subr.bf16.mxu0 0
      %5571 = vmatpush1.bf16.msra.mxu0 0
      %5572 = vmatprep.subr.bf16.mxu0 0
      %5573 = vmatpush1.bf16.msra.mxu0 0
      %5574 = vmatprep.subr.bf16.mxu0 0
      %5575 = vmatpush1.bf16.msra.mxu0 0
      %5576 = vmatprep.subr.bf16.mxu0 0
      %5577 = vmatpush1.bf16.msra.mxu0 0
      %5578 = vmatprep.subr.bf16.mxu0 0
      %5579 = vmatpush1.bf16.msra.mxu0 0
      %5580 = vmatprep.subr.bf16.mxu0 0
      %5581 = vmatpush1.bf16.msra.mxu0 0
      %5582 = vmatprep.subr.bf16.mxu0 0
      %5583 = vmatpush1.bf16.msra.mxu0 0
      %5584 = vmatprep.subr.bf16.mxu0 0
      %5585 = vmatpush1.bf16.msra.mxu0 %v5568
      %5586 = vmatprep.subr.bf16.mxu0 0
      %5587 = vmatpush2.bf16.msra.mxu0 0
      %5588 = vmatprep.subr.bf16.mxu0 0
      %5589 = vmatpush2.bf16.msra.mxu0 0
      %5590 = vmatprep.subr.bf16.mxu0 0
      %5591 = vmatpush2.bf16.msra.mxu0 0
      %5592 = vmatprep.subr.bf16.mxu0 0
      %5593 = vmatpush2.bf16.msra.mxu0 0
      %5594 = vmatprep.subr.bf16.mxu0 0
      %5595 = vmatpush2.bf16.msra.mxu0 0
      %5596 = vmatprep.subr.bf16.mxu0 0
      %5597 = vmatpush2.bf16.msra.mxu0 0
      %5598 = vmatprep.subr.bf16.mxu0 0
      %5599 = vmatpush2.bf16.msra.mxu0 0
      %5600 = vmatprep.subr.bf16.mxu0 0
      %5601 = vmatpush2.bf16.msra.mxu0 0
      %5602 = vmatprep.mubr.bf16.mxu0 0
      %5603 = vmatmul.mubr.bf16.gmra.mxu0 %v5552
      %v5604 = vpop.f32.mrf.mxu0
      %v5605 = vadd.f32 0.0, %v5604
      %v5606 = vpop.f32.mrf.mxu0
      %v5607 = vpop.f32.mrf.mxu0
      %v5608 = vadd.f32 0.0, %v5607
      %v5609 = vpop.f32.mrf.mxu0
      %5610 = vmatprep.mubr.bf16.mxu0 0
      %5611 = vmatmul.mubr.bf16.gmra.mxu0 %v5555
      %v5612 = vpop.f32.mrf.mxu0
      %v5613 = vadd.f32 0.0, %v5612
      %v5614 = vpop.f32.mrf.mxu0
      %v5615 = vpop.f32.mrf.mxu0
      %v5616 = vadd.f32 0.0, %v5615
      %v5617 = vpop.f32.mrf.mxu0
      %5618 = vmatprep.mubr.bf16.mxu0 0
      %5619 = vmatmul.mubr.bf16.gmra.mxu0 %v5558
      %v5620 = vpop.f32.mrf.mxu0
      %v5621 = vadd.f32 0.0, %v5620
      %v5622 = vpop.f32.mrf.mxu0
      %v5623 = vpop.f32.mrf.mxu0
      %v5624 = vadd.f32 0.0, %v5623
      %v5625 = vpop.f32.mrf.mxu0
      %5626 = vmatprep.mubr.bf16.mxu0 0
      %5627 = vmatmul.mubr.bf16.gmra.mxu0 %v5561
      %v5628 = vpop.f32.mrf.mxu0
      %v5629 = vadd.f32 0.0, %v5628
      %v5630 = vpop.f32.mrf.mxu0
      %v5631 = vpop.f32.mrf.mxu0
      %v5632 = vadd.f32 0.0, %v5631
      %v5633 = vpop.f32.mrf.mxu0
      %5634 = vdwg.mxu0
      %v5635 = vpack.c.bf16 %v5608, %v5605
      %v5636 = vpack.c.bf16 %v5616, %v5613
      %v5637 = vpack.c.bf16 %v5624, %v5621
      %v5638 = vpack.c.bf16 %v5632, %v5629
      %v5643 = vunpack.c.l.b16 %v5635
      %v5644 = vunpack.c.h.b16 %v5635
      %v5645 = vunpack.c.l.b16 %v5636
      %v5646 = vunpack.c.h.b16 %v5636
      %v5647 = vunpack.c.l.b16 %v5637
      %v5648 = vunpack.c.h.b16 %v5637
      %v5649 = vunpack.c.l.b16 %v5638
      %v5650 = vunpack.c.h.b16 %v5638
      %v5651 = vpack.c.b16 %v5643, %v5643
      %v5652 = vpack.c.b16 %v5644, %v5644
      %v5653 = vpack.c.b16 %v5645, %v5645
      %v5654 = vpack.c.b16 %v5646, %v5646
      %v5655 = vpack.c.b16 %v5647, %v5647
      %v5656 = vpack.c.b16 %v5648, %v5648
      %v5657 = vpack.c.b16 %v5649, %v5649
      %v5658 = vpack.c.b16 %v5650, %v5650
      %vm5667 = vcmask 93184
      %5668 = vst.msk [vmem:[%s197] sm:$0xf] %vm5667, %v5651
      %5669 = vst.msk [vmem:[%s197 + $0x4] sm:$0xf] %vm5667, %v5652
      %5670 = vst.msk [vmem:[%s197 + $0x8] sm:$0xf] %vm5667, %v5653
      %5671 = vst.msk [vmem:[%s197 + $0xc] sm:$0xf] %vm5667, %v5654
      %5672 = vst.msk [vmem:[%s197 + $0x10] sm:$0xf] %vm5667, %v5655
      %5673 = vst.msk [vmem:[%s197 + $0x14] sm:$0xf] %vm5667, %v5656
      %5674 = vst.msk [vmem:[%s197 + $0x18] sm:$0xf] %vm5667, %v5657
      %5675 = vst.msk [vmem:[%s197 + $0x1c] sm:$0xf] %vm5667, %v5658
      %s5676 = smul.u32 8, %s15
      %p5677 = scmp.lt.s32.totalorder %s5676, 15
      %s5678 = scalar_select %p5677, %s5676, 15
      %s5679 = smul.addr %s5678, 4
      %s5680 = scalar_lea.vmem %s4, %s5679
      // Predicated region
      $region37: #{tpu_custom_call.1} parent=35 // pred_check
        %p5681 = pneg %p122
      $region38: #{tpu_custom_call.1} parent=35 // pred_check_branch
        %5683 = sbr.rel (%p5681) target = $region40
      $region39: #{tpu_custom_call.1} parent=35 // pred_region
        %s5684 = smul.u32 8, %s15
      $region40: #{tpu_custom_call.1} parent=35 // pred_fallthru
        _
    $region36: #{tpu_custom_call.1} parent=5 // pred_fallthru
      _
    %p5685 = scmp.le.s32.totalorder 2, %s10
    // Predicated region
    $region41: #{tpu_custom_call.1} parent=5 // pred_check
      %p5686 = pneg %p5685
    $region42: #{tpu_custom_call.1} parent=5 // pred_check_branch
      %5688 = sbr.rel (%p5686) target = $region44
    $region43: #{tpu_custom_call.1} parent=5 // pred_region
      %s5689 = ssub.s32 %s10, 2
      // Predicated region
      $region45: #{tpu_custom_call.1} parent=43 // pred_check
        %p5690 = pneg %p128
      $region46: #{tpu_custom_call.1} parent=43 // pred_check_branch
        %5692 = sbr.rel (%p5690) target = $region48
      $region47: #{tpu_custom_call.1} parent=43 // pred_region
        %s5693 = smul.u32 8, %s16
        %p5694 = scmp.lt.s32.totalorder %s5693, 15
        %s5695 = scalar_select %p5694, %s5693, 15
        %s5696 = smul.addr %s5695, 4
        %s5697 = scalar_lea.vmem %s4, %s5696
      $region48: #{tpu_custom_call.1} parent=43 // pred_fallthru
        _
    $region44: #{tpu_custom_call.1} parent=5 // pred_fallthru
      _
  $region6: #{tpu_custom_call.1} parent=0 // loop_footer
    %s14 = sadd.s32 1, %s10
  $region7: #{tpu_custom_call.1} parent=0 // loop_footer_branch
    %9 = sbr.rel target = $region3
  $region8: #{tpu_custom_call.1} parent=0 // loop_exit
    _

</llo_original>
